<compile_context>
chip_gen: v5e
topology: v5e:2x2
jax: 0.10.0
libtpu: 0.0.40
codegen_flags: <defaults>
</compile_context>

<pallas_src>
import functools

import numpy as np
import jax
import jax.numpy as jnp
from jax import lax
from jax.experimental import pallas as pl
from jax.experimental.pallas import tpu as pltpu

HEAD_SIZE = 64
_WKV_CHUNK = 128                      # timesteps per WKV chunk
_ROW_TILE = 256                       # row tile for projections / MLP / ddlerp
_ROW_TILE_NORM = 512                  # row tile for (memory-bound) norm kernels
_MLP_HIDDEN_TILE = 1024               # hidden-dim tile for the MLP accumulator
_VMEM_LIMIT_BYTES = 32 * 1024 * 1024  # leaves headroom on v7x (64 MiB physical)
_MM_DTYPE = jnp.bfloat16              # MXU operand dtype (f32 accumulation)


def _round_up(x, m):
    return ((x + m - 1) // m) * m


# ----------------------------------------------------------------------------
# Pallas kernels
# ----------------------------------------------------------------------------
def _mm_kernel(x_ref, wt_ref, o_ref):
    o_ref[...] = jnp.dot(x_ref[...].astype(wt_ref.dtype), wt_ref[...],
                         preferred_element_type=jnp.float32
                         ).astype(o_ref.dtype)


def _mul_mm_kernel(x_ref, g_ref, wt_ref, o_ref):
    # (y * g) @ W_o  -- output projection fused with the gate multiply
    o_ref[...] = jnp.dot((x_ref[...] * g_ref[...]).astype(wt_ref.dtype),
                         wt_ref[...], preferred_element_type=jnp.float32
                         ).astype(o_ref.dtype)


def _lora_kernel(x_ref, a_ref, b_ref, o_ref):
    h = jnp.tanh(jnp.dot(x_ref[...].astype(a_ref.dtype), a_ref[...],
                         preferred_element_type=jnp.float32))
    o_ref[...] = jnp.dot(h.astype(b_ref.dtype), b_ref[...],
                         preferred_element_type=jnp.float32).astype(o_ref.dtype)


def _lora_bias_kernel(x_ref, a_ref, b_ref, bias_ref, o_ref):
    h = jnp.tanh(jnp.dot(x_ref[...].astype(a_ref.dtype), a_ref[...],
                         preferred_element_type=jnp.float32))
    o_ref[...] = (jnp.dot(h.astype(b_ref.dtype), b_ref[...],
                          preferred_element_type=jnp.float32)
                  + bias_ref[...]).astype(o_ref.dtype)


def _lerp_tanh_mm_kernel(x_ref, ba_ref, miu_ref, a_ref, o_ref):
    # tanh((x + b_a * miu_x) @ A)  -- first half of batch_lora, lerp fused in
    x1 = x_ref[...] + ba_ref[...] * miu_ref[...]
    o_ref[...] = jnp.tanh(jnp.dot(x1.astype(a_ref.dtype), a_ref[...],
                                  preferred_element_type=jnp.float32)
                          ).astype(o_ref.dtype)


def _ddlerp_branch_kernel(th_ref, x_ref, ba_ref, bw_ref, lam_ref, o_ref):
    # x + b_a * (lambda_i + th_i @ B_i)  -- all five branches in one launch so
    # the x / ba tiles stay resident in VMEM and only one grid pass is needed.
    x = x_ref[...]
    ba = ba_ref[...]
    for j in range(5):
        mm = jnp.dot(th_ref[j], bw_ref[j], preferred_element_type=jnp.float32)
        o_ref[j] = (x + ba * (lam_ref[j] + mm)).astype(o_ref.dtype)


def _mlp_kernel(x_ref, w1_ref, w2_ref, o_ref, acc_ref):
    # relu(x @ W1)^2 @ W2, tiled over the 4C hidden dim with a VMEM accumulator
    @pl.when(pl.program_id(1) == 0)
    def _init():
        acc_ref[...] = jnp.zeros_like(acc_ref)

    h = jnp.dot(x_ref[...].astype(w1_ref.dtype), w1_ref[...],
                preferred_element_type=jnp.float32)
    h = jnp.square(jnp.maximum(h, 0.0))
    acc_ref[...] += jnp.dot(h.astype(w2_ref.dtype), w2_ref[...],
                            preferred_element_type=jnp.float32)

    @pl.when(pl.program_id(1) == pl.num_programs(1) - 1)
    def _store():
        o_ref[...] = acc_ref[...].astype(o_ref.dtype)


def _layernorm_kernel(x_ref, g_ref, b_ref, o_ref, *, eps):
    x = x_ref[...]
    mean = jnp.mean(x, axis=-1, keepdims=True)
    var = jnp.mean(jnp.square(x - mean), axis=-1, keepdims=True)
    o_ref[...] = ((x - mean) * lax.rsqrt(var + eps) * g_ref[...]
                  + b_ref[...]).astype(o_ref.dtype)


def _groupnorm_kernel(x_ref, gsel_ref, g_ref, b_ref, o_ref, *, eps, inv_n):
    # Per-(row, group) stats via two (rows,C)@(C,H) matmuls, broadcast back
    # with A@B^T dot_generals -- no reshapes / transposes, lane-dense output.
    x = x_ref[...]
    gsel = gsel_ref[...]                                       # (C, H) one-hot
    mean_g = jnp.dot(x, gsel, preferred_element_type=jnp.float32) * inv_n
    msq_g = jnp.dot(x * x, gsel, preferred_element_type=jnp.float32) * inv_n
    mean = lax.dot_general(mean_g, gsel, (((1,), (1,)), ((), ())),
                           preferred_element_type=jnp.float32)
    msq = lax.dot_general(msq_g, gsel, (((1,), (1,)), ((), ())),
                          preferred_element_type=jnp.float32)
    var = jnp.maximum(msq - mean * mean, 0.0)
    o_ref[...] = ((x - mean) * lax.rsqrt(var + eps) * g_ref[...]
                  + b_ref[...]).astype(o_ref.dtype)


def _wkv6_chunk_kernel(r_ref, v_ref, w_ref, u_ref, y_ref, state_ref):
    """Chunk-parallel RWKV6 recurrence for one (batch, head-group, chunk) step.

    r/v/w blocks: (1, Tc, Cg) f32 where Cg = HG*HEAD_SIZE (HG heads per group,
    128 lanes when HG=2); u: (1, Cg); y: (1, Tc, Cg); state scratch
    (HG, N, N) f32 carried across the (sequential) chunk axis.
    Per the reference WKV_6.forward, k is replaced by w, so the key stream
    below *is* the (pre -exp) decay tensor w -- no separate k input is DMA'd.
    All heavy matmuls use bf16 operands with f32 accumulation; the log-decay
    sums are re-centered at the chunk midpoint so exp pre-factors stay finite.
    """
    Tc, Cg = r_ref.shape[1], r_ref.shape[2]
    N = HEAD_SIZE
    HG = Cg // N

    @pl.when(pl.program_id(2) == 0)
    def _init():
        state_ref[...] = jnp.zeros_like(state_ref)

    r = r_ref[0]
    v = v_ref[0]
    wlog = w_ref[0]                      # decay logits
    k = wlog                             # faithful to reference: k <- w
    u = u_ref[...]                       # (1, Cg)

    # Per-step log decay and its exclusive / inclusive running sums, computed
    # once per chunk via a triangular-ones matmul (f32 for accuracy: its cost
    # is small next to the bf16 per-head matmuls below).
    lw = -jnp.exp(wlog)                                         # (Tc, Cg), <= 0
    row = lax.broadcasted_iota(jnp.int32, (Tc, Tc), 0)
    col = lax.broadcasted_iota(jnp.int32, (Tc, Tc), 1)
    strict_lower = row > col
    diag = row == col
    tri = strict_lower.astype(jnp.float32)
    la_excl = jnp.dot(tri, lw, preferred_element_type=jnp.float32)  # sum_{s<t}
    la_incl = la_excl + lw                                          # sum_{s<=t}
    la_end = la_incl[Tc - 1:Tc, :]                                  # (1, Cg)
    # Midpoint re-centering: the la_mid factor cancels exactly between rd and
    # kd, it only halves the worst-case exponent so Tc=128 stays f32/bf16-safe.
    la_mid = la_excl[Tc // 2:Tc // 2 + 1, :]                        # (1, Cg)

    rd0 = r * jnp.exp(la_excl)                     # decayed receptance (f32)
    rd = (rd0 * jnp.exp(-la_mid)).astype(_MM_DTYPE)
    kd = (k * jnp.exp(la_mid - la_incl)).astype(_MM_DTYPE)
    k2 = (k * jnp.exp(la_end - la_incl)).astype(_MM_DTYPE)  # keys to chunk end
    vb = v.astype(_MM_DTYPE)
    rd0b = rd0.astype(_MM_DTYPE)
    du = r * u * k                                 # diagonal (u bonus) terms

    for h in range(HG):
        sl = slice(h * N, (h + 1) * N)
        d_h = jnp.sum(du[:, sl], axis=1, keepdims=True)          # (Tc, 1)

        # strictly-causal intra-chunk attention + u bonus on the diagonal
        attn = lax.dot_general(rd[:, sl], kd[:, sl], (((1,), (1,)), ((), ())),
                               preferred_element_type=jnp.float32)  # (Tc, Tc)
        attn = (jnp.where(strict_lower, attn, 0.0)
                + jnp.where(diag, d_h, 0.0)).astype(_MM_DTYPE)

        S = state_ref[h]                                         # (N, N) S[j,i]
        y_h = (jnp.dot(attn, vb[:, sl], preferred_element_type=jnp.float32)
               + jnp.dot(rd0b[:, sl], S.astype(_MM_DTYPE),
                         preferred_element_type=jnp.float32))
        y_ref[0, :, sl] = y_h                                    # per-head store

        decay_col = jnp.transpose(jnp.exp(la_end[:, sl]))        # (N, 1)
        state_ref[h] = decay_col * S + lax.dot_general(
            k2[:, sl], vb[:, sl], (((0,), (0,)), ((), ())),
            preferred_element_type=jnp.float32)


# ----------------------------------------------------------------------------
# Pallas wrappers
# ----------------------------------------------------------------------------
def _cparams(semantics):
    return pltpu.CompilerParams(dimension_semantics=semantics,
                                vmem_limit_bytes=_VMEM_LIMIT_BYTES)


def _row_tiled(kernel, row_inputs, const_inputs, out_cols, *,
               out_dtype=jnp.float32, tile=_ROW_TILE):
    """Row-tiled pallas_call: row_inputs are (M, K_i) arrays tiled over rows,
    const_inputs (weights / per-channel params) are kept whole in VMEM.
    No explicit padding -- pl.cdiv grid, edge blocks are masked by Pallas."""
    M = row_inputs[0].shape[0]
    tm = min(tile, _round_up(M, 16))
    in_specs = [pl.BlockSpec((tm, a.shape[1]), lambda i: (i, 0))
                for a in row_inputs]
    in_specs += [pl.BlockSpec(c.shape, lambda i, _n=c.ndim: (0,) * _n)
                 for c in const_inputs]
    return pl.pallas_call(
        kernel,
        out_shape=jax.ShapeDtypeStruct((M, out_cols), out_dtype),
        grid=(pl.cdiv(M, tm),),
        in_specs=in_specs,
        out_specs=pl.BlockSpec((tm, out_cols), lambda i: (i, 0)),
        compiler_params=_cparams(("parallel",)),
    )(*row_inputs, *const_inputs)


def layernorm_pallas(x2d, gamma, beta, eps=1e-5):
    return _row_tiled(
        functools.partial(_layernorm_kernel, eps=eps),
        [x2d.astype(jnp.float32)],
        [gamma.reshape(1, -1).astype(jnp.float32),
         beta.reshape(1, -1).astype(jnp.float32)],
        x2d.shape[1], tile=_ROW_TILE_NORM)


def groupnorm_pallas(x2d, gamma, beta, n_groups, eps, out_dtype=jnp.float32):
    C = x2d.shape[1]
    Nn = C // n_groups
    gsel = (jnp.arange(C)[:, None] // Nn ==
            jnp.arange(n_groups)[None, :]).astype(jnp.float32)      # (C, H)
    return _row_tiled(
        functools.partial(_groupnorm_kernel, eps=eps, inv_n=1.0 / Nn),
        [x2d.astype(jnp.float32)],
        [gsel, gamma.reshape(1, -1).astype(jnp.float32),
         beta.reshape(1, -1).astype(jnp.float32)],
        C, out_dtype=out_dtype, tile=_ROW_TILE_NORM)


def ddlerp_pallas(xn2, ba2, miu_x, A, Bw, lam):
    """TimeMix.ddlerp -> stacked (5, BT, C) branch inputs (bf16):
    x + b_a * (lambda_i + tanh((x + b_a*miu_x) @ A)_i @ B_i)."""
    BT, C = xn2.shape
    r32 = A.shape[1] // 5

    # Stage 1: th = tanh((x + ba*miu_x) @ A), emitted as bf16 to halve the
    # HBM round trip of the intermediate.
    th = _row_tiled(_lerp_tanh_mm_kernel, [xn2, ba2], [miu_x, A],
                    A.shape[1], out_dtype=_MM_DTYPE)
    # Same flat reinterpretation as the reference's torch .view(5, b*t, 32)
    # (row-major, so this is a free bitcast reshape under jit).
    th5 = th.reshape(5, BT, r32)

    tm = min(_ROW_TILE, _round_up(BT, 16))
    out = pl.pallas_call(
        _ddlerp_branch_kernel,
        out_shape=jax.ShapeDtypeStruct((5, BT, C), _MM_DTYPE),
        grid=(pl.cdiv(BT, tm),),
        in_specs=[
            pl.BlockSpec((5, tm, r32), lambda i: (0, i, 0)),
            pl.BlockSpec((tm, C), lambda i: (i, 0)),
            pl.BlockSpec((tm, C), lambda i: (i, 0)),
            pl.BlockSpec(Bw.shape, lambda i: (0, 0, 0)),
            pl.BlockSpec(lam.shape, lambda i: (0, 0, 0)),
        ],
        out_specs=pl.BlockSpec((5, tm, C), lambda i: (0, i, 0)),
        compiler_params=_cparams(("parallel",)),
    )(th5, xn2, ba2, Bw, lam)
    return out


def mlp_pallas(x2d, w1, w2):
    M, C = x2d.shape
    Ch = w1.shape[1]
    tm = min(_ROW_TILE, _round_up(M, 16))
    tk = min(_MLP_HIDDEN_TILE, Ch)
    return pl.pallas_call(
        _mlp_kernel,
        out_shape=jax.ShapeDtypeStruct((M, C), jnp.float32),
        grid=(pl.cdiv(M, tm), pl.cdiv(Ch, tk)),
        in_specs=[
            pl.BlockSpec((tm, C), lambda i, kk: (i, 0)),
            pl.BlockSpec((C, tk), lambda i, kk: (0, kk)),
            pl.BlockSpec((tk, C), lambda i, kk: (kk, 0)),
        ],
        out_specs=pl.BlockSpec((tm, C), lambda i, kk: (i, 0)),
        scratch_shapes=[pltpu.VMEM((tm, C), jnp.float32)],
        compiler_params=_cparams(("parallel", "arbitrary")),
    )(x2d, w1, w2)


def wkv6_pallas(r, v, w, u):
    """RWKV6 WKV recurrence, chunk-parallel with head-pair grid parallelism.
    Faithful to the reference WKV_6.forward which feeds the op [r, w, v, w, u]:
    the projected k is discarded and replaced by w, so only r/v/w are DMA'd."""
    B, T, C = r.shape
    N = HEAD_SIZE
    H = C // N
    HG = 2 if H % 2 == 0 else H          # 2 heads / group -> 128-lane blocks
    G = H // HG
    Cg = HG * N
    Tc = min(_WKV_CHUNK, _round_up(T, 8))
    T_pad = _round_up(T, Tc)

    def prep(x):
        x = x.astype(jnp.float32)
        if T_pad != T:
            # zero-pad the ragged time tail only (state is carried across the
            # sequential chunk axis, so the tail chunk must hold sane values)
            x = jnp.pad(x, ((0, 0), (0, T_pad - T), (0, 0)))
        return x

    r_p, v_p, w_p = prep(r), prep(v), prep(w)
    u_g = u.reshape(G, Cg).astype(jnp.float32)

    y = pl.pallas_call(
        _wkv6_chunk_kernel,
        out_shape=jax.ShapeDtypeStruct((B, T_pad, C), jnp.float32),
        grid=(B, G, T_pad // Tc),
        in_specs=[
            pl.BlockSpec((1, Tc, Cg), lambda b, g, c: (b, c, g)),   # r
            pl.BlockSpec((1, Tc, Cg), lambda b, g, c: (b, c, g)),   # v
            pl.BlockSpec((1, Tc, Cg), lambda b, g, c: (b, c, g)),   # w (== k)
            pl.BlockSpec((1, Cg), lambda b, g, c: (g, 0)),          # u
        ],
        out_specs=pl.BlockSpec((1, Tc, Cg), lambda b, g, c: (b, c, g)),
        scratch_shapes=[pltpu.VMEM((HG, N, N), jnp.float32)],
        compiler_params=_cparams(("parallel", "parallel", "arbitrary")),
    )(r_p, v_p, w_p, u_g)
    return y[:, :T, :] if T_pad != T else y


# ----------------------------------------------------------------------------
# Model forward
# ----------------------------------------------------------------------------
def timemix_forward(p, xn):
    B, T, C = xn.shape
    BT = B * T
    H = C // HEAD_SIZE

    # time_shift == ZeroPad2d((0, 0, 1, -1)) on (B, T, C)
    x_last = jnp.concatenate([jnp.zeros((B, 1, C), xn.dtype), xn[:, :-1, :]],
                             axis=1)
    xn2 = xn.reshape(BT, C)
    ba2 = (x_last - xn).reshape(BT, C)

    xd = ddlerp_pallas(xn2, ba2, p["miu_x"], p["A"], p["B"], p["lambda_"])
    w_in, _k_in, v_in, r_in, g_in = (xd[i] for i in range(5))

    w = _row_tiled(_lora_bias_kernel, [w_in],
                   [p["td_A"], p["td_B"], p["time_decay_miu"]], C)
    # NOTE: the reference WKV_6.forward replaces k by w, so the W_k projection
    # and its exp(min(w,0)) gate never reach the recurrence; they are dead
    # compute in the reference and intentionally skipped here.
    v = _row_tiled(_mm_kernel, [v_in], [p["W_v"]], C)
    r = _row_tiled(_mm_kernel, [r_in], [p["W_r"]], C)
    g = _row_tiled(_lora_kernel, [g_in], [p["W_g1"], p["W_g2"]], C,
                   out_dtype=_MM_DTYPE)

    y = wkv6_pallas(r.reshape(B, T, C), v.reshape(B, T, C),
                    w.reshape(B, T, C), p["u"])
    y = groupnorm_pallas(y.reshape(BT, C), p["gn_g"], p["gn_b"], H,
                         1e-5 * H, out_dtype=_MM_DTYPE)
    out = _row_tiled(_mul_mm_kernel, [y, g], [p["W_o"]], C)
    return out.reshape(B, T, C)


def block_forward(p, x):
    B, T, C = x.shape
    h = layernorm_pallas(x.reshape(B * T, C), p["ln1_g"], p["ln1_b"])
    x = x + timemix_forward(p["tm"], h.reshape(B, T, C))
    h = layernorm_pallas(x.reshape(B * T, C), p["ln2_g"], p["ln2_b"])
    x = x + mlp_pallas(h, p["fc1"], p["fc2"]).reshape(B, T, C)
    return x


def path_rwkv_forward(params, x, coords, ngrids):
    # TODO(synk): torch.utils.checkpoint is a training-time memory trick; the
    # forward math is identical, so blocks are applied directly here.
    B, T, C = x.shape
    pos = jnp.floor(coords / 256.0).astype(jnp.int32)
    pos_idx = pos[..., 0] * ngrids + pos[..., 1]                 # (B, T)
    x = x + params["pos_embed"][pos_idx]
    for blk in params["blocks"]:
        x = block_forward(blk, x)
    x = layernorm_pallas(x.reshape(B * T, C),
                         params["ln_out_g"], params["ln_out_b"])
    return x.reshape(B, T, C)


# ----------------------------------------------------------------------------
# Deterministic parameter initialization (shapes follow the PyTorch __init__)
# ----------------------------------------------------------------------------
def _get_1d_sincos(embed_dim, pos):
    omega = np.arange(embed_dim // 2, dtype=np.float64)
    omega /= embed_dim / 2.0
    omega = 1.0 / 10000 ** omega
    pos = pos.reshape(-1)
    out = np.einsum("m,d->md", pos, omega)
    return np.concatenate([np.sin(out), np.cos(out)], axis=1)


def get_2d_sincos_pos_embed(embed_dim, grid_size):
    grid_h = np.arange(grid_size, dtype=np.float32)
    grid_w = np.arange(grid_size, dtype=np.float32)
    grid = np.meshgrid(grid_w, grid_h)
    grid = np.stack(grid, axis=0).reshape([2, 1, grid_size, grid_size])
    emb_h = _get_1d_sincos(embed_dim // 2, grid[0])
    emb_w = _get_1d_sincos(embed_dim // 2, grid[1])
    return np.concatenate([emb_h, emb_w], axis=1)                # (gs*gs, D)


def init_params(key, depth, embed_dim, ngrids):
    C = embed_dim
    H = C // HEAD_SIZE
    keys = iter(jax.random.split(key, depth * 16 + 4))

    def unif(shape, a, dtype=jnp.float32):
        return jax.random.uniform(next(keys), shape, jnp.float32,
                                  -a, a).astype(dtype)

    bf16 = _MM_DTYPE
    blocks = []
    for layer_id in range(depth):
        ratio_0_to_1 = layer_id / (depth - 1) if depth > 1 else 0.0
        ratio_1_to_almost0 = 1.0 - layer_id / depth
        ddd = (jnp.arange(C, dtype=jnp.float32) / C).reshape(1, C)
        miu_x = 1.0 - jnp.power(ddd, 0.6 * ratio_1_to_almost0 ** 0.9)
        lambda_ = jnp.stack([
            1.0 - jnp.power(ddd, 0.9 * ratio_1_to_almost0),
            1.0 - jnp.power(ddd, 0.9 * ratio_1_to_almost0) - 0.4 * ratio_0_to_1,
            1.0 - jnp.power(ddd, 0.4 * ratio_1_to_almost0) - 0.6 * ratio_0_to_1,
            1.0 - jnp.power(ddd, 0.2 * ratio_1_to_almost0),
            1.0 - jnp.power(ddd, 0.2 * ratio_1_to_almost0),
        ])                                                       # (5, 1, C)
        n = jnp.arange(C, dtype=jnp.float32)
        decay_speed = -6.0 + 5.5 * (n / (C - 1)) ** (0.85 + 1.0 * ratio_0_to_1 ** 0.5)
        zigzag = ((jnp.arange(C) + 1) % 3 - 1).astype(jnp.float32) * 0.1
        u = (ratio_0_to_1 * (2.5 - n / (C - 1)) + zigzag).reshape(H, HEAD_SIZE)

        blocks.append({
            "tm": {
                "miu_x": miu_x,                                  # (1, C) f32
                "lambda_": lambda_,                              # (5, 1, C)
                # reference zero-inits A / time_decay_A / W_o / fc_2; small
                # uniforms here so every compute path is exercised.
                # W_k is omitted: the reference recurrence never consumes it.
                "A": unif((C, 32 * 5), 0.01, bf16),
                "B": unif((5, 32, C), 0.01, bf16),
                "time_decay_miu": decay_speed.reshape(1, C),
                "td_A": unif((C, 64), 0.01, bf16),
                "td_B": unif((64, C), 0.01, bf16),
                "u": u,                                          # (H, N) f32
                "W_v": unif((C, C), 0.5 / C ** 0.5, bf16),
                "W_r": unif((C, C), 0.5 / C ** 0.5, bf16),
                "W_o": unif((C, C), 0.5 / C ** 0.5, bf16),
                "W_g1": unif((C, 160), 0.01, bf16),
                "W_g2": unif((160, C), 0.01, bf16),
                "gn_g": jnp.ones((C,), jnp.float32),
                "gn_b": jnp.zeros((C,), jnp.float32),
            },
            "ln1_g": jnp.ones((C,), jnp.float32),
            "ln1_b": jnp.zeros((C,), jnp.float32),
            "ln2_g": jnp.ones((C,), jnp.float32),
            "ln2_b": jnp.zeros((C,), jnp.float32),
            "fc1": unif((C, 4 * C), 1.0 / C ** 0.5, bf16),
            "fc2": unif((4 * C, C), 1.0 / (4 * C) ** 0.5, bf16),
        })

    return {
        "blocks": blocks,
        "ln_out_g": jnp.ones((C,), jnp.float32),
        "ln_out_b": jnp.zeros((C,), jnp.float32),
        "pos_embed": jnp.asarray(get_2d_sincos_pos_embed(C, ngrids),
                                 jnp.float32),
    }


# ----------------------------------------------------------------------------
if __name__ == "__main__":
    B, T = 2, 8
    depth = 2
    embed_dim = 128          # n_head = 2, head_size = 64
    ngrids = 8               # small slide grid for the synthetic test

    key = jax.random.PRNGKey(0)
    kp, kx, kc = jax.random.split(key, 3)
    params = init_params(kp, depth, embed_dim, ngrids)

    x = jax.random.normal(kx, (B, T, embed_dim), jnp.float32) * 0.1
    coords = jax.random.uniform(kc, (B, T, 2), jnp.float32, 0.0, ngrids * 256.0)

    forward = jax.jit(path_rwkv_forward, static_argnums=3)
    out = forward(params, x, coords, ngrids)
    out = jax.block_until_ready(out)

    assert out.shape == (B, T, embed_dim)
    assert bool(jnp.all(jnp.isfinite(out)))
    print("KERNEL_OK")
</pallas_src>

<mosaic_0001>
module attributes {stable_mosaic.version = 11 : i64} {
  func.func @_lerp_tanh_mm_kernel(%arg0: i32, %arg1: memref<16x128xf32, #tpu.memory_space<vmem>>, %arg2: memref<16x128xf32, #tpu.memory_space<vmem>>, %arg3: memref<1x128xf32, #tpu.memory_space<vmem>>, %arg4: memref<128x160xbf16, #tpu.memory_space<vmem>>, %arg5: memref<16x160xbf16, #tpu.memory_space<vmem>>) attributes {dimension_semantics = [#tpu.dimension_semantics<parallel>], iteration_bounds = array<i64: 1>, scalar_prefetch = 0 : i64, scratch_operands = 0 : i64, tpu.core_type = #tpu.core_type<tc>, window_params = [{transform_indices = @transform_0, window_bounds = array<i64: 16, 128>}, {transform_indices = @transform_1, window_bounds = array<i64: 16, 128>}, {pipeline_mode = #tpu.pipeline_mode<synchronous>, transform_indices = @transform_2, window_bounds = array<i64: 1, 128>}, {pipeline_mode = #tpu.pipeline_mode<synchronous>, transform_indices = @transform_3, window_bounds = array<i64: 128, 160>}, {transform_indices = @transform_4, window_bounds = array<i64: 16, 160>}]} {
    %c0 = arith.constant 0 : index
    %c0_0 = arith.constant 0 : index
    %0 = vector.load %arg1[%c0, %c0_0] : memref<16x128xf32, #tpu.memory_space<vmem>>, vector<16x128xf32>
    %c0_1 = arith.constant 0 : index
    %c0_2 = arith.constant 0 : index
    %1 = vector.load %arg2[%c0_1, %c0_2] : memref<16x128xf32, #tpu.memory_space<vmem>>, vector<16x128xf32>
    %c0_3 = arith.constant 0 : index
    %c0_4 = arith.constant 0 : index
    %2 = vector.load %arg3[%c0_3, %c0_4] : memref<1x128xf32, #tpu.memory_space<vmem>>, vector<1x128xf32>
    %3 = vector.broadcast %2 : vector<1x128xf32> to vector<16x128xf32>
    %4 = arith.mulf %1, %3 : vector<16x128xf32>
    %5 = arith.addf %0, %4 : vector<16x128xf32>
    %6 = arith.truncf %5 : vector<16x128xf32> to vector<16x128xbf16>
    %c0_5 = arith.constant 0 : index
    %c0_6 = arith.constant 0 : index
    %7 = vector.load %arg4[%c0_5, %c0_6] : memref<128x160xbf16, #tpu.memory_space<vmem>>, vector<128x160xbf16>
    %cst = arith.constant dense<0.000000e+00> : vector<16x160xf32>
    %8 = tpu.matmul %6, %7, %cst {dimension_numbers = #tpu.dot_dimension_numbers<[1], [0], [0], [1], [0, 0, 1, 1], [], []>} : vector<16x128xbf16>, vector<128x160xbf16>, vector<16x160xf32> -> vector<16x160xf32>
    %9 = math.tanh %8 : vector<16x160xf32>
    %10 = arith.truncf %9 : vector<16x160xf32> to vector<16x160xbf16>
    %c0_7 = arith.constant 0 : index
    %c0_8 = arith.constant 0 : index
    %11 = vector.load %arg5[%c0_7, %c0_8] : memref<16x160xbf16, #tpu.memory_space<vmem>>, vector<16x160xbf16>
    tpu.vector_store %arg5[%c0_7, %c0_8], %10 {strides = array<i32>} : memref<16x160xbf16, #tpu.memory_space<vmem>>, vector<16x160xbf16>,
    return
  }
  func.func @transform_0(%arg0: i32) -> (i32, i32) {
    %c0_i32 = arith.constant 0 : i32
    %c0_i32_0 = arith.constant 0 : i32
    return %arg0, %c0_i32 : i32, i32
  }
  func.func @transform_1(%arg0: i32) -> (i32, i32) {
    %c0_i32 = arith.constant 0 : i32
    %c0_i32_0 = arith.constant 0 : i32
    return %arg0, %c0_i32 : i32, i32
  }
  func.func @transform_2(%arg0: i32) -> (i32, i32) {
    %c0_i32 = arith.constant 0 : i32
    %c0_i32_0 = arith.constant 0 : i32
    %c0_i32_1 = arith.constant 0 : i32
    return %c0_i32, %c0_i32_0 : i32, i32
  }
  func.func @transform_3(%arg0: i32) -> (i32, i32) {
    %c0_i32 = arith.constant 0 : i32
    %c0_i32_0 = arith.constant 0 : i32
    %c0_i32_1 = arith.constant 0 : i32
    return %c0_i32, %c0_i32_0 : i32, i32
  }
  func.func @transform_4(%arg0: i32) -> (i32, i32) {
    %c0_i32 = arith.constant 0 : i32
    %c0_i32_0 = arith.constant 0 : i32
    return %arg0, %c0_i32 : i32, i32
  }
}

module attributes {stable_mosaic.version = 11 : i64} {
  func.func @_layernorm_kernel(%arg0: i32, %arg1: memref<16x128xf32, #tpu.memory_space<vmem>>, %arg2: memref<1x128xf32, #tpu.memory_space<vmem>>, %arg3: memref<1x128xf32, #tpu.memory_space<vmem>>, %arg4: memref<16x128xf32, #tpu.memory_space<vmem>>) attributes {dimension_semantics = [#tpu.dimension_semantics<parallel>], iteration_bounds = array<i64: 1>, scalar_prefetch = 0 : i64, scratch_operands = 0 : i64, tpu.core_type = #tpu.core_type<tc>, window_params = [{transform_indices = @transform_0, window_bounds = array<i64: 16, 128>}, {pipeline_mode = #tpu.pipeline_mode<synchronous>, transform_indices = @transform_1, window_bounds = array<i64: 1, 128>}, {pipeline_mode = #tpu.pipeline_mode<synchronous>, transform_indices = @transform_2, window_bounds = array<i64: 1, 128>}, {transform_indices = @transform_3, window_bounds = array<i64: 16, 128>}]} {
    %c0 = arith.constant 0 : index
    %c0_0 = arith.constant 0 : index
    %0 = vector.load %arg1[%c0, %c0_0] : memref<16x128xf32, #tpu.memory_space<vmem>>, vector<16x128xf32>
    %cst = arith.constant dense<0.000000e+00> : vector<16xf32>
    %1 = vector.multi_reduction <add>, %0, %cst [1] : vector<16x128xf32> to vector<16xf32>
    %2 = vector.shape_cast %1 : vector<16xf32> to vector<16x1xf32>
    %cst_1 = arith.constant 1.280000e+02 : f32
    %3 = vector.broadcast %cst_1 : f32 to vector<16x1xf32>
    %4 = arith.divf %2, %3 : vector<16x1xf32>
    %5 = vector.broadcast %4 : vector<16x1xf32> to vector<16x128xf32>
    %6 = arith.subf %0, %5 : vector<16x128xf32>
    %7 = arith.mulf %6, %6 : vector<16x128xf32>
    %cst_2 = arith.constant dense<0.000000e+00> : vector<16xf32>
    %8 = vector.multi_reduction <add>, %7, %cst_2 [1] : vector<16x128xf32> to vector<16xf32>
    %9 = vector.shape_cast %8 : vector<16xf32> to vector<16x1xf32>
    %cst_3 = arith.constant 1.280000e+02 : f32
    %10 = vector.broadcast %cst_3 : f32 to vector<16x1xf32>
    %11 = arith.divf %9, %10 : vector<16x1xf32>
    %12 = vector.broadcast %4 : vector<16x1xf32> to vector<16x128xf32>
    %13 = arith.subf %0, %12 : vector<16x128xf32>
    %cst_4 = arith.constant 9.99999974E-6 : f32
    %14 = vector.broadcast %cst_4 : f32 to vector<16x1xf32>
    %15 = arith.addf %11, %14 : vector<16x1xf32>
    %16 = math.rsqrt %15 : vector<16x1xf32>
    %17 = vector.broadcast %16 : vector<16x1xf32> to vector<16x128xf32>
    %18 = arith.mulf %13, %17 : vector<16x128xf32>
    %c0_5 = arith.constant 0 : index
    %c0_6 = arith.constant 0 : index
    %19 = vector.load %arg2[%c0_5, %c0_6] : memref<1x128xf32, #tpu.memory_space<vmem>>, vector<1x128xf32>
    %20 = vector.broadcast %19 : vector<1x128xf32> to vector<16x128xf32>
    %21 = arith.mulf %18, %20 : vector<16x128xf32>
    %c0_7 = arith.constant 0 : index
    %c0_8 = arith.constant 0 : index
    %22 = vector.load %arg3[%c0_7, %c0_8] : memref<1x128xf32, #tpu.memory_space<vmem>>, vector<1x128xf32>
    %23 = vector.broadcast %22 : vector<1x128xf32> to vector<16x128xf32>
    %24 = arith.addf %21, %23 : vector<16x128xf32>
    %c0_9 = arith.constant 0 : index
    %c0_10 = arith.constant 0 : index
    %25 = vector.load %arg4[%c0_9, %c0_10] : memref<16x128xf32, #tpu.memory_space<vmem>>, vector<16x128xf32>
    tpu.vector_store %arg4[%c0_9, %c0_10], %24 {strides = array<i32>} : memref<16x128xf32, #tpu.memory_space<vmem>>, vector<16x128xf32>,
    return
  }
  func.func @transform_0(%arg0: i32) -> (i32, i32) {
    %c0_i32 = arith.constant 0 : i32
    %c0_i32_0 = arith.constant 0 : i32
    return %arg0, %c0_i32 : i32, i32
  }
  func.func @transform_1(%arg0: i32) -> (i32, i32) {
    %c0_i32 = arith.constant 0 : i32
    %c0_i32_0 = arith.constant 0 : i32
    %c0_i32_1 = arith.constant 0 : i32
    return %c0_i32, %c0_i32_0 : i32, i32
  }
  func.func @transform_2(%arg0: i32) -> (i32, i32) {
    %c0_i32 = arith.constant 0 : i32
    %c0_i32_0 = arith.constant 0 : i32
    %c0_i32_1 = arith.constant 0 : i32
    return %c0_i32, %c0_i32_0 : i32, i32
  }
  func.func @transform_3(%arg0: i32) -> (i32, i32) {
    %c0_i32 = arith.constant 0 : i32
    %c0_i32_0 = arith.constant 0 : i32
    return %arg0, %c0_i32 : i32, i32
  }
}

module attributes {stable_mosaic.version = 11 : i64} {
  func.func @_ddlerp_branch_kernel(%arg0: i32, %arg1: memref<5x16x32xbf16, #tpu.memory_space<vmem>>, %arg2: memref<16x128xf32, #tpu.memory_space<vmem>>, %arg3: memref<16x128xf32, #tpu.memory_space<vmem>>, %arg4: memref<5x32x128xbf16, #tpu.memory_space<vmem>>, %arg5: memref<5x1x128xf32, #tpu.memory_space<vmem>>, %arg6: memref<5x16x128xbf16, #tpu.memory_space<vmem>>) attributes {dimension_semantics = [#tpu.dimension_semantics<parallel>], iteration_bounds = array<i64: 1>, scalar_prefetch = 0 : i64, scratch_operands = 0 : i64, tpu.core_type = #tpu.core_type<tc>, window_params = [{transform_indices = @transform_0, window_bounds = array<i64: 5, 16, 32>}, {transform_indices = @transform_1, window_bounds = array<i64: 16, 128>}, {transform_indices = @transform_2, window_bounds = array<i64: 16, 128>}, {pipeline_mode = #tpu.pipeline_mode<synchronous>, transform_indices = @transform_3, window_bounds = array<i64: 5, 32, 128>}, {pipeline_mode = #tpu.pipeline_mode<synchronous>, transform_indices = @transform_4, window_bounds = array<i64: 5, 1, 128>}, {transform_indices = @transform_5, window_bounds = array<i64: 5, 16, 128>}]} {
    %c0 = arith.constant 0 : index
    %c0_0 = arith.constant 0 : index
    %0 = vector.load %arg2[%c0, %c0_0] : memref<16x128xf32, #tpu.memory_space<vmem>>, vector<16x128xf32>
    %c0_1 = arith.constant 0 : index
    %c0_2 = arith.constant 0 : index
    %1 = vector.load %arg3[%c0_1, %c0_2] : memref<16x128xf32, #tpu.memory_space<vmem>>, vector<16x128xf32>
    %c0_3 = arith.constant 0 : index
    %c0_4 = arith.constant 0 : index
    %c0_5 = arith.constant 0 : index
    %2 = vector.load %arg1[%c0_3, %c0_4, %c0_5] : memref<5x16x32xbf16, #tpu.memory_space<vmem>>, vector<1x16x32xbf16>
    %3 = vector.shape_cast %2 : vector<1x16x32xbf16> to vector<16x32xbf16>
    %c0_6 = arith.constant 0 : index
    %c0_7 = arith.constant 0 : index
    %c0_8 = arith.constant 0 : index
    %4 = vector.load %arg4[%c0_6, %c0_7, %c0_8] : memref<5x32x128xbf16, #tpu.memory_space<vmem>>, vector<1x32x128xbf16>
    %5 = vector.shape_cast %4 : vector<1x32x128xbf16> to vector<32x128xbf16>
    %cst = arith.constant dense<0.000000e+00> : vector<16x128xf32>
    %6 = tpu.matmul %3, %5, %cst {dimension_numbers = #tpu.dot_dimension_numbers<[1], [0], [0], [1], [0, 0, 1, 1], [], []>} : vector<16x32xbf16>, vector<32x128xbf16>, vector<16x128xf32> -> vector<16x128xf32>
    %c0_9 = arith.constant 0 : index
    %c0_10 = arith.constant 0 : index
    %c0_11 = arith.constant 0 : index
    %7 = vector.load %arg5[%c0_9, %c0_10, %c0_11] : memref<5x1x128xf32, #tpu.memory_space<vmem>>, vector<1x1x128xf32>
    %8 = vector.shape_cast %7 : vector<1x1x128xf32> to vector<1x128xf32>
    %9 = vector.broadcast %8 : vector<1x128xf32> to vector<16x128xf32>
    %10 = arith.addf %9, %6 : vector<16x128xf32>
    %11 = arith.mulf %1, %10 : vector<16x128xf32>
    %12 = arith.addf %0, %11 : vector<16x128xf32>
    %13 = arith.truncf %12 : vector<16x128xf32> to vector<16x128xbf16>
    %c0_12 = arith.constant 0 : index
    %c0_13 = arith.constant 0 : index
    %c0_14 = arith.constant 0 : index
    %14 = vector.load %arg6[%c0_12, %c0_13, %c0_14] : memref<5x16x128xbf16, #tpu.memory_space<vmem>>, vector<1x16x128xbf16>
    %15 = vector.shape_cast %14 : vector<1x16x128xbf16> to vector<16x128xbf16>
    %16 = vector.shape_cast %13 : vector<16x128xbf16> to vector<1x16x128xbf16>
    tpu.vector_store %arg6[%c0_12, %c0_13, %c0_14], %16 {strides = array<i32>} : memref<5x16x128xbf16, #tpu.memory_space<vmem>>, vector<1x16x128xbf16>,
    %c1 = arith.constant 1 : index
    %c0_15 = arith.constant 0 : index
    %c0_16 = arith.constant 0 : index
    %17 = vector.load %arg1[%c1, %c0_15, %c0_16] : memref<5x16x32xbf16, #tpu.memory_space<vmem>>, vector<1x16x32xbf16>
    %18 = vector.shape_cast %17 : vector<1x16x32xbf16> to vector<16x32xbf16>
    %c1_17 = arith.constant 1 : index
    %c0_18 = arith.constant 0 : index
    %c0_19 = arith.constant 0 : index
    %19 = vector.load %arg4[%c1_17, %c0_18, %c0_19] : memref<5x32x128xbf16, #tpu.memory_space<vmem>>, vector<1x32x128xbf16>
    %20 = vector.shape_cast %19 : vector<1x32x128xbf16> to vector<32x128xbf16>
    %cst_20 = arith.constant dense<0.000000e+00> : vector<16x128xf32>
    %21 = tpu.matmul %18, %20, %cst_20 {dimension_numbers = #tpu.dot_dimension_numbers<[1], [0], [0], [1], [0, 0, 1, 1], [], []>} : vector<16x32xbf16>, vector<32x128xbf16>, vector<16x128xf32> -> vector<16x128xf32>
    %c1_21 = arith.constant 1 : index
    %c0_22 = arith.constant 0 : index
    %c0_23 = arith.constant 0 : index
    %22 = vector.load %arg5[%c1_21, %c0_22, %c0_23] : memref<5x1x128xf32, #tpu.memory_space<vmem>>, vector<1x1x128xf32>
    %23 = vector.shape_cast %22 : vector<1x1x128xf32> to vector<1x128xf32>
    %24 = vector.broadcast %23 : vector<1x128xf32> to vector<16x128xf32>
    %25 = arith.addf %24, %21 : vector<16x128xf32>
    %26 = arith.mulf %1, %25 : vector<16x128xf32>
    %27 = arith.addf %0, %26 : vector<16x128xf32>
    %28 = arith.truncf %27 : vector<16x128xf32> to vector<16x128xbf16>
    %c1_24 = arith.constant 1 : index
    %c0_25 = arith.constant 0 : index
    %c0_26 = arith.constant 0 : index
    %29 = vector.load %arg6[%c1_24, %c0_25, %c0_26] : memref<5x16x128xbf16, #tpu.memory_space<vmem>>, vector<1x16x128xbf16>
    %30 = vector.shape_cast %29 : vector<1x16x128xbf16> to vector<16x128xbf16>
    %31 = vector.shape_cast %28 : vector<16x128xbf16> to vector<1x16x128xbf16>
    tpu.vector_store %arg6[%c1_24, %c0_25, %c0_26], %31 {strides = array<i32>} : memref<5x16x128xbf16, #tpu.memory_space<vmem>>, vector<1x16x128xbf16>,
    %c2 = arith.constant 2 : index
    %c0_27 = arith.constant 0 : index
    %c0_28 = arith.constant 0 : index
    %32 = vector.load %arg1[%c2, %c0_27, %c0_28] : memref<5x16x32xbf16, #tpu.memory_space<vmem>>, vector<1x16x32xbf16>
    %33 = vector.shape_cast %32 : vector<1x16x32xbf16> to vector<16x32xbf16>
    %c2_29 = arith.constant 2 : index
    %c0_30 = arith.constant 0 : index
    %c0_31 = arith.constant 0 : index
    %34 = vector.load %arg4[%c2_29, %c0_30, %c0_31] : memref<5x32x128xbf16, #tpu.memory_space<vmem>>, vector<1x32x128xbf16>
    %35 = vector.shape_cast %34 : vector<1x32x128xbf16> to vector<32x128xbf16>
    %cst_32 = arith.constant dense<0.000000e+00> : vector<16x128xf32>
    %36 = tpu.matmul %33, %35, %cst_32 {dimension_numbers = #tpu.dot_dimension_numbers<[1], [0], [0], [1], [0, 0, 1, 1], [], []>} : vector<16x32xbf16>, vector<32x128xbf16>, vector<16x128xf32> -> vector<16x128xf32>
    %c2_33 = arith.constant 2 : index
    %c0_34 = arith.constant 0 : index
    %c0_35 = arith.constant 0 : index
    %37 = vector.load %arg5[%c2_33, %c0_34, %c0_35] : memref<5x1x128xf32, #tpu.memory_space<vmem>>, vector<1x1x128xf32>
    %38 = vector.shape_cast %37 : vector<1x1x128xf32> to vector<1x128xf32>
    %39 = vector.broadcast %38 : vector<1x128xf32> to vector<16x128xf32>
    %40 = arith.addf %39, %36 : vector<16x128xf32>
    %41 = arith.mulf %1, %40 : vector<16x128xf32>
    %42 = arith.addf %0, %41 : vector<16x128xf32>
    %43 = arith.truncf %42 : vector<16x128xf32> to vector<16x128xbf16>
    %c2_36 = arith.constant 2 : index
    %c0_37 = arith.constant 0 : index
    %c0_38 = arith.constant 0 : index
    %44 = vector.load %arg6[%c2_36, %c0_37, %c0_38] : memref<5x16x128xbf16, #tpu.memory_space<vmem>>, vector<1x16x128xbf16>
    %45 = vector.shape_cast %44 : vector<1x16x128xbf16> to vector<16x128xbf16>
    %46 = vector.shape_cast %43 : vector<16x128xbf16> to vector<1x16x128xbf16>
    tpu.vector_store %arg6[%c2_36, %c0_37, %c0_38], %46 {strides = array<i32>} : memref<5x16x128xbf16, #tpu.memory_space<vmem>>, vector<1x16x128xbf16>,
    %c3 = arith.constant 3 : index
    %c0_39 = arith.constant 0 : index
    %c0_40 = arith.constant 0 : index
    %47 = vector.load %arg1[%c3, %c0_39, %c0_40] : memref<5x16x32xbf16, #tpu.memory_space<vmem>>, vector<1x16x32xbf16>
    %48 = vector.shape_cast %47 : vector<1x16x32xbf16> to vector<16x32xbf16>
    %c3_41 = arith.constant 3 : index
    %c0_42 = arith.constant 0 : index
    %c0_43 = arith.constant 0 : index
    %49 = vector.load %arg4[%c3_41, %c0_42, %c0_43] : memref<5x32x128xbf16, #tpu.memory_space<vmem>>, vector<1x32x128xbf16>
    %50 = vector.shape_cast %49 : vector<1x32x128xbf16> to vector<32x128xbf16>
    %cst_44 = arith.constant dense<0.000000e+00> : vector<16x128xf32>
    %51 = tpu.matmul %48, %50, %cst_44 {dimension_numbers = #tpu.dot_dimension_numbers<[1], [0], [0], [1], [0, 0, 1, 1], [], []>} : vector<16x32xbf16>, vector<32x128xbf16>, vector<16x128xf32> -> vector<16x128xf32>
    %c3_45 = arith.constant 3 : index
    %c0_46 = arith.constant 0 : index
    %c0_47 = arith.constant 0 : index
    %52 = vector.load %arg5[%c3_45, %c0_46, %c0_47] : memref<5x1x128xf32, #tpu.memory_space<vmem>>, vector<1x1x128xf32>
    %53 = vector.shape_cast %52 : vector<1x1x128xf32> to vector<1x128xf32>
    %54 = vector.broadcast %53 : vector<1x128xf32> to vector<16x128xf32>
    %55 = arith.addf %54, %51 : vector<16x128xf32>
    %56 = arith.mulf %1, %55 : vector<16x128xf32>
    %57 = arith.addf %0, %56 : vector<16x128xf32>
    %58 = arith.truncf %57 : vector<16x128xf32> to vector<16x128xbf16>
    %c3_48 = arith.constant 3 : index
    %c0_49 = arith.constant 0 : index
    %c0_50 = arith.constant 0 : index
    %59 = vector.load %arg6[%c3_48, %c0_49, %c0_50] : memref<5x16x128xbf16, #tpu.memory_space<vmem>>, vector<1x16x128xbf16>
    %60 = vector.shape_cast %59 : vector<1x16x128xbf16> to vector<16x128xbf16>
    %61 = vector.shape_cast %58 : vector<16x128xbf16> to vector<1x16x128xbf16>
    tpu.vector_store %arg6[%c3_48, %c0_49, %c0_50], %61 {strides = array<i32>} : memref<5x16x128xbf16, #tpu.memory_space<vmem>>, vector<1x16x128xbf16>,
    %c4 = arith.constant 4 : index
    %c0_51 = arith.constant 0 : index
    %c0_52 = arith.constant 0 : index
    %62 = vector.load %arg1[%c4, %c0_51, %c0_52] : memref<5x16x32xbf16, #tpu.memory_space<vmem>>, vector<1x16x32xbf16>
    %63 = vector.shape_cast %62 : vector<1x16x32xbf16> to vector<16x32xbf16>
    %c4_53 = arith.constant 4 : index
    %c0_54 = arith.constant 0 : index
    %c0_55 = arith.constant 0 : index
    %64 = vector.load %arg4[%c4_53, %c0_54, %c0_55] : memref<5x32x128xbf16, #tpu.memory_space<vmem>>, vector<1x32x128xbf16>
    %65 = vector.shape_cast %64 : vector<1x32x128xbf16> to vector<32x128xbf16>
    %cst_56 = arith.constant dense<0.000000e+00> : vector<16x128xf32>
    %66 = tpu.matmul %63, %65, %cst_56 {dimension_numbers = #tpu.dot_dimension_numbers<[1], [0], [0], [1], [0, 0, 1, 1], [], []>} : vector<16x32xbf16>, vector<32x128xbf16>, vector<16x128xf32> -> vector<16x128xf32>
    %c4_57 = arith.constant 4 : index
    %c0_58 = arith.constant 0 : index
    %c0_59 = arith.constant 0 : index
    %67 = vector.load %arg5[%c4_57, %c0_58, %c0_59] : memref<5x1x128xf32, #tpu.memory_space<vmem>>, vector<1x1x128xf32>
    %68 = vector.shape_cast %67 : vector<1x1x128xf32> to vector<1x128xf32>
    %69 = vector.broadcast %68 : vector<1x128xf32> to vector<16x128xf32>
    %70 = arith.addf %69, %66 : vector<16x128xf32>
    %71 = arith.mulf %1, %70 : vector<16x128xf32>
    %72 = arith.addf %0, %71 : vector<16x128xf32>
    %73 = arith.truncf %72 : vector<16x128xf32> to vector<16x128xbf16>
    %c4_60 = arith.constant 4 : index
    %c0_61 = arith.constant 0 : index
    %c0_62 = arith.constant 0 : index
    %74 = vector.load %arg6[%c4_60, %c0_61, %c0_62] : memref<5x16x128xbf16, #tpu.memory_space<vmem>>, vector<1x16x128xbf16>
    %75 = vector.shape_cast %74 : vector<1x16x128xbf16> to vector<16x128xbf16>
    %76 = vector.shape_cast %73 : vector<16x128xbf16> to vector<1x16x128xbf16>
    tpu.vector_store %arg6[%c4_60, %c0_61, %c0_62], %76 {strides = array<i32>} : memref<5x16x128xbf16, #tpu.memory_space<vmem>>, vector<1x16x128xbf16>,
    return
  }
  func.func @transform_0(%arg0: i32) -> (i32, i32, i32) {
    %c0_i32 = arith.constant 0 : i32
    %c0_i32_0 = arith.constant 0 : i32
    %c0_i32_1 = arith.constant 0 : i32
    return %c0_i32, %arg0, %c0_i32_0 : i32, i32, i32
  }
  func.func @transform_1(%arg0: i32) -> (i32, i32) {
    %c0_i32 = arith.constant 0 : i32
    %c0_i32_0 = arith.constant 0 : i32
    return %arg0, %c0_i32 : i32, i32
  }
  func.func @transform_2(%arg0: i32) -> (i32, i32) {
    %c0_i32 = arith.constant 0 : i32
    %c0_i32_0 = arith.constant 0 : i32
    return %arg0, %c0_i32 : i32, i32
  }
  func.func @transform_3(%arg0: i32) -> (i32, i32, i32) {
    %c0_i32 = arith.constant 0 : i32
    %c0_i32_0 = arith.constant 0 : i32
    %c0_i32_1 = arith.constant 0 : i32
    %c0_i32_2 = arith.constant 0 : i32
    return %c0_i32, %c0_i32_0, %c0_i32_1 : i32, i32, i32
  }
  func.func @transform_4(%arg0: i32) -> (i32, i32, i32) {
    %c0_i32 = arith.constant 0 : i32
    %c0_i32_0 = arith.constant 0 : i32
    %c0_i32_1 = arith.constant 0 : i32
    %c0_i32_2 = arith.constant 0 : i32
    return %c0_i32, %c0_i32_0, %c0_i32_1 : i32, i32, i32
  }
  func.func @transform_5(%arg0: i32) -> (i32, i32, i32) {
    %c0_i32 = arith.constant 0 : i32
    %c0_i32_0 = arith.constant 0 : i32
    %c0_i32_1 = arith.constant 0 : i32
    return %c0_i32, %arg0, %c0_i32_0 : i32, i32, i32
  }
}

module attributes {stable_mosaic.version = 11 : i64} {
  func.func @_lora_bias_kernel(%arg0: i32, %arg1: memref<16x128xbf16, #tpu.memory_space<vmem>>, %arg2: memref<128x64xbf16, #tpu.memory_space<vmem>>, %arg3: memref<64x128xbf16, #tpu.memory_space<vmem>>, %arg4: memref<1x128xf32, #tpu.memory_space<vmem>>, %arg5: memref<16x128xf32, #tpu.memory_space<vmem>>) attributes {dimension_semantics = [#tpu.dimension_semantics<parallel>], iteration_bounds = array<i64: 1>, scalar_prefetch = 0 : i64, scratch_operands = 0 : i64, tpu.core_type = #tpu.core_type<tc>, window_params = [{transform_indices = @transform_0, window_bounds = array<i64: 16, 128>}, {pipeline_mode = #tpu.pipeline_mode<synchronous>, transform_indices = @transform_1, window_bounds = array<i64: 128, 64>}, {pipeline_mode = #tpu.pipeline_mode<synchronous>, transform_indices = @transform_2, window_bounds = array<i64: 64, 128>}, {pipeline_mode = #tpu.pipeline_mode<synchronous>, transform_indices = @transform_3, window_bounds = array<i64: 1, 128>}, {transform_indices = @transform_4, window_bounds = array<i64: 16, 128>}]} {
    %c0 = arith.constant 0 : index
    %c0_0 = arith.constant 0 : index
    %0 = vector.load %arg1[%c0, %c0_0] : memref<16x128xbf16, #tpu.memory_space<vmem>>, vector<16x128xbf16>
    %c0_1 = arith.constant 0 : index
    %c0_2 = arith.constant 0 : index
    %1 = vector.load %arg2[%c0_1, %c0_2] : memref<128x64xbf16, #tpu.memory_space<vmem>>, vector<128x64xbf16>
    %cst = arith.constant dense<0.000000e+00> : vector<16x64xf32>
    %2 = tpu.matmul %0, %1, %cst {dimension_numbers = #tpu.dot_dimension_numbers<[1], [0], [0], [1], [0, 0, 1, 1], [], []>} : vector<16x128xbf16>, vector<128x64xbf16>, vector<16x64xf32> -> vector<16x64xf32>
    %3 = math.tanh %2 : vector<16x64xf32>
    %4 = arith.truncf %3 : vector<16x64xf32> to vector<16x64xbf16>
    %c0_3 = arith.constant 0 : index
    %c0_4 = arith.constant 0 : index
    %5 = vector.load %arg3[%c0_3, %c0_4] : memref<64x128xbf16, #tpu.memory_space<vmem>>, vector<64x128xbf16>
    %cst_5 = arith.constant dense<0.000000e+00> : vector<16x128xf32>
    %6 = tpu.matmul %4, %5, %cst_5 {dimension_numbers = #tpu.dot_dimension_numbers<[1], [0], [0], [1], [0, 0, 1, 1], [], []>} : vector<16x64xbf16>, vector<64x128xbf16>, vector<16x128xf32> -> vector<16x128xf32>
    %c0_6 = arith.constant 0 : index
    %c0_7 = arith.constant 0 : index
    %7 = vector.load %arg4[%c0_6, %c0_7] : memref<1x128xf32, #tpu.memory_space<vmem>>, vector<1x128xf32>
    %8 = vector.broadcast %7 : vector<1x128xf32> to vector<16x128xf32>
    %9 = arith.addf %6, %8 : vector<16x128xf32>
    %c0_8 = arith.constant 0 : index
    %c0_9 = arith.constant 0 : index
    %10 = vector.load %arg5[%c0_8, %c0_9] : memref<16x128xf32, #tpu.memory_space<vmem>>, vector<16x128xf32>
    tpu.vector_store %arg5[%c0_8, %c0_9], %9 {strides = array<i32>} : memref<16x128xf32, #tpu.memory_space<vmem>>, vector<16x128xf32>,
    return
  }
  func.func @transform_0(%arg0: i32) -> (i32, i32) {
    %c0_i32 = arith.constant 0 : i32
    %c0_i32_0 = arith.constant 0 : i32
    return %arg0, %c0_i32 : i32, i32
  }
  func.func @transform_1(%arg0: i32) -> (i32, i32) {
    %c0_i32 = arith.constant 0 : i32
    %c0_i32_0 = arith.constant 0 : i32
    %c0_i32_1 = arith.constant 0 : i32
    return %c0_i32, %c0_i32_0 : i32, i32
  }
  func.func @transform_2(%arg0: i32) -> (i32, i32) {
    %c0_i32 = arith.constant 0 : i32
    %c0_i32_0 = arith.constant 0 : i32
    %c0_i32_1 = arith.constant 0 : i32
    return %c0_i32, %c0_i32_0 : i32, i32
  }
  func.func @transform_3(%arg0: i32) -> (i32, i32) {
    %c0_i32 = arith.constant 0 : i32
    %c0_i32_0 = arith.constant 0 : i32
    %c0_i32_1 = arith.constant 0 : i32
    return %c0_i32, %c0_i32_0 : i32, i32
  }
  func.func @transform_4(%arg0: i32) -> (i32, i32) {
    %c0_i32 = arith.constant 0 : i32
    %c0_i32_0 = arith.constant 0 : i32
    return %arg0, %c0_i32 : i32, i32
  }
}

module attributes {stable_mosaic.version = 11 : i64} {
  func.func @_mm_kernel(%arg0: i32, %arg1: memref<16x128xbf16, #tpu.memory_space<vmem>>, %arg2: memref<128x128xbf16, #tpu.memory_space<vmem>>, %arg3: memref<16x128xf32, #tpu.memory_space<vmem>>) attributes {dimension_semantics = [#tpu.dimension_semantics<parallel>], iteration_bounds = array<i64: 1>, scalar_prefetch = 0 : i64, scratch_operands = 0 : i64, tpu.core_type = #tpu.core_type<tc>, window_params = [{transform_indices = @transform_0, window_bounds = array<i64: 16, 128>}, {pipeline_mode = #tpu.pipeline_mode<synchronous>, transform_indices = @transform_1, window_bounds = array<i64: 128, 128>}, {transform_indices = @transform_2, window_bounds = array<i64: 16, 128>}]} {
    %c0 = arith.constant 0 : index
    %c0_0 = arith.constant 0 : index
    %0 = vector.load %arg1[%c0, %c0_0] : memref<16x128xbf16, #tpu.memory_space<vmem>>, vector<16x128xbf16>
    %c0_1 = arith.constant 0 : index
    %c0_2 = arith.constant 0 : index
    %1 = vector.load %arg2[%c0_1, %c0_2] : memref<128x128xbf16, #tpu.memory_space<vmem>>, vector<128x128xbf16>
    %cst = arith.constant dense<0.000000e+00> : vector<16x128xf32>
    %2 = tpu.matmul %0, %1, %cst {dimension_numbers = #tpu.dot_dimension_numbers<[1], [0], [0], [1], [0, 0, 1, 1], [], []>} : vector<16x128xbf16>, vector<128x128xbf16>, vector<16x128xf32> -> vector<16x128xf32>
    %c0_3 = arith.constant 0 : index
    %c0_4 = arith.constant 0 : index
    %3 = vector.load %arg3[%c0_3, %c0_4] : memref<16x128xf32, #tpu.memory_space<vmem>>, vector<16x128xf32>
    tpu.vector_store %arg3[%c0_3, %c0_4], %2 {strides = array<i32>} : memref<16x128xf32, #tpu.memory_space<vmem>>, vector<16x128xf32>,
    return
  }
  func.func @transform_0(%arg0: i32) -> (i32, i32) {
    %c0_i32 = arith.constant 0 : i32
    %c0_i32_0 = arith.constant 0 : i32
    return %arg0, %c0_i32 : i32, i32
  }
  func.func @transform_1(%arg0: i32) -> (i32, i32) {
    %c0_i32 = arith.constant 0 : i32
    %c0_i32_0 = arith.constant 0 : i32
    %c0_i32_1 = arith.constant 0 : i32
    return %c0_i32, %c0_i32_0 : i32, i32
  }
  func.func @transform_2(%arg0: i32) -> (i32, i32) {
    %c0_i32 = arith.constant 0 : i32
    %c0_i32_0 = arith.constant 0 : i32
    return %arg0, %c0_i32 : i32, i32
  }
}

module attributes {stable_mosaic.version = 11 : i64} {
  func.func @_wkv6_chunk_kernel(%arg0: i32, %arg1: i32, %arg2: i32, %arg3: memref<1x8x128xf32, #tpu.memory_space<vmem>>, %arg4: memref<1x8x128xf32, #tpu.memory_space<vmem>>, %arg5: memref<1x8x128xf32, #tpu.memory_space<vmem>>, %arg6: memref<1x128xf32, #tpu.memory_space<vmem>>, %arg7: memref<1x8x128xf32, #tpu.memory_space<vmem>>, %arg8: memref<2x64x64xf32, #tpu.memory_space<vmem>>) attributes {dimension_semantics = [#tpu.dimension_semantics<parallel>, #tpu.dimension_semantics<parallel>, #tpu.dimension_semantics<arbitrary>], iteration_bounds = array<i64: 2, 1, 1>, scalar_prefetch = 0 : i64, scratch_operands = 1 : i64, tpu.core_type = #tpu.core_type<tc>, window_params = [{transform_indices = @transform_0, window_bounds = array<i64: 1, 8, 128>}, {transform_indices = @transform_1, window_bounds = array<i64: 1, 8, 128>}, {transform_indices = @transform_2, window_bounds = array<i64: 1, 8, 128>}, {transform_indices = @transform_3, window_bounds = array<i64: 1, 128>}, {transform_indices = @transform_4, window_bounds = array<i64: 1, 8, 128>}]} {
    %c0_i32 = arith.constant 0 : i32
    %0 = arith.cmpi eq, %arg2, %c0_i32 : i32
    %1 = arith.extui %0 : i1 to i32
    %c0_i32_0 = arith.constant 0 : i32
    %2 = arith.cmpi ne, %1, %c0_i32_0 : i32
    scf.if %2 {
      %cst_43 = arith.constant 0.000000e+00 : f32
      %120 = vector.broadcast %cst_43 : f32 to vector<2x64x64xf32>
      %c0_44 = arith.constant 0 : index
      %c0_45 = arith.constant 0 : index
      %c0_46 = arith.constant 0 : index
      %121 = vector.load %arg8[%c0_44, %c0_45, %c0_46] : memref<2x64x64xf32, #tpu.memory_space<vmem>>, vector<2x64x64xf32>
      tpu.vector_store %arg8[%c0_44, %c0_45, %c0_46], %120 {strides = array<i32>} : memref<2x64x64xf32, #tpu.memory_space<vmem>>, vector<2x64x64xf32>,
    } else {
    }
    %c0 = arith.constant 0 : index
    %c0_1 = arith.constant 0 : index
    %c0_2 = arith.constant 0 : index
    %3 = vector.load %arg3[%c0, %c0_1, %c0_2] : memref<1x8x128xf32, #tpu.memory_space<vmem>>, vector<1x8x128xf32>
    %4 = vector.shape_cast %3 : vector<1x8x128xf32> to vector<8x128xf32>
    %c0_3 = arith.constant 0 : index
    %c0_4 = arith.constant 0 : index
    %c0_5 = arith.constant 0 : index
    %5 = vector.load %arg4[%c0_3, %c0_4, %c0_5] : memref<1x8x128xf32, #tpu.memory_space<vmem>>, vector<1x8x128xf32>
    %6 = vector.shape_cast %5 : vector<1x8x128xf32> to vector<8x128xf32>
    %c0_6 = arith.constant 0 : index
    %c0_7 = arith.constant 0 : index
    %c0_8 = arith.constant 0 : index
    %7 = vector.load %arg5[%c0_6, %c0_7, %c0_8] : memref<1x8x128xf32, #tpu.memory_space<vmem>>, vector<1x8x128xf32>
    %8 = vector.shape_cast %7 : vector<1x8x128xf32> to vector<8x128xf32>
    %c0_9 = arith.constant 0 : index
    %c0_10 = arith.constant 0 : index
    %9 = vector.load %arg6[%c0_9, %c0_10] : memref<1x128xf32, #tpu.memory_space<vmem>>, vector<1x128xf32>
    %10 = math.exp %8 : vector<8x128xf32>
    %cst = arith.constant 0.000000e+00 : f32
    %11 = vector.broadcast %cst : f32 to vector<8x128xf32>
    %12 = arith.subf %11, %10 : vector<8x128xf32>
    %13 = tpu.iota {dimensions = array<i32: 0>} : vector<8x8xi32>
    %14 = tpu.iota {dimensions = array<i32: 1>} : vector<8x8xi32>
    %15 = arith.cmpi sgt, %13, %14 : vector<8x8xi32>
    %16 = arith.cmpi eq, %13, %14 : vector<8x8xi32>
    %17 = arith.extui %15 : vector<8x8xi1> to vector<8x8xi32>
    %18 = arith.sitofp %17 : vector<8x8xi32> to vector<8x8xf32>
    %cst_11 = arith.constant dense<0.000000e+00> : vector<8x128xf32>
    %19 = tpu.matmul %18, %12, %cst_11 {dimension_numbers = #tpu.dot_dimension_numbers<[1], [0], [0], [1], [0, 0, 1, 1], [], []>} : vector<8x8xf32>, vector<8x128xf32>, vector<8x128xf32> -> vector<8x128xf32>
    %20 = arith.addf %19, %12 : vector<8x128xf32>
    %21 = vector.extract_strided_slice %20 {offsets = [7, 0], sizes = [1, 128], strides = [1, 1]} : vector<8x128xf32> to vector<1x128xf32>
    %22 = vector.extract_strided_slice %19 {offsets = [4, 0], sizes = [1, 128], strides = [1, 1]} : vector<8x128xf32> to vector<1x128xf32>
    %23 = math.exp %19 : vector<8x128xf32>
    %24 = arith.mulf %4, %23 : vector<8x128xf32>
    %cst_12 = arith.constant 0.000000e+00 : f32
    %25 = vector.broadcast %cst_12 : f32 to vector<1x128xf32>
    %26 = arith.subf %25, %22 : vector<1x128xf32>
    %27 = math.exp %26 : vector<1x128xf32>
    %28 = vector.broadcast %27 : vector<1x128xf32> to vector<8x128xf32>
    %29 = arith.mulf %24, %28 : vector<8x128xf32>
    %30 = arith.truncf %29 : vector<8x128xf32> to vector<8x128xbf16>
    %31 = vector.broadcast %22 : vector<1x128xf32> to vector<8x128xf32>
    %32 = arith.subf %31, %20 : vector<8x128xf32>
    %33 = math.exp %32 : vector<8x128xf32>
    %34 = arith.mulf %8, %33 : vector<8x128xf32>
    %35 = arith.truncf %34 : vector<8x128xf32> to vector<8x128xbf16>
    %36 = vector.broadcast %21 : vector<1x128xf32> to vector<8x128xf32>
    %37 = arith.subf %36, %20 : vector<8x128xf32>
    %38 = math.exp %37 : vector<8x128xf32>
    %39 = arith.mulf %8, %38 : vector<8x128xf32>
    %40 = arith.truncf %39 : vector<8x128xf32> to vector<8x128xbf16>
    %41 = arith.truncf %6 : vector<8x128xf32> to vector<8x128xbf16>
    %42 = arith.truncf %24 : vector<8x128xf32> to vector<8x128xbf16>
    %43 = vector.broadcast %9 : vector<1x128xf32> to vector<8x128xf32>
    %44 = arith.mulf %4, %43 : vector<8x128xf32>
    %45 = arith.mulf %44, %8 : vector<8x128xf32>
    %46 = vector.extract_strided_slice %45 {offsets = [0, 0], sizes = [8, 64], strides = [1, 1]} : vector<8x128xf32> to vector<8x64xf32>
    %cst_13 = arith.constant dense<0.000000e+00> : vector<8xf32>
    %47 = vector.multi_reduction <add>, %46, %cst_13 [1] : vector<8x64xf32> to vector<8xf32>
    %48 = vector.shape_cast %47 : vector<8xf32> to vector<8x1xf32>
    %49 = vector.extract_strided_slice %30 {offsets = [0, 0], sizes = [8, 64], strides = [1, 1]} : vector<8x128xbf16> to vector<8x64xbf16>
    %50 = vector.extract_strided_slice %35 {offsets = [0, 0], sizes = [8, 64], strides = [1, 1]} : vector<8x128xbf16> to vector<8x64xbf16>
    %cst_14 = arith.constant dense<0.000000e+00> : vector<8x8xf32>
    %51 = tpu.matmul %49, %50, %cst_14 {dimension_numbers = #tpu.dot_dimension_numbers<[1], [1], [0], [0], [0, 0, 1, 0], [], []>} : vector<8x64xbf16>, vector<8x64xbf16>, vector<8x8xf32> -> vector<8x8xf32>
    %cst_15 = arith.constant 0.000000e+00 : f32
    %52 = vector.broadcast %cst_15 : f32 to vector<8x8xf32>
    %53 = arith.select %15, %51, %52 : vector<8x8xi1>, vector<8x8xf32>
    %cst_16 = arith.constant 0.000000e+00 : f32
    %54 = vector.shape_cast %48 : vector<8x1xf32> to vector<8x1xf32>
    %55 = vector.broadcast %54 : vector<8x1xf32> to vector<8x8xf32>
    %56 = vector.broadcast %cst_16 : f32 to vector<8x8xf32>
    %57 = arith.select %16, %55, %56 : vector<8x8xi1>, vector<8x8xf32>
    %58 = arith.addf %53, %57 : vector<8x8xf32>
    %59 = arith.truncf %58 : vector<8x8xf32> to vector<8x8xbf16>
    %c0_17 = arith.constant 0 : index
    %c0_18 = arith.constant 0 : index
    %c0_19 = arith.constant 0 : index
    %60 = vector.load %arg8[%c0_17, %c0_18, %c0_19] : memref<2x64x64xf32, #tpu.memory_space<vmem>>, vector<1x64x64xf32>
    %61 = vector.shape_cast %60 : vector<1x64x64xf32> to vector<64x64xf32>
    %62 = vector.extract_strided_slice %41 {offsets = [0, 0], sizes = [8, 64], strides = [1, 1]} : vector<8x128xbf16> to vector<8x64xbf16>
    %cst_20 = arith.constant dense<0.000000e+00> : vector<8x64xf32>
    %63 = tpu.matmul %59, %62, %cst_20 {dimension_numbers = #tpu.dot_dimension_numbers<[1], [0], [0], [1], [0, 0, 1, 1], [], []>} : vector<8x8xbf16>, vector<8x64xbf16>, vector<8x64xf32> -> vector<8x64xf32>
    %64 = vector.extract_strided_slice %42 {offsets = [0, 0], sizes = [8, 64], strides = [1, 1]} : vector<8x128xbf16> to vector<8x64xbf16>
    %65 = arith.truncf %61 : vector<64x64xf32> to vector<64x64xbf16>
    %cst_21 = arith.constant dense<0.000000e+00> : vector<8x64xf32>
    %66 = tpu.matmul %64, %65, %cst_21 {dimension_numbers = #tpu.dot_dimension_numbers<[1], [0], [0], [1], [0, 0, 1, 1], [], []>} : vector<8x64xbf16>, vector<64x64xbf16>, vector<8x64xf32> -> vector<8x64xf32>
    %67 = arith.addf %63, %66 : vector<8x64xf32>
    %c0_22 = arith.constant 0 : index
    %c0_23 = arith.constant 0 : index
    %c0_24 = arith.constant 0 : index
    %68 = vector.load %arg7[%c0_22, %c0_23, %c0_24] : memref<1x8x128xf32, #tpu.memory_space<vmem>>, vector<1x8x64xf32>
    %69 = vector.shape_cast %68 : vector<1x8x64xf32> to vector<8x64xf32>
    %70 = vector.shape_cast %67 : vector<8x64xf32> to vector<1x8x64xf32>
    tpu.vector_store %arg7[%c0_22, %c0_23, %c0_24], %70 {strides = array<i32>} : memref<1x8x128xf32, #tpu.memory_space<vmem>>, vector<1x8x64xf32>,
    %71 = vector.extract_strided_slice %21 {offsets = [0, 0], sizes = [1, 64], strides = [1, 1]} : vector<1x128xf32> to vector<1x64xf32>
    %72 = math.exp %71 : vector<1x64xf32>
    %73 = tpu.transpose %72, [1, 0] : vector<1x64xf32> -> vector<64x1xf32>
    %74 = vector.broadcast %73 : vector<64x1xf32> to vector<64x64xf32>
    %75 = arith.mulf %74, %61 : vector<64x64xf32>
    %76 = vector.extract_strided_slice %40 {offsets = [0, 0], sizes = [8, 64], strides = [1, 1]} : vector<8x128xbf16> to vector<8x64xbf16>
    %77 = vector.extract_strided_slice %41 {offsets = [0, 0], sizes = [8, 64], strides = [1, 1]} : vector<8x128xbf16> to vector<8x64xbf16>
    %cst_25 = arith.constant dense<0.000000e+00> : vector<64x64xf32>
    %78 = tpu.matmul %76, %77, %cst_25 {dimension_numbers = #tpu.dot_dimension_numbers<[0], [0], [1], [1], [0, 1, 1, 1], [], []>} : vector<8x64xbf16>, vector<8x64xbf16>, vector<64x64xf32> -> vector<64x64xf32>
    %79 = arith.addf %75, %78 : vector<64x64xf32>
    %c0_26 = arith.constant 0 : index
    %c0_27 = arith.constant 0 : index
    %c0_28 = arith.constant 0 : index
    %80 = vector.load %arg8[%c0_26, %c0_27, %c0_28] : memref<2x64x64xf32, #tpu.memory_space<vmem>>, vector<1x64x64xf32>
    %81 = vector.shape_cast %80 : vector<1x64x64xf32> to vector<64x64xf32>
    %82 = vector.shape_cast %79 : vector<64x64xf32> to vector<1x64x64xf32>
    tpu.vector_store %arg8[%c0_26, %c0_27, %c0_28], %82 {strides = array<i32>} : memref<2x64x64xf32, #tpu.memory_space<vmem>>, vector<1x64x64xf32>,
    %83 = vector.extract_strided_slice %45 {offsets = [0, 64], sizes = [8, 64], strides = [1, 1]} : vector<8x128xf32> to vector<8x64xf32>
    %cst_29 = arith.constant dense<0.000000e+00> : vector<8xf32>
    %84 = vector.multi_reduction <add>, %83, %cst_29 [1] : vector<8x64xf32> to vector<8xf32>
    %85 = vector.shape_cast %84 : vector<8xf32> to vector<8x1xf32>
    %86 = vector.extract_strided_slice %30 {offsets = [0, 64], sizes = [8, 64], strides = [1, 1]} : vector<8x128xbf16> to vector<8x64xbf16>
    %87 = vector.extract_strided_slice %35 {offsets = [0, 64], sizes = [8, 64], strides = [1, 1]} : vector<8x128xbf16> to vector<8x64xbf16>
    %cst_30 = arith.constant dense<0.000000e+00> : vector<8x8xf32>
    %88 = tpu.matmul %86, %87, %cst_30 {dimension_numbers = #tpu.dot_dimension_numbers<[1], [1], [0], [0], [0, 0, 1, 0], [], []>} : vector<8x64xbf16>, vector<8x64xbf16>, vector<8x8xf32> -> vector<8x8xf32>
    %cst_31 = arith.constant 0.000000e+00 : f32
    %89 = vector.broadcast %cst_31 : f32 to vector<8x8xf32>
    %90 = arith.select %15, %88, %89 : vector<8x8xi1>, vector<8x8xf32>
    %cst_32 = arith.constant 0.000000e+00 : f32
    %91 = vector.shape_cast %85 : vector<8x1xf32> to vector<8x1xf32>
    %92 = vector.broadcast %91 : vector<8x1xf32> to vector<8x8xf32>
    %93 = vector.broadcast %cst_32 : f32 to vector<8x8xf32>
    %94 = arith.select %16, %92, %93 : vector<8x8xi1>, vector<8x8xf32>
    %95 = arith.addf %90, %94 : vector<8x8xf32>
    %96 = arith.truncf %95 : vector<8x8xf32> to vector<8x8xbf16>
    %c1 = arith.constant 1 : index
    %c0_33 = arith.constant 0 : index
    %c0_34 = arith.constant 0 : index
    %97 = vector.load %arg8[%c1, %c0_33, %c0_34] : memref<2x64x64xf32, #tpu.memory_space<vmem>>, vector<1x64x64xf32>
    %98 = vector.shape_cast %97 : vector<1x64x64xf32> to vector<64x64xf32>
    %99 = vector.extract_strided_slice %41 {offsets = [0, 64], sizes = [8, 64], strides = [1, 1]} : vector<8x128xbf16> to vector<8x64xbf16>
    %cst_35 = arith.constant dense<0.000000e+00> : vector<8x64xf32>
    %100 = tpu.matmul %96, %99, %cst_35 {dimension_numbers = #tpu.dot_dimension_numbers<[1], [0], [0], [1], [0, 0, 1, 1], [], []>} : vector<8x8xbf16>, vector<8x64xbf16>, vector<8x64xf32> -> vector<8x64xf32>
    %101 = vector.extract_strided_slice %42 {offsets = [0, 64], sizes = [8, 64], strides = [1, 1]} : vector<8x128xbf16> to vector<8x64xbf16>
    %102 = arith.truncf %98 : vector<64x64xf32> to vector<64x64xbf16>
    %cst_36 = arith.constant dense<0.000000e+00> : vector<8x64xf32>
    %103 = tpu.matmul %101, %102, %cst_36 {dimension_numbers = #tpu.dot_dimension_numbers<[1], [0], [0], [1], [0, 0, 1, 1], [], []>} : vector<8x64xbf16>, vector<64x64xbf16>, vector<8x64xf32> -> vector<8x64xf32>
    %104 = arith.addf %100, %103 : vector<8x64xf32>
    %c0_37 = arith.constant 0 : index
    %c0_38 = arith.constant 0 : index
    %c64 = arith.constant 64 : index
    %105 = vector.load %arg7[%c0_37, %c0_38, %c64] : memref<1x8x128xf32, #tpu.memory_space<vmem>>, vector<1x8x64xf32>
    %106 = vector.shape_cast %105 : vector<1x8x64xf32> to vector<8x64xf32>
    %107 = vector.shape_cast %104 : vector<8x64xf32> to vector<1x8x64xf32>
    tpu.vector_store %arg7[%c0_37, %c0_38, %c64], %107 {strides = array<i32>} : memref<1x8x128xf32, #tpu.memory_space<vmem>>, vector<1x8x64xf32>,
    %108 = vector.extract_strided_slice %21 {offsets = [0, 64], sizes = [1, 64], strides = [1, 1]} : vector<1x128xf32> to vector<1x64xf32>
    %109 = math.exp %108 : vector<1x64xf32>
    %110 = tpu.transpose %109, [1, 0] : vector<1x64xf32> -> vector<64x1xf32>
    %111 = vector.broadcast %110 : vector<64x1xf32> to vector<64x64xf32>
    %112 = arith.mulf %111, %98 : vector<64x64xf32>
    %113 = vector.extract_strided_slice %40 {offsets = [0, 64], sizes = [8, 64], strides = [1, 1]} : vector<8x128xbf16> to vector<8x64xbf16>
    %114 = vector.extract_strided_slice %41 {offsets = [0, 64], sizes = [8, 64], strides = [1, 1]} : vector<8x128xbf16> to vector<8x64xbf16>
    %cst_39 = arith.constant dense<0.000000e+00> : vector<64x64xf32>
    %115 = tpu.matmul %113, %114, %cst_39 {dimension_numbers = #tpu.dot_dimension_numbers<[0], [0], [1], [1], [0, 1, 1, 1], [], []>} : vector<8x64xbf16>, vector<8x64xbf16>, vector<64x64xf32> -> vector<64x64xf32>
    %116 = arith.addf %112, %115 : vector<64x64xf32>
    %c1_40 = arith.constant 1 : index
    %c0_41 = arith.constant 0 : index
    %c0_42 = arith.constant 0 : index
    %117 = vector.load %arg8[%c1_40, %c0_41, %c0_42] : memref<2x64x64xf32, #tpu.memory_space<vmem>>, vector<1x64x64xf32>
    %118 = vector.shape_cast %117 : vector<1x64x64xf32> to vector<64x64xf32>
    %119 = vector.shape_cast %116 : vector<64x64xf32> to vector<1x64x64xf32>
    tpu.vector_store %arg8[%c1_40, %c0_41, %c0_42], %119 {strides = array<i32>} : memref<2x64x64xf32, #tpu.memory_space<vmem>>, vector<1x64x64xf32>,
    return
  }
  func.func @transform_0(%arg0: i32, %arg1: i32, %arg2: i32) -> (i32, i32, i32) {
    %c0_i32 = arith.constant 0 : i32
    return %arg0, %arg2, %arg1 : i32, i32, i32
  }
  func.func @transform_1(%arg0: i32, %arg1: i32, %arg2: i32) -> (i32, i32, i32) {
    %c0_i32 = arith.constant 0 : i32
    return %arg0, %arg2, %arg1 : i32, i32, i32
  }
  func.func @transform_2(%arg0: i32, %arg1: i32, %arg2: i32) -> (i32, i32, i32) {
    %c0_i32 = arith.constant 0 : i32
    return %arg0, %arg2, %arg1 : i32, i32, i32
  }
  func.func @transform_3(%arg0: i32, %arg1: i32, %arg2: i32) -> (i32, i32) {
    %c0_i32 = arith.constant 0 : i32
    %c0_i32_0 = arith.constant 0 : i32
    return %arg1, %c0_i32 : i32, i32
  }
  func.func @transform_4(%arg0: i32, %arg1: i32, %arg2: i32) -> (i32, i32, i32) {
    %c0_i32 = arith.constant 0 : i32
    return %arg0, %arg2, %arg1 : i32, i32, i32
  }
}

module attributes {stable_mosaic.version = 11 : i64} {
  func.func @_groupnorm_kernel(%arg0: i32, %arg1: memref<16x128xf32, #tpu.memory_space<vmem>>, %arg2: memref<128x2xf32, #tpu.memory_space<vmem>>, %arg3: memref<1x128xf32, #tpu.memory_space<vmem>>, %arg4: memref<1x128xf32, #tpu.memory_space<vmem>>, %arg5: memref<16x128xbf16, #tpu.memory_space<vmem>>) attributes {dimension_semantics = [#tpu.dimension_semantics<parallel>], iteration_bounds = array<i64: 1>, scalar_prefetch = 0 : i64, scratch_operands = 0 : i64, tpu.core_type = #tpu.core_type<tc>, window_params = [{transform_indices = @transform_0, window_bounds = array<i64: 16, 128>}, {pipeline_mode = #tpu.pipeline_mode<synchronous>, transform_indices = @transform_1, window_bounds = array<i64: 128, 2>}, {pipeline_mode = #tpu.pipeline_mode<synchronous>, transform_indices = @transform_2, window_bounds = array<i64: 1, 128>}, {pipeline_mode = #tpu.pipeline_mode<synchronous>, transform_indices = @transform_3, window_bounds = array<i64: 1, 128>}, {transform_indices = @transform_4, window_bounds = array<i64: 16, 128>}]} {
    %c0 = arith.constant 0 : index
    %c0_0 = arith.constant 0 : index
    %0 = vector.load %arg1[%c0, %c0_0] : memref<16x128xf32, #tpu.memory_space<vmem>>, vector<16x128xf32>
    %c0_1 = arith.constant 0 : index
    %c0_2 = arith.constant 0 : index
    %1 = vector.load %arg2[%c0_1, %c0_2] : memref<128x2xf32, #tpu.memory_space<vmem>>, vector<128x2xf32>
    %cst = arith.constant dense<0.000000e+00> : vector<16x2xf32>
    %2 = tpu.matmul %0, %1, %cst {dimension_numbers = #tpu.dot_dimension_numbers<[1], [0], [0], [1], [0, 0, 1, 1], [], []>} : vector<16x128xf32>, vector<128x2xf32>, vector<16x2xf32> -> vector<16x2xf32>
    %cst_3 = arith.constant 1.562500e-02 : f32
    %3 = vector.broadcast %cst_3 : f32 to vector<16x2xf32>
    %4 = arith.mulf %2, %3 : vector<16x2xf32>
    %5 = arith.mulf %0, %0 : vector<16x128xf32>
    %cst_4 = arith.constant dense<0.000000e+00> : vector<16x2xf32>
    %6 = tpu.matmul %5, %1, %cst_4 {dimension_numbers = #tpu.dot_dimension_numbers<[1], [0], [0], [1], [0, 0, 1, 1], [], []>} : vector<16x128xf32>, vector<128x2xf32>, vector<16x2xf32> -> vector<16x2xf32>
    %cst_5 = arith.constant 1.562500e-02 : f32
    %7 = vector.broadcast %cst_5 : f32 to vector<16x2xf32>
    %8 = arith.mulf %6, %7 : vector<16x2xf32>
    %cst_6 = arith.constant dense<0.000000e+00> : vector<16x128xf32>
    %9 = tpu.matmul %4, %1, %cst_6 {dimension_numbers = #tpu.dot_dimension_numbers<[1], [1], [0], [0], [0, 0, 1, 0], [], []>} : vector<16x2xf32>, vector<128x2xf32>, vector<16x128xf32> -> vector<16x128xf32>
    %cst_7 = arith.constant dense<0.000000e+00> : vector<16x128xf32>
    %10 = tpu.matmul %8, %1, %cst_7 {dimension_numbers = #tpu.dot_dimension_numbers<[1], [1], [0], [0], [0, 0, 1, 0], [], []>} : vector<16x2xf32>, vector<128x2xf32>, vector<16x128xf32> -> vector<16x128xf32>
    %11 = arith.mulf %9, %9 : vector<16x128xf32>
    %12 = arith.subf %10, %11 : vector<16x128xf32>
    %cst_8 = arith.constant 0.000000e+00 : f32
    %13 = vector.broadcast %cst_8 : f32 to vector<16x128xf32>
    %14 = arith.maximumf %12, %13 : vector<16x128xf32>
    %15 = arith.subf %0, %9 : vector<16x128xf32>
    %cst_9 = arith.constant 2.000000e-05 : f32
    %16 = vector.broadcast %cst_9 : f32 to vector<16x128xf32>
    %17 = arith.addf %14, %16 : vector<16x128xf32>
    %18 = math.rsqrt %17 : vector<16x128xf32>
    %19 = arith.mulf %15, %18 : vector<16x128xf32>
    %c0_10 = arith.constant 0 : index
    %c0_11 = arith.constant 0 : index
    %20 = vector.load %arg3[%c0_10, %c0_11] : memref<1x128xf32, #tpu.memory_space<vmem>>, vector<1x128xf32>
    %21 = vector.broadcast %20 : vector<1x128xf32> to vector<16x128xf32>
    %22 = arith.mulf %19, %21 : vector<16x128xf32>
    %c0_12 = arith.constant 0 : index
    %c0_13 = arith.constant 0 : index
    %23 = vector.load %arg4[%c0_12, %c0_13] : memref<1x128xf32, #tpu.memory_space<vmem>>, vector<1x128xf32>
    %24 = vector.broadcast %23 : vector<1x128xf32> to vector<16x128xf32>
    %25 = arith.addf %22, %24 : vector<16x128xf32>
    %26 = arith.truncf %25 : vector<16x128xf32> to vector<16x128xbf16>
    %c0_14 = arith.constant 0 : index
    %c0_15 = arith.constant 0 : index
    %27 = vector.load %arg5[%c0_14, %c0_15] : memref<16x128xbf16, #tpu.memory_space<vmem>>, vector<16x128xbf16>
    tpu.vector_store %arg5[%c0_14, %c0_15], %26 {strides = array<i32>} : memref<16x128xbf16, #tpu.memory_space<vmem>>, vector<16x128xbf16>,
    return
  }
  func.func @transform_0(%arg0: i32) -> (i32, i32) {
    %c0_i32 = arith.constant 0 : i32
    %c0_i32_0 = arith.constant 0 : i32
    return %arg0, %c0_i32 : i32, i32
  }
  func.func @transform_1(%arg0: i32) -> (i32, i32) {
    %c0_i32 = arith.constant 0 : i32
    %c0_i32_0 = arith.constant 0 : i32
    %c0_i32_1 = arith.constant 0 : i32
    return %c0_i32, %c0_i32_0 : i32, i32
  }
  func.func @transform_2(%arg0: i32) -> (i32, i32) {
    %c0_i32 = arith.constant 0 : i32
    %c0_i32_0 = arith.constant 0 : i32
    %c0_i32_1 = arith.constant 0 : i32
    return %c0_i32, %c0_i32_0 : i32, i32
  }
  func.func @transform_3(%arg0: i32) -> (i32, i32) {
    %c0_i32 = arith.constant 0 : i32
    %c0_i32_0 = arith.constant 0 : i32
    %c0_i32_1 = arith.constant 0 : i32
    return %c0_i32, %c0_i32_0 : i32, i32
  }
  func.func @transform_4(%arg0: i32) -> (i32, i32) {
    %c0_i32 = arith.constant 0 : i32
    %c0_i32_0 = arith.constant 0 : i32
    return %arg0, %c0_i32 : i32, i32
  }
}

module attributes {stable_mosaic.version = 11 : i64} {
  func.func @_lora_kernel(%arg0: i32, %arg1: memref<16x128xbf16, #tpu.memory_space<vmem>>, %arg2: memref<128x160xbf16, #tpu.memory_space<vmem>>, %arg3: memref<160x128xbf16, #tpu.memory_space<vmem>>, %arg4: memref<16x128xbf16, #tpu.memory_space<vmem>>) attributes {dimension_semantics = [#tpu.dimension_semantics<parallel>], iteration_bounds = array<i64: 1>, scalar_prefetch = 0 : i64, scratch_operands = 0 : i64, tpu.core_type = #tpu.core_type<tc>, window_params = [{transform_indices = @transform_0, window_bounds = array<i64: 16, 128>}, {pipeline_mode = #tpu.pipeline_mode<synchronous>, transform_indices = @transform_1, window_bounds = array<i64: 128, 160>}, {pipeline_mode = #tpu.pipeline_mode<synchronous>, transform_indices = @transform_2, window_bounds = array<i64: 160, 128>}, {transform_indices = @transform_3, window_bounds = array<i64: 16, 128>}]} {
    %c0 = arith.constant 0 : index
    %c0_0 = arith.constant 0 : index
    %0 = vector.load %arg1[%c0, %c0_0] : memref<16x128xbf16, #tpu.memory_space<vmem>>, vector<16x128xbf16>
    %c0_1 = arith.constant 0 : index
    %c0_2 = arith.constant 0 : index
    %1 = vector.load %arg2[%c0_1, %c0_2] : memref<128x160xbf16, #tpu.memory_space<vmem>>, vector<128x160xbf16>
    %cst = arith.constant dense<0.000000e+00> : vector<16x160xf32>
    %2 = tpu.matmul %0, %1, %cst {dimension_numbers = #tpu.dot_dimension_numbers<[1], [0], [0], [1], [0, 0, 1, 1], [], []>} : vector<16x128xbf16>, vector<128x160xbf16>, vector<16x160xf32> -> vector<16x160xf32>
    %3 = math.tanh %2 : vector<16x160xf32>
    %4 = arith.truncf %3 : vector<16x160xf32> to vector<16x160xbf16>
    %c0_3 = arith.constant 0 : index
    %c0_4 = arith.constant 0 : index
    %5 = vector.load %arg3[%c0_3, %c0_4] : memref<160x128xbf16, #tpu.memory_space<vmem>>, vector<160x128xbf16>
    %cst_5 = arith.constant dense<0.000000e+00> : vector<16x128xf32>
    %6 = tpu.matmul %4, %5, %cst_5 {dimension_numbers = #tpu.dot_dimension_numbers<[1], [0], [0], [1], [0, 0, 1, 1], [], []>} : vector<16x160xbf16>, vector<160x128xbf16>, vector<16x128xf32> -> vector<16x128xf32>
    %7 = arith.truncf %6 : vector<16x128xf32> to vector<16x128xbf16>
    %c0_6 = arith.constant 0 : index
    %c0_7 = arith.constant 0 : index
    %8 = vector.load %arg4[%c0_6, %c0_7] : memref<16x128xbf16, #tpu.memory_space<vmem>>, vector<16x128xbf16>
    tpu.vector_store %arg4[%c0_6, %c0_7], %7 {strides = array<i32>} : memref<16x128xbf16, #tpu.memory_space<vmem>>, vector<16x128xbf16>,
    return
  }
  func.func @transform_0(%arg0: i32) -> (i32, i32) {
    %c0_i32 = arith.constant 0 : i32
    %c0_i32_0 = arith.constant 0 : i32
    return %arg0, %c0_i32 : i32, i32
  }
  func.func @transform_1(%arg0: i32) -> (i32, i32) {
    %c0_i32 = arith.constant 0 : i32
    %c0_i32_0 = arith.constant 0 : i32
    %c0_i32_1 = arith.constant 0 : i32
    return %c0_i32, %c0_i32_0 : i32, i32
  }
  func.func @transform_2(%arg0: i32) -> (i32, i32) {
    %c0_i32 = arith.constant 0 : i32
    %c0_i32_0 = arith.constant 0 : i32
    %c0_i32_1 = arith.constant 0 : i32
    return %c0_i32, %c0_i32_0 : i32, i32
  }
  func.func @transform_3(%arg0: i32) -> (i32, i32) {
    %c0_i32 = arith.constant 0 : i32
    %c0_i32_0 = arith.constant 0 : i32
    return %arg0, %c0_i32 : i32, i32
  }
}

module attributes {stable_mosaic.version = 11 : i64} {
  func.func @_mul_mm_kernel(%arg0: i32, %arg1: memref<16x128xbf16, #tpu.memory_space<vmem>>, %arg2: memref<16x128xbf16, #tpu.memory_space<vmem>>, %arg3: memref<128x128xbf16, #tpu.memory_space<vmem>>, %arg4: memref<16x128xf32, #tpu.memory_space<vmem>>) attributes {dimension_semantics = [#tpu.dimension_semantics<parallel>], iteration_bounds = array<i64: 1>, scalar_prefetch = 0 : i64, scratch_operands = 0 : i64, tpu.core_type = #tpu.core_type<tc>, window_params = [{transform_indices = @transform_0, window_bounds = array<i64: 16, 128>}, {transform_indices = @transform_1, window_bounds = array<i64: 16, 128>}, {pipeline_mode = #tpu.pipeline_mode<synchronous>, transform_indices = @transform_2, window_bounds = array<i64: 128, 128>}, {transform_indices = @transform_3, window_bounds = array<i64: 16, 128>}]} {
    %c0 = arith.constant 0 : index
    %c0_0 = arith.constant 0 : index
    %0 = vector.load %arg1[%c0, %c0_0] : memref<16x128xbf16, #tpu.memory_space<vmem>>, vector<16x128xbf16>
    %c0_1 = arith.constant 0 : index
    %c0_2 = arith.constant 0 : index
    %1 = vector.load %arg2[%c0_1, %c0_2] : memref<16x128xbf16, #tpu.memory_space<vmem>>, vector<16x128xbf16>
    %2 = arith.mulf %0, %1 : vector<16x128xbf16>
    %c0_3 = arith.constant 0 : index
    %c0_4 = arith.constant 0 : index
    %3 = vector.load %arg3[%c0_3, %c0_4] : memref<128x128xbf16, #tpu.memory_space<vmem>>, vector<128x128xbf16>
    %cst = arith.constant dense<0.000000e+00> : vector<16x128xf32>
    %4 = tpu.matmul %2, %3, %cst {dimension_numbers = #tpu.dot_dimension_numbers<[1], [0], [0], [1], [0, 0, 1, 1], [], []>} : vector<16x128xbf16>, vector<128x128xbf16>, vector<16x128xf32> -> vector<16x128xf32>
    %c0_5 = arith.constant 0 : index
    %c0_6 = arith.constant 0 : index
    %5 = vector.load %arg4[%c0_5, %c0_6] : memref<16x128xf32, #tpu.memory_space<vmem>>, vector<16x128xf32>
    tpu.vector_store %arg4[%c0_5, %c0_6], %4 {strides = array<i32>} : memref<16x128xf32, #tpu.memory_space<vmem>>, vector<16x128xf32>,
    return
  }
  func.func @transform_0(%arg0: i32) -> (i32, i32) {
    %c0_i32 = arith.constant 0 : i32
    %c0_i32_0 = arith.constant 0 : i32
    return %arg0, %c0_i32 : i32, i32
  }
  func.func @transform_1(%arg0: i32) -> (i32, i32) {
    %c0_i32 = arith.constant 0 : i32
    %c0_i32_0 = arith.constant 0 : i32
    return %arg0, %c0_i32 : i32, i32
  }
  func.func @transform_2(%arg0: i32) -> (i32, i32) {
    %c0_i32 = arith.constant 0 : i32
    %c0_i32_0 = arith.constant 0 : i32
    %c0_i32_1 = arith.constant 0 : i32
    return %c0_i32, %c0_i32_0 : i32, i32
  }
  func.func @transform_3(%arg0: i32) -> (i32, i32) {
    %c0_i32 = arith.constant 0 : i32
    %c0_i32_0 = arith.constant 0 : i32
    return %arg0, %c0_i32 : i32, i32
  }
}

module attributes {stable_mosaic.version = 11 : i64} {
  func.func @_mlp_kernel(%arg0: i32, %arg1: i32, %arg2: memref<16x128xf32, #tpu.memory_space<vmem>>, %arg3: memref<128x512xbf16, #tpu.memory_space<vmem>>, %arg4: memref<512x128xbf16, #tpu.memory_space<vmem>>, %arg5: memref<16x128xf32, #tpu.memory_space<vmem>>, %arg6: memref<16x128xf32, #tpu.memory_space<vmem>>) attributes {dimension_semantics = [#tpu.dimension_semantics<parallel>, #tpu.dimension_semantics<arbitrary>], iteration_bounds = array<i64: 1, 1>, scalar_prefetch = 0 : i64, scratch_operands = 1 : i64, tpu.core_type = #tpu.core_type<tc>, window_params = [{transform_indices = @transform_0, window_bounds = array<i64: 16, 128>}, {transform_indices = @transform_1, window_bounds = array<i64: 128, 512>}, {transform_indices = @transform_2, window_bounds = array<i64: 512, 128>}, {transform_indices = @transform_3, window_bounds = array<i64: 16, 128>}]} {
    %c0_i32 = arith.constant 0 : i32
    %0 = arith.cmpi eq, %arg1, %c0_i32 : i32
    %1 = arith.extui %0 : i1 to i32
    %c0_i32_0 = arith.constant 0 : i32
    %2 = arith.cmpi ne, %1, %c0_i32_0 : i32
    scf.if %2 {
      %cst_14 = arith.constant 0.000000e+00 : f32
      %19 = vector.broadcast %cst_14 : f32 to vector<16x128xf32>
      %c0_15 = arith.constant 0 : index
      %c0_16 = arith.constant 0 : index
      %20 = vector.load %arg6[%c0_15, %c0_16] : memref<16x128xf32, #tpu.memory_space<vmem>>, vector<16x128xf32>
      tpu.vector_store %arg6[%c0_15, %c0_16], %19 {strides = array<i32>} : memref<16x128xf32, #tpu.memory_space<vmem>>, vector<16x128xf32>,
    } else {
    }
    %c0 = arith.constant 0 : index
    %c0_1 = arith.constant 0 : index
    %3 = vector.load %arg2[%c0, %c0_1] : memref<16x128xf32, #tpu.memory_space<vmem>>, vector<16x128xf32>
    %4 = arith.truncf %3 : vector<16x128xf32> to vector<16x128xbf16>
    %c0_2 = arith.constant 0 : index
    %c0_3 = arith.constant 0 : index
    %5 = vector.load %arg3[%c0_2, %c0_3] : memref<128x512xbf16, #tpu.memory_space<vmem>>, vector<128x512xbf16>
    %cst = arith.constant dense<0.000000e+00> : vector<16x512xf32>
    %6 = tpu.matmul %4, %5, %cst {dimension_numbers = #tpu.dot_dimension_numbers<[1], [0], [0], [1], [0, 0, 1, 1], [], []>} : vector<16x128xbf16>, vector<128x512xbf16>, vector<16x512xf32> -> vector<16x512xf32>
    %cst_4 = arith.constant 0.000000e+00 : f32
    %7 = vector.broadcast %cst_4 : f32 to vector<16x512xf32>
    %8 = arith.maximumf %6, %7 : vector<16x512xf32>
    %9 = arith.mulf %8, %8 : vector<16x512xf32>
    %c0_5 = arith.constant 0 : index
    %c0_6 = arith.constant 0 : index
    %10 = vector.load %arg6[%c0_5, %c0_6] : memref<16x128xf32, #tpu.memory_space<vmem>>, vector<16x128xf32>
    %11 = arith.truncf %9 : vector<16x512xf32> to vector<16x512xbf16>
    %c0_7 = arith.constant 0 : index
    %c0_8 = arith.constant 0 : index
    %12 = vector.load %arg4[%c0_7, %c0_8] : memref<512x128xbf16, #tpu.memory_space<vmem>>, vector<512x128xbf16>
    %cst_9 = arith.constant dense<0.000000e+00> : vector<16x128xf32>
    %13 = tpu.matmul %11, %12, %cst_9 {dimension_numbers = #tpu.dot_dimension_numbers<[1], [0], [0], [1], [0, 0, 1, 1], [], []>} : vector<16x512xbf16>, vector<512x128xbf16>, vector<16x128xf32> -> vector<16x128xf32>
    %14 = arith.addf %10, %13 : vector<16x128xf32>
    %c0_10 = arith.constant 0 : index
    %c0_11 = arith.constant 0 : index
    %15 = vector.load %arg6[%c0_10, %c0_11] : memref<16x128xf32, #tpu.memory_space<vmem>>, vector<16x128xf32>
    tpu.vector_store %arg6[%c0_10, %c0_11], %14 {strides = array<i32>} : memref<16x128xf32, #tpu.memory_space<vmem>>, vector<16x128xf32>,
    %c0_i32_12 = arith.constant 0 : i32
    %16 = arith.cmpi eq, %arg1, %c0_i32_12 : i32
    %17 = arith.extui %16 : i1 to i32
    %c0_i32_13 = arith.constant 0 : i32
    %18 = arith.cmpi ne, %17, %c0_i32_13 : i32
    scf.if %18 {
      %c0_14 = arith.constant 0 : index
      %c0_15 = arith.constant 0 : index
      %19 = vector.load %arg6[%c0_14, %c0_15] : memref<16x128xf32, #tpu.memory_space<vmem>>, vector<16x128xf32>
      %c0_16 = arith.constant 0 : index
      %c0_17 = arith.constant 0 : index
      %20 = vector.load %arg5[%c0_16, %c0_17] : memref<16x128xf32, #tpu.memory_space<vmem>>, vector<16x128xf32>
      tpu.vector_store %arg5[%c0_16, %c0_17], %19 {strides = array<i32>} : memref<16x128xf32, #tpu.memory_space<vmem>>, vector<16x128xf32>,
    } else {
    }
    return
  }
  func.func @transform_0(%arg0: i32, %arg1: i32) -> (i32, i32) {
    %c0_i32 = arith.constant 0 : i32
    %c0_i32_0 = arith.constant 0 : i32
    return %arg0, %c0_i32 : i32, i32
  }
  func.func @transform_1(%arg0: i32, %arg1: i32) -> (i32, i32) {
    %c0_i32 = arith.constant 0 : i32
    %c0_i32_0 = arith.constant 0 : i32
    return %c0_i32, %arg1 : i32, i32
  }
  func.func @transform_2(%arg0: i32, %arg1: i32) -> (i32, i32) {
    %c0_i32 = arith.constant 0 : i32
    %c0_i32_0 = arith.constant 0 : i32
    return %arg1, %c0_i32 : i32, i32
  }
  func.func @transform_3(%arg0: i32, %arg1: i32) -> (i32, i32) {
    %c0_i32 = arith.constant 0 : i32
    %c0_i32_0 = arith.constant 0 : i32
    return %arg0, %c0_i32 : i32, i32
  }
}

module attributes {stable_mosaic.version = 11 : i64} {
  func.func @_lora_bias_kernel(%arg0: i32, %arg1: memref<16x128xbf16, #tpu.memory_space<vmem>>, %arg2: memref<128x64xbf16, #tpu.memory_space<vmem>>, %arg3: memref<64x128xbf16, #tpu.memory_space<vmem>>, %arg4: memref<1x128xf32, #tpu.memory_space<vmem>>, %arg5: memref<16x128xf32, #tpu.memory_space<vmem>>) attributes {dimension_semantics = [#tpu.dimension_semantics<parallel>], iteration_bounds = array<i64: 1>, scalar_prefetch = 0 : i64, scratch_operands = 0 : i64, tpu.core_type = #tpu.core_type<tc>, window_params = [{transform_indices = @transform_0, window_bounds = array<i64: 16, 128>}, {pipeline_mode = #tpu.pipeline_mode<synchronous>, transform_indices = @transform_1, window_bounds = array<i64: 128, 64>}, {pipeline_mode = #tpu.pipeline_mode<synchronous>, transform_indices = @transform_2, window_bounds = array<i64: 64, 128>}, {pipeline_mode = #tpu.pipeline_mode<synchronous>, transform_indices = @transform_3, window_bounds = array<i64: 1, 128>}, {transform_indices = @transform_4, window_bounds = array<i64: 16, 128>}]} {
    %c0 = arith.constant 0 : index
    %c0_0 = arith.constant 0 : index
    %0 = vector.load %arg1[%c0, %c0_0] : memref<16x128xbf16, #tpu.memory_space<vmem>>, vector<16x128xbf16>
    %c0_1 = arith.constant 0 : index
    %c0_2 = arith.constant 0 : index
    %1 = vector.load %arg2[%c0_1, %c0_2] : memref<128x64xbf16, #tpu.memory_space<vmem>>, vector<128x64xbf16>
    %cst = arith.constant dense<0.000000e+00> : vector<16x64xf32>
    %2 = tpu.matmul %0, %1, %cst {dimension_numbers = #tpu.dot_dimension_numbers<[1], [0], [0], [1], [0, 0, 1, 1], [], []>} : vector<16x128xbf16>, vector<128x64xbf16>, vector<16x64xf32> -> vector<16x64xf32>
    %3 = math.tanh %2 : vector<16x64xf32>
    %4 = arith.truncf %3 : vector<16x64xf32> to vector<16x64xbf16>
    %c0_3 = arith.constant 0 : index
    %c0_4 = arith.constant 0 : index
    %5 = vector.load %arg3[%c0_3, %c0_4] : memref<64x128xbf16, #tpu.memory_space<vmem>>, vector<64x128xbf16>
    %cst_5 = arith.constant dense<0.000000e+00> : vector<16x128xf32>
    %6 = tpu.matmul %4, %5, %cst_5 {dimension_numbers = #tpu.dot_dimension_numbers<[1], [0], [0], [1], [0, 0, 1, 1], [], []>} : vector<16x64xbf16>, vector<64x128xbf16>, vector<16x128xf32> -> vector<16x128xf32>
    %c0_6 = arith.constant 0 : index
    %c0_7 = arith.constant 0 : index
    %7 = vector.load %arg4[%c0_6, %c0_7] : memref<1x128xf32, #tpu.memory_space<vmem>>, vector<1x128xf32>
    %8 = vector.broadcast %7 : vector<1x128xf32> to vector<16x128xf32>
    %9 = arith.addf %6, %8 : vector<16x128xf32>
    %c0_8 = arith.constant 0 : index
    %c0_9 = arith.constant 0 : index
    %10 = vector.load %arg5[%c0_8, %c0_9] : memref<16x128xf32, #tpu.memory_space<vmem>>, vector<16x128xf32>
    tpu.vector_store %arg5[%c0_8, %c0_9], %9 {strides = array<i32>} : memref<16x128xf32, #tpu.memory_space<vmem>>, vector<16x128xf32>,
    return
  }
  func.func @transform_0(%arg0: i32) -> (i32, i32) {
    %c0_i32 = arith.constant 0 : i32
    %c0_i32_0 = arith.constant 0 : i32
    return %arg0, %c0_i32 : i32, i32
  }
  func.func @transform_1(%arg0: i32) -> (i32, i32) {
    %c0_i32 = arith.constant 0 : i32
    %c0_i32_0 = arith.constant 0 : i32
    %c0_i32_1 = arith.constant 0 : i32
    return %c0_i32, %c0_i32_0 : i32, i32
  }
  func.func @transform_2(%arg0: i32) -> (i32, i32) {
    %c0_i32 = arith.constant 0 : i32
    %c0_i32_0 = arith.constant 0 : i32
    %c0_i32_1 = arith.constant 0 : i32
    return %c0_i32, %c0_i32_0 : i32, i32
  }
  func.func @transform_3(%arg0: i32) -> (i32, i32) {
    %c0_i32 = arith.constant 0 : i32
    %c0_i32_0 = arith.constant 0 : i32
    %c0_i32_1 = arith.constant 0 : i32
    return %c0_i32, %c0_i32_0 : i32, i32
  }
  func.func @transform_4(%arg0: i32) -> (i32, i32) {
    %c0_i32 = arith.constant 0 : i32
    %c0_i32_0 = arith.constant 0 : i32
    return %arg0, %c0_i32 : i32, i32
  }
}

module attributes {stable_mosaic.version = 11 : i64} {
  func.func @_mm_kernel(%arg0: i32, %arg1: memref<16x128xbf16, #tpu.memory_space<vmem>>, %arg2: memref<128x128xbf16, #tpu.memory_space<vmem>>, %arg3: memref<16x128xf32, #tpu.memory_space<vmem>>) attributes {dimension_semantics = [#tpu.dimension_semantics<parallel>], iteration_bounds = array<i64: 1>, scalar_prefetch = 0 : i64, scratch_operands = 0 : i64, tpu.core_type = #tpu.core_type<tc>, window_params = [{transform_indices = @transform_0, window_bounds = array<i64: 16, 128>}, {pipeline_mode = #tpu.pipeline_mode<synchronous>, transform_indices = @transform_1, window_bounds = array<i64: 128, 128>}, {transform_indices = @transform_2, window_bounds = array<i64: 16, 128>}]} {
    %c0 = arith.constant 0 : index
    %c0_0 = arith.constant 0 : index
    %0 = vector.load %arg1[%c0, %c0_0] : memref<16x128xbf16, #tpu.memory_space<vmem>>, vector<16x128xbf16>
    %c0_1 = arith.constant 0 : index
    %c0_2 = arith.constant 0 : index
    %1 = vector.load %arg2[%c0_1, %c0_2] : memref<128x128xbf16, #tpu.memory_space<vmem>>, vector<128x128xbf16>
    %cst = arith.constant dense<0.000000e+00> : vector<16x128xf32>
    %2 = tpu.matmul %0, %1, %cst {dimension_numbers = #tpu.dot_dimension_numbers<[1], [0], [0], [1], [0, 0, 1, 1], [], []>} : vector<16x128xbf16>, vector<128x128xbf16>, vector<16x128xf32> -> vector<16x128xf32>
    %c0_3 = arith.constant 0 : index
    %c0_4 = arith.constant 0 : index
    %3 = vector.load %arg3[%c0_3, %c0_4] : memref<16x128xf32, #tpu.memory_space<vmem>>, vector<16x128xf32>
    tpu.vector_store %arg3[%c0_3, %c0_4], %2 {strides = array<i32>} : memref<16x128xf32, #tpu.memory_space<vmem>>, vector<16x128xf32>,
    return
  }
  func.func @transform_0(%arg0: i32) -> (i32, i32) {
    %c0_i32 = arith.constant 0 : i32
    %c0_i32_0 = arith.constant 0 : i32
    return %arg0, %c0_i32 : i32, i32
  }
  func.func @transform_1(%arg0: i32) -> (i32, i32) {
    %c0_i32 = arith.constant 0 : i32
    %c0_i32_0 = arith.constant 0 : i32
    %c0_i32_1 = arith.constant 0 : i32
    return %c0_i32, %c0_i32_0 : i32, i32
  }
  func.func @transform_2(%arg0: i32) -> (i32, i32) {
    %c0_i32 = arith.constant 0 : i32
    %c0_i32_0 = arith.constant 0 : i32
    return %arg0, %c0_i32 : i32, i32
  }
}

module attributes {stable_mosaic.version = 11 : i64} {
  func.func @_layernorm_kernel(%arg0: i32, %arg1: memref<16x128xf32, #tpu.memory_space<vmem>>, %arg2: memref<1x128xf32, #tpu.memory_space<vmem>>, %arg3: memref<1x128xf32, #tpu.memory_space<vmem>>, %arg4: memref<16x128xf32, #tpu.memory_space<vmem>>) attributes {dimension_semantics = [#tpu.dimension_semantics<parallel>], iteration_bounds = array<i64: 1>, scalar_prefetch = 0 : i64, scratch_operands = 0 : i64, tpu.core_type = #tpu.core_type<tc>, window_params = [{transform_indices = @transform_0, window_bounds = array<i64: 16, 128>}, {pipeline_mode = #tpu.pipeline_mode<synchronous>, transform_indices = @transform_1, window_bounds = array<i64: 1, 128>}, {pipeline_mode = #tpu.pipeline_mode<synchronous>, transform_indices = @transform_2, window_bounds = array<i64: 1, 128>}, {transform_indices = @transform_3, window_bounds = array<i64: 16, 128>}]} {
    %c0 = arith.constant 0 : index
    %c0_0 = arith.constant 0 : index
    %0 = vector.load %arg1[%c0, %c0_0] : memref<16x128xf32, #tpu.memory_space<vmem>>, vector<16x128xf32>
    %cst = arith.constant dense<0.000000e+00> : vector<16xf32>
    %1 = vector.multi_reduction <add>, %0, %cst [1] : vector<16x128xf32> to vector<16xf32>
    %2 = vector.shape_cast %1 : vector<16xf32> to vector<16x1xf32>
    %cst_1 = arith.constant 1.280000e+02 : f32
    %3 = vector.broadcast %cst_1 : f32 to vector<16x1xf32>
    %4 = arith.divf %2, %3 : vector<16x1xf32>
    %5 = vector.broadcast %4 : vector<16x1xf32> to vector<16x128xf32>
    %6 = arith.subf %0, %5 : vector<16x128xf32>
    %7 = arith.mulf %6, %6 : vector<16x128xf32>
    %cst_2 = arith.constant dense<0.000000e+00> : vector<16xf32>
    %8 = vector.multi_reduction <add>, %7, %cst_2 [1] : vector<16x128xf32> to vector<16xf32>
    %9 = vector.shape_cast %8 : vector<16xf32> to vector<16x1xf32>
    %cst_3 = arith.constant 1.280000e+02 : f32
    %10 = vector.broadcast %cst_3 : f32 to vector<16x1xf32>
    %11 = arith.divf %9, %10 : vector<16x1xf32>
    %12 = vector.broadcast %4 : vector<16x1xf32> to vector<16x128xf32>
    %13 = arith.subf %0, %12 : vector<16x128xf32>
    %cst_4 = arith.constant 9.99999974E-6 : f32
    %14 = vector.broadcast %cst_4 : f32 to vector<16x1xf32>
    %15 = arith.addf %11, %14 : vector<16x1xf32>
    %16 = math.rsqrt %15 : vector<16x1xf32>
    %17 = vector.broadcast %16 : vector<16x1xf32> to vector<16x128xf32>
    %18 = arith.mulf %13, %17 : vector<16x128xf32>
    %c0_5 = arith.constant 0 : index
    %c0_6 = arith.constant 0 : index
    %19 = vector.load %arg2[%c0_5, %c0_6] : memref<1x128xf32, #tpu.memory_space<vmem>>, vector<1x128xf32>
    %20 = vector.broadcast %19 : vector<1x128xf32> to vector<16x128xf32>
    %21 = arith.mulf %18, %20 : vector<16x128xf32>
    %c0_7 = arith.constant 0 : index
    %c0_8 = arith.constant 0 : index
    %22 = vector.load %arg3[%c0_7, %c0_8] : memref<1x128xf32, #tpu.memory_space<vmem>>, vector<1x128xf32>
    %23 = vector.broadcast %22 : vector<1x128xf32> to vector<16x128xf32>
    %24 = arith.addf %21, %23 : vector<16x128xf32>
    %c0_9 = arith.constant 0 : index
    %c0_10 = arith.constant 0 : index
    %25 = vector.load %arg4[%c0_9, %c0_10] : memref<16x128xf32, #tpu.memory_space<vmem>>, vector<16x128xf32>
    tpu.vector_store %arg4[%c0_9, %c0_10], %24 {strides = array<i32>} : memref<16x128xf32, #tpu.memory_space<vmem>>, vector<16x128xf32>,
    return
  }
  func.func @transform_0(%arg0: i32) -> (i32, i32) {
    %c0_i32 = arith.constant 0 : i32
    %c0_i32_0 = arith.constant 0 : i32
    return %arg0, %c0_i32 : i32, i32
  }
  func.func @transform_1(%arg0: i32) -> (i32, i32) {
    %c0_i32 = arith.constant 0 : i32
    %c0_i32_0 = arith.constant 0 : i32
    %c0_i32_1 = arith.constant 0 : i32
    return %c0_i32, %c0_i32_0 : i32, i32
  }
  func.func @transform_2(%arg0: i32) -> (i32, i32) {
    %c0_i32 = arith.constant 0 : i32
    %c0_i32_0 = arith.constant 0 : i32
    %c0_i32_1 = arith.constant 0 : i32
    return %c0_i32, %c0_i32_0 : i32, i32
  }
  func.func @transform_3(%arg0: i32) -> (i32, i32) {
    %c0_i32 = arith.constant 0 : i32
    %c0_i32_0 = arith.constant 0 : i32
    return %arg0, %c0_i32 : i32, i32
  }
}

</mosaic_0001>

<llo_original>
// kernel: path_rwkv_forward.25
$region0: #{path_rwkv_forward.25}
  #allocation0 [shape = 'u32[]', space=smem, size = 0x4, offset = 0x4, fixed_abs, tag = 'smem constant byte address 0x4 - core index']
  #allocation1 [shape = 'u32[72,128]{1,0:T(1,128)}', space=vmem, size = 0x9000, scoped, tag = 'internal scratch']
  %s0 = inlined_call_operand.vmem [shape: f32[16,128], index: 0, kind: input, shape index: {}]
  %s1 = inlined_call_operand.vmem [shape: f32[1,128], index: 1, kind: input, shape index: {}]
  %s2 = inlined_call_operand.vmem [shape: f32[1,128], index: 2, kind: input, shape index: {}]
  %s3 = inlined_call_operand.vmem [shape: f32[16,128], index: 3, kind: output, shape index: {}]
  %s4 = sld [smem:[#allocation0]]
  $region22: #{path_rwkv_forward.25} parent=0
    _
  %s6 = ssub.s32 1, %s4
  %s7 = scalar_select 0, %s6, %s4
  // Predicated region
  $region2: #{path_rwkv_forward.25} parent=0 // pred_check
    _
  $region3: #{path_rwkv_forward.25} parent=0 // pred_check_branch
    %9 = sbr.rel (0) target = $region5
  $region4: #{path_rwkv_forward.25} parent=0 // pred_region
    _
  $region5: #{path_rwkv_forward.25} parent=0 // pred_fallthru
    _
  // Predicated region
  $region6: #{path_rwkv_forward.25} parent=0 // pred_check
    _
  $region7: #{path_rwkv_forward.25} parent=0 // pred_check_branch
    %11 = sbr.rel (0) target = $region9
  $region8: #{path_rwkv_forward.25} parent=0 // pred_region
    _
  $region9: #{path_rwkv_forward.25} parent=0 // pred_fallthru
    _
  // Predicated region
  $region10: #{path_rwkv_forward.25} parent=0 // pred_check
    _
  $region11: #{path_rwkv_forward.25} parent=0 // pred_check_branch
    %13 = sbr.rel (0) target = $region13
  $region12: #{path_rwkv_forward.25} parent=0 // pred_region
    _
  $region13: #{path_rwkv_forward.25} parent=0 // pred_fallthru
    _
  %v14 = vld [vmem:[%s0] sm:$0xff]
  %v15 = vld [vmem:[%s0 + $0x8] sm:$0xff]
  %16 = vadd.xlane.f32.xlu0 %v14
  %v17 = vpop.xlane.xlu0 %16
  %18 = vadd.xlane.f32.xlu0 %v15
  %v19 = vpop.xlane.xlu0 %18
  %v20 = vrcp.pop 128.0
  %v21 = vmul.f32 128.0, %v20
  %v22 = vsub.f32 1.0, %v21
  %v23 = vmul.f32 %v20, %v22
  %v24 = vadd.f32 %v20, %v23
  %vm25 = vweird.f32 %v20
  %v26 = vsel %vm25, %v20, %v24
  %v27 = vmul.f32 %v17, %v26
  %v28 = vmul.f32 %v19, %v26
  %v29 = vsub.f32 %v14, %v27
  %v30 = vsub.f32 %v15, %v28
  %v31 = vmul.f32 %v29, %v29
  %v32 = vmul.f32 %v30, %v30
  %33 = vadd.xlane.f32.xlu0 %v31
  %v34 = vpop.xlane.xlu0 %33
  %35 = vadd.xlane.f32.xlu0 %v32
  %v36 = vpop.xlane.xlu0 %35
  %v37 = vmul.f32 %v34, %v26
  %v38 = vmul.f32 %v36, %v26
  %v39 = vadd.f32 %v37, 1e-05
  %v40 = vadd.f32 %v38, 1e-05
  %v41 = vrsqrt.pop %v39
  %v42 = vmul.f32 %v41, %v39
  %v43 = vmul.f32 %v42, %v41
  %v44 = vmul.f32 0.5, %v43
  %v45 = vsub.f32 1.5, %v44
  %v46 = vmul.f32 %v41, %v45
  %vm47 = vweird.f32 %v39
  %vm48 = vweird.f32 %v41
  %vm49 = vmor %vm47, %vm48
  %v50 = vsel %vm49, %v41, %v46
  %v51 = vrsqrt.pop %v40
  %v52 = vmul.f32 %v51, %v40
  %v53 = vmul.f32 %v52, %v51
  %v54 = vmul.f32 0.5, %v53
  %v55 = vsub.f32 1.5, %v54
  %v56 = vmul.f32 %v51, %v55
  %vm57 = vweird.f32 %v40
  %vm58 = vweird.f32 %v51
  %vm59 = vmor %vm57, %vm58
  %v60 = vsel %vm59, %v51, %v56
  %v61 = vmul.f32 %v29, %v50
  %v62 = vmul.f32 %v30, %v60
  %v63 = vld [vmem:[%s1] sm:$0x1]
  %v65 = vperm.slane %v63, 0
  %v67 = vmul.f32 %v61, %v65
  %v68 = vmul.f32 %v62, %v65
  %v69 = vld [vmem:[%s2] sm:$0x1]
  %v71 = vperm.slane %v69, 0
  %v73 = vadd.f32 %v67, %v71
  %v74 = vadd.f32 %v68, %v71
  %75 = vst [vmem:[%s3] sm:$0xff] %v73
  %76 = vst [vmem:[%s3 + $0x8] sm:$0xff] %v74
  // Predicated region
  $region14: #{path_rwkv_forward.25} parent=0 // pred_check
    _
  $region15: #{path_rwkv_forward.25} parent=0 // pred_check_branch
    %78 = sbr.rel (0) target = $region17
  $region16: #{path_rwkv_forward.25} parent=0 // pred_region
    _
  $region17: #{path_rwkv_forward.25} parent=0 // pred_fallthru
    _
  // Predicated region
  $region18: #{path_rwkv_forward.25} parent=0 // pred_check
    _
  $region19: #{path_rwkv_forward.25} parent=0 // pred_check_branch
    %80 = sbr.rel (0) target = $region21
  $region20: #{path_rwkv_forward.25} parent=0 // pred_region
    _
  $region21: #{path_rwkv_forward.25} parent=0 // pred_fallthru
    _

// kernel: path_rwkv_forward.26
$region0: #{path_rwkv_forward.26}
  #allocation0 [shape = 'u32[]', space=smem, size = 0x4, offset = 0x4, fixed_abs, tag = 'smem constant byte address 0x4 - core index']
  #allocation1 [shape = 'u32[72,128]{1,0:T(1,128)}', space=vmem, size = 0x9000, scoped, tag = 'internal scratch']
  %s0 = inlined_call_operand.vmem [shape: f32[16,128], index: 0, kind: input, shape index: {}]
  %s1 = inlined_call_operand.vmem [shape: f32[16,128], index: 1, kind: input, shape index: {}]
  %s2 = inlined_call_operand.vmem [shape: f32[1,128], index: 2, kind: input, shape index: {}]
  %s3 = inlined_call_operand.vmem [shape: bf16[128,160], index: 3, kind: input, shape index: {}]
  %s4 = inlined_call_operand.vmem [shape: bf16[16,160], index: 4, kind: output, shape index: {}]
  %s5 = sld [smem:[#allocation0]]
  $region26: #{path_rwkv_forward.26} parent=0
    _
  %s7 = ssub.s32 1, %s5
  %s8 = scalar_select 0, %s7, %s5
  // Predicated region
  $region2: #{path_rwkv_forward.26} parent=0 // pred_check
    _
  $region3: #{path_rwkv_forward.26} parent=0 // pred_check_branch
    %10 = sbr.rel (0) target = $region5
  $region4: #{path_rwkv_forward.26} parent=0 // pred_region
    _
  $region5: #{path_rwkv_forward.26} parent=0 // pred_fallthru
    _
  // Predicated region
  $region6: #{path_rwkv_forward.26} parent=0 // pred_check
    _
  $region7: #{path_rwkv_forward.26} parent=0 // pred_check_branch
    %12 = sbr.rel (0) target = $region9
  $region8: #{path_rwkv_forward.26} parent=0 // pred_region
    _
  $region9: #{path_rwkv_forward.26} parent=0 // pred_fallthru
    _
  // Predicated region
  $region10: #{path_rwkv_forward.26} parent=0 // pred_check
    _
  $region11: #{path_rwkv_forward.26} parent=0 // pred_check_branch
    %14 = sbr.rel (0) target = $region13
  $region12: #{path_rwkv_forward.26} parent=0 // pred_region
    _
  $region13: #{path_rwkv_forward.26} parent=0 // pred_fallthru
    _
  // Predicated region
  $region14: #{path_rwkv_forward.26} parent=0 // pred_check
    _
  $region15: #{path_rwkv_forward.26} parent=0 // pred_check_branch
    %16 = sbr.rel (0) target = $region17
  $region16: #{path_rwkv_forward.26} parent=0 // pred_region
    _
  $region17: #{path_rwkv_forward.26} parent=0 // pred_fallthru
    _
  %v17 = vld [vmem:[%s0] sm:$0xff]
  %v18 = vld [vmem:[%s0 + $0x8] sm:$0xff]
  %v19 = vld [vmem:[%s1] sm:$0xff]
  %v20 = vld [vmem:[%s1 + $0x8] sm:$0xff]
  %v21 = vld [vmem:[%s2] sm:$0x1]
  %v23 = vperm.slane %v21, 0
  %v25 = vmul.f32 %v19, %v23
  %v26 = vmul.f32 %v20, %v23
  %v27 = vadd.f32 %v17, %v25
  %v28 = vadd.f32 %v18, %v26
  %v29 = vpack.c.bf16 %v28, %v27
  %v30 = vld [vmem:[%s3] sm:$0xff]
  %v31 = vld [vmem:[%s3 + $0x8] sm:$0xff]
  %v32 = vld [vmem:[%s3 + $0x10] sm:$0xff]
  %v33 = vld [vmem:[%s3 + $0x18] sm:$0xff]
  %v34 = vld [vmem:[%s3 + $0x20] sm:$0xff]
  %v35 = vld [vmem:[%s3 + $0x28] sm:$0xff]
  %v36 = vld [vmem:[%s3 + $0x30] sm:$0xff]
  %v37 = vld [vmem:[%s3 + $0x38] sm:$0xff]
  %v38 = vld [vmem:[%s3 + $0x40] sm:$0xff]
  %v39 = vld [vmem:[%s3 + $0x48] sm:$0xff]
  %v40 = vld [vmem:[%s3 + $0x50] sm:$0xff]
  %v41 = vld [vmem:[%s3 + $0x58] sm:$0xff]
  %v42 = vld [vmem:[%s3 + $0x60] sm:$0xff]
  %v43 = vld [vmem:[%s3 + $0x68] sm:$0xff]
  %v44 = vld [vmem:[%s3 + $0x70] sm:$0xff]
  %v45 = vld [vmem:[%s3 + $0x78] sm:$0xff]
  %v62 = vunpack.c.l.b16 %v30
  %v63 = vunpack.c.h.b16 %v30
  %v64 = vunpack.c.l.b16 %v31
  %v65 = vunpack.c.h.b16 %v31
  %v66 = vunpack.c.l.b16 %v32
  %v67 = vunpack.c.h.b16 %v32
  %v68 = vunpack.c.l.b16 %v33
  %v69 = vunpack.c.h.b16 %v33
  %v70 = vunpack.c.l.b16 %v34
  %v71 = vunpack.c.h.b16 %v34
  %v72 = vunpack.c.l.b16 %v35
  %v73 = vunpack.c.h.b16 %v35
  %v74 = vunpack.c.l.b16 %v36
  %v75 = vunpack.c.h.b16 %v36
  %v76 = vunpack.c.l.b16 %v37
  %v77 = vunpack.c.h.b16 %v37
  %v78 = vunpack.c.l.b16 %v38
  %v79 = vunpack.c.h.b16 %v38
  %v80 = vunpack.c.l.b16 %v39
  %v81 = vunpack.c.h.b16 %v39
  %v82 = vunpack.c.l.b16 %v40
  %v83 = vunpack.c.h.b16 %v40
  %v84 = vunpack.c.l.b16 %v41
  %v85 = vunpack.c.h.b16 %v41
  %v86 = vunpack.c.l.b16 %v42
  %v87 = vunpack.c.h.b16 %v42
  %v88 = vunpack.c.l.b16 %v43
  %v89 = vunpack.c.h.b16 %v43
  %v90 = vunpack.c.l.b16 %v44
  %v91 = vunpack.c.h.b16 %v44
  %v92 = vunpack.c.l.b16 %v45
  %v93 = vunpack.c.h.b16 %v45
  %v94 = vpack.c.b16 %v64, %v62
  %v95 = vpack.c.b16 %v65, %v63
  %v96 = vpack.c.b16 %v68, %v66
  %v97 = vpack.c.b16 %v69, %v67
  %v98 = vpack.c.b16 %v72, %v70
  %v99 = vpack.c.b16 %v73, %v71
  %v100 = vpack.c.b16 %v76, %v74
  %v101 = vpack.c.b16 %v77, %v75
  %v102 = vpack.c.b16 %v80, %v78
  %v103 = vpack.c.b16 %v81, %v79
  %v104 = vpack.c.b16 %v84, %v82
  %v105 = vpack.c.b16 %v85, %v83
  %v106 = vpack.c.b16 %v88, %v86
  %v107 = vpack.c.b16 %v89, %v87
  %v108 = vpack.c.b16 %v92, %v90
  %v109 = vpack.c.b16 %v93, %v91
  %126 = vmatpush.bf16.msra.mxu0 %v108
  %127 = vmatpush.bf16.msra.mxu0 %v106
  %128 = vmatpush.bf16.msra.mxu0 %v104
  %129 = vmatpush.bf16.msra.mxu0 %v102
  %130 = vmatpush.bf16.msra.mxu0 %v100
  %131 = vmatpush.bf16.msra.mxu0 %v98
  %132 = vmatpush.bf16.msra.mxu0 %v96
  %133 = vmatpush.bf16.msra.mxu0 %v94
  %134 = vmatmul.bf16.gmra.mxu0 %v29
  %v135 = vpop.f32.mrf.mxu0
  %v136 = vadd.f32 0.0, %v135
  %v137 = vpop.f32.mrf.mxu0
  %v138 = vadd.f32 0.0, %v137
  %139 = vdwg.mxu0
  %140 = vmatpush.bf16.msra.mxu0 %v109
  %141 = vmatpush.bf16.msra.mxu0 %v107
  %142 = vmatpush.bf16.msra.mxu0 %v105
  %143 = vmatpush.bf16.msra.mxu0 %v103
  %144 = vmatpush.bf16.msra.mxu0 %v101
  %145 = vmatpush.bf16.msra.mxu0 %v99
  %146 = vmatpush.bf16.msra.mxu0 %v97
  %147 = vmatpush.bf16.msra.mxu0 %v95
  %148 = vmatmul.bf16.gmra.mxu0 %v29
  %v149 = vpop.f32.mrf.mxu0
  %v150 = vadd.f32 0.0, %v149
  %v151 = vpop.f32.mrf.mxu0
  %v152 = vadd.f32 0.0, %v151
  %153 = vdwg.mxu0
  %v154 = vtanh.pop %v136
  %v155 = vtanh.pop %v150
  %v156 = vtanh.pop %v138
  %v157 = vtanh.pop %v152
  %v158 = vpack.c.bf16 %v155, %v154
  %v159 = vpack.c.bf16 %v157, %v156
  %vm160 = vcmask 1043456
  %vm161 = vcmask 261124
  %vm162 = vmor %vm161, %vm160
  %163 = vst.msk [vmem:[%s4] sm:$0xff] %vm162, %v158
  %164 = vst.msk [vmem:[%s4 + $0x8] sm:$0xff] %vm162, %v159
  // Predicated region
  $region18: #{path_rwkv_forward.26} parent=0 // pred_check
    _
  $region19: #{path_rwkv_forward.26} parent=0 // pred_check_branch
    %166 = sbr.rel (0) target = $region21
  $region20: #{path_rwkv_forward.26} parent=0 // pred_region
    _
  $region21: #{path_rwkv_forward.26} parent=0 // pred_fallthru
    _
  // Predicated region
  $region22: #{path_rwkv_forward.26} parent=0 // pred_check
    _
  $region23: #{path_rwkv_forward.26} parent=0 // pred_check_branch
    %168 = sbr.rel (0) target = $region25
  $region24: #{path_rwkv_forward.26} parent=0 // pred_region
    _
  $region25: #{path_rwkv_forward.26} parent=0 // pred_fallthru
    _

// kernel: path_rwkv_forward.28
$region0: #{path_rwkv_forward.28}
  #allocation0 [shape = 'u32[]', space=smem, size = 0x4, offset = 0x4, fixed_abs, tag = 'smem constant byte address 0x4 - core index']
  #allocation1 [shape = 'u32[72,128]{1,0:T(1,128)}', space=vmem, size = 0x9000, scoped, tag = 'internal scratch']
  %s0 = inlined_call_operand.vmem [shape: bf16[16,128], index: 0, kind: input, shape index: {}]
  %s1 = inlined_call_operand.vmem [shape: bf16[128,64], index: 1, kind: input, shape index: {}]
  %s2 = inlined_call_operand.vmem [shape: bf16[64,128], index: 2, kind: input, shape index: {}]
  %s3 = inlined_call_operand.vmem [shape: f32[1,128], index: 3, kind: input, shape index: {}]
  %s4 = inlined_call_operand.vmem [shape: f32[16,128], index: 4, kind: output, shape index: {}]
  %s5 = sld [smem:[#allocation0]]
  $region26: #{path_rwkv_forward.28} parent=0
    _
  %s7 = ssub.s32 1, %s5
  %s8 = scalar_select 0, %s7, %s5
  // Predicated region
  $region2: #{path_rwkv_forward.28} parent=0 // pred_check
    _
  $region3: #{path_rwkv_forward.28} parent=0 // pred_check_branch
    %10 = sbr.rel (0) target = $region5
  $region4: #{path_rwkv_forward.28} parent=0 // pred_region
    _
  $region5: #{path_rwkv_forward.28} parent=0 // pred_fallthru
    _
  // Predicated region
  $region6: #{path_rwkv_forward.28} parent=0 // pred_check
    _
  $region7: #{path_rwkv_forward.28} parent=0 // pred_check_branch
    %12 = sbr.rel (0) target = $region9
  $region8: #{path_rwkv_forward.28} parent=0 // pred_region
    _
  $region9: #{path_rwkv_forward.28} parent=0 // pred_fallthru
    _
  // Predicated region
  $region10: #{path_rwkv_forward.28} parent=0 // pred_check
    _
  $region11: #{path_rwkv_forward.28} parent=0 // pred_check_branch
    %14 = sbr.rel (0) target = $region13
  $region12: #{path_rwkv_forward.28} parent=0 // pred_region
    _
  $region13: #{path_rwkv_forward.28} parent=0 // pred_fallthru
    _
  // Predicated region
  $region14: #{path_rwkv_forward.28} parent=0 // pred_check
    _
  $region15: #{path_rwkv_forward.28} parent=0 // pred_check_branch
    %16 = sbr.rel (0) target = $region17
  $region16: #{path_rwkv_forward.28} parent=0 // pred_region
    _
  $region17: #{path_rwkv_forward.28} parent=0 // pred_fallthru
    _
  %v18 = vld [vmem:[%s0] sm:$0xf]
  %v19 = vld [vmem:[%s0 + $0x4] sm:$0xf]
  %v20 = vld [vmem:[%s1] sm:$0xf]
  %v21 = vld [vmem:[%s1 + $0x4] sm:$0xf]
  %v22 = vld [vmem:[%s1 + $0x8] sm:$0xf]
  %v23 = vld [vmem:[%s1 + $0xc] sm:$0xf]
  %v24 = vld [vmem:[%s1 + $0x10] sm:$0xf]
  %v25 = vld [vmem:[%s1 + $0x14] sm:$0xf]
  %v26 = vld [vmem:[%s1 + $0x18] sm:$0xf]
  %v27 = vld [vmem:[%s1 + $0x1c] sm:$0xf]
  %v28 = vld [vmem:[%s1 + $0x20] sm:$0xf]
  %v29 = vld [vmem:[%s1 + $0x24] sm:$0xf]
  %v30 = vld [vmem:[%s1 + $0x28] sm:$0xf]
  %v31 = vld [vmem:[%s1 + $0x2c] sm:$0xf]
  %v32 = vld [vmem:[%s1 + $0x30] sm:$0xf]
  %v33 = vld [vmem:[%s1 + $0x34] sm:$0xf]
  %v34 = vld [vmem:[%s1 + $0x38] sm:$0xf]
  %v35 = vld [vmem:[%s1 + $0x3c] sm:$0xf]
  %v38 = vunpack.c.l.b16 %v18
  %v39 = vunpack.c.l.b16 %v19
  %v40 = vpack.c.b16 %v39, %v38
  %v58 = vunpack.c.l.b16 %v20
  %v59 = vunpack.c.l.b16 %v21
  %v60 = vunpack.c.l.b16 %v22
  %v61 = vunpack.c.l.b16 %v23
  %v62 = vunpack.c.l.b16 %v24
  %v63 = vunpack.c.l.b16 %v25
  %v64 = vunpack.c.l.b16 %v26
  %v65 = vunpack.c.l.b16 %v27
  %v66 = vunpack.c.l.b16 %v28
  %v67 = vunpack.c.l.b16 %v29
  %v68 = vunpack.c.l.b16 %v30
  %v69 = vunpack.c.l.b16 %v31
  %v70 = vunpack.c.l.b16 %v32
  %v71 = vunpack.c.l.b16 %v33
  %v72 = vunpack.c.l.b16 %v34
  %v73 = vunpack.c.l.b16 %v35
  %v74 = vpack.c.b16 %v59, %v58
  %v75 = vpack.c.b16 %v61, %v60
  %v76 = vpack.c.b16 %v63, %v62
  %v77 = vpack.c.b16 %v65, %v64
  %v78 = vpack.c.b16 %v67, %v66
  %v79 = vpack.c.b16 %v69, %v68
  %v80 = vpack.c.b16 %v71, %v70
  %v81 = vpack.c.b16 %v73, %v72
  %90 = vmatpush.bf16.msra.mxu0 %v81
  %91 = vmatpush.bf16.msra.mxu0 %v80
  %92 = vmatpush.bf16.msra.mxu0 %v79
  %93 = vmatpush.bf16.msra.mxu0 %v78
  %94 = vmatpush.bf16.msra.mxu0 %v77
  %95 = vmatpush.bf16.msra.mxu0 %v76
  %96 = vmatpush.bf16.msra.mxu0 %v75
  %97 = vmatpush.bf16.msra.mxu0 %v74
  %98 = vmatmul.bf16.gmra.mxu0 %v40
  %v99 = vpop.f32.mrf.mxu0
  %v100 = vadd.f32 0.0, %v99
  %v101 = vpop.f32.mrf.mxu0
  %v102 = vadd.f32 0.0, %v101
  %103 = vdwg.mxu0
  %v104 = vtanh.pop %v100
  %v105 = vtanh.pop %v102
  %v106 = vpack.c.bf16 %v105, %v104
  %v107 = vld [vmem:[%s2] sm:$0xf]
  %v108 = vld [vmem:[%s2 + $0x4] sm:$0xf]
  %v109 = vld [vmem:[%s2 + $0x8] sm:$0xf]
  %v110 = vld [vmem:[%s2 + $0xc] sm:$0xf]
  %v111 = vld [vmem:[%s2 + $0x10] sm:$0xf]
  %v112 = vld [vmem:[%s2 + $0x14] sm:$0xf]
  %v113 = vld [vmem:[%s2 + $0x18] sm:$0xf]
  %v114 = vld [vmem:[%s2 + $0x1c] sm:$0xf]
  %v115 = vld [vmem:[%s3] sm:$0x1]
  %v117 = vperm.slane %v115, 0
  %v127 = vunpack.c.l.b16 %v107
  %v128 = vunpack.c.l.b16 %v108
  %v129 = vunpack.c.l.b16 %v109
  %v130 = vunpack.c.l.b16 %v110
  %v131 = vunpack.c.l.b16 %v111
  %v132 = vunpack.c.l.b16 %v112
  %v133 = vunpack.c.l.b16 %v113
  %v134 = vunpack.c.l.b16 %v114
  %v135 = vpack.c.b16 %v128, %v127
  %v136 = vpack.c.b16 %v130, %v129
  %v137 = vpack.c.b16 %v132, %v131
  %v138 = vpack.c.b16 %v134, %v133
  %vm143 = vcmask 523264
  %v145 = vsel %vm143, %v106, 0
  %147 = vmatpush.bf16.msra.mxu0 0
  %148 = vmatpush.bf16.msra.mxu0 0
  %149 = vmatpush.bf16.msra.mxu0 0
  %150 = vmatpush.bf16.msra.mxu0 0
  %151 = vmatpush.bf16.msra.mxu0 %v138
  %152 = vmatpush.bf16.msra.mxu0 %v137
  %153 = vmatpush.bf16.msra.mxu0 %v136
  %154 = vmatpush.bf16.msra.mxu0 %v135
  %155 = vmatmul.bf16.gmra.mxu0 %v145
  %v156 = vpop.f32.mrf.mxu0
  %v157 = vadd.f32 %v117, %v156
  %v158 = vpop.f32.mrf.mxu0
  %v159 = vadd.f32 %v117, %v158
  %160 = vdwg.mxu0
  %161 = vst [vmem:[%s4] sm:$0xff] %v157
  %162 = vst [vmem:[%s4 + $0x8] sm:$0xff] %v159
  // Predicated region
  $region18: #{path_rwkv_forward.28} parent=0 // pred_check
    _
  $region19: #{path_rwkv_forward.28} parent=0 // pred_check_branch
    %164 = sbr.rel (0) target = $region21
  $region20: #{path_rwkv_forward.28} parent=0 // pred_region
    _
  $region21: #{path_rwkv_forward.28} parent=0 // pred_fallthru
    _
  // Predicated region
  $region22: #{path_rwkv_forward.28} parent=0 // pred_check
    _
  $region23: #{path_rwkv_forward.28} parent=0 // pred_check_branch
    %166 = sbr.rel (0) target = $region25
  $region24: #{path_rwkv_forward.28} parent=0 // pred_region
    _
  $region25: #{path_rwkv_forward.28} parent=0 // pred_fallthru
    _

// kernel: path_rwkv_forward.27
$region0: #{path_rwkv_forward.27}
  #allocation0 [shape = 'u32[]', space=smem, size = 0x4, offset = 0x4, fixed_abs, tag = 'smem constant byte address 0x4 - core index']
  #allocation1 [shape = 'u32[72,128]{1,0:T(1,128)}', space=vmem, size = 0x9000, scoped, tag = 'internal scratch']
  %s0 = inlined_call_operand.vmem [shape: bf16[5,16,32], index: 0, kind: input, shape index: {}]
  %s1 = inlined_call_operand.vmem [shape: f32[16,128], index: 1, kind: input, shape index: {}]
  %s2 = inlined_call_operand.vmem [shape: f32[16,128], index: 2, kind: input, shape index: {}]
  %s3 = inlined_call_operand.vmem [shape: bf16[5,32,128], index: 3, kind: input, shape index: {}]
  %s4 = inlined_call_operand.vmem [shape: f32[5,1,128], index: 4, kind: input, shape index: {}]
  %s5 = inlined_call_operand.vmem [shape: bf16[5,16,128], index: 5, kind: output, shape index: {}]
  %s6 = sld [smem:[#allocation0]]
  $region30: #{path_rwkv_forward.27} parent=0
    _
  %s8 = ssub.s32 1, %s6
  %s9 = scalar_select 0, %s8, %s6
  // Predicated region
  $region2: #{path_rwkv_forward.27} parent=0 // pred_check
    _
  $region3: #{path_rwkv_forward.27} parent=0 // pred_check_branch
    %11 = sbr.rel (0) target = $region5
  $region4: #{path_rwkv_forward.27} parent=0 // pred_region
    _
  $region5: #{path_rwkv_forward.27} parent=0 // pred_fallthru
    _
  // Predicated region
  $region6: #{path_rwkv_forward.27} parent=0 // pred_check
    _
  $region7: #{path_rwkv_forward.27} parent=0 // pred_check_branch
    %13 = sbr.rel (0) target = $region9
  $region8: #{path_rwkv_forward.27} parent=0 // pred_region
    _
  $region9: #{path_rwkv_forward.27} parent=0 // pred_fallthru
    _
  // Predicated region
  $region10: #{path_rwkv_forward.27} parent=0 // pred_check
    _
  $region11: #{path_rwkv_forward.27} parent=0 // pred_check_branch
    %15 = sbr.rel (0) target = $region13
  $region12: #{path_rwkv_forward.27} parent=0 // pred_region
    _
  $region13: #{path_rwkv_forward.27} parent=0 // pred_fallthru
    _
  // Predicated region
  $region14: #{path_rwkv_forward.27} parent=0 // pred_check
    _
  $region15: #{path_rwkv_forward.27} parent=0 // pred_check_branch
    %17 = sbr.rel (0) target = $region17
  $region16: #{path_rwkv_forward.27} parent=0 // pred_region
    _
  $region17: #{path_rwkv_forward.27} parent=0 // pred_fallthru
    _
  // Predicated region
  $region18: #{path_rwkv_forward.27} parent=0 // pred_check
    _
  $region19: #{path_rwkv_forward.27} parent=0 // pred_check_branch
    %19 = sbr.rel (0) target = $region21
  $region20: #{path_rwkv_forward.27} parent=0 // pred_region
    _
  $region21: #{path_rwkv_forward.27} parent=0 // pred_fallthru
    _
  %v21 = vld [vmem:[%s1] sm:$0xff]
  %v22 = vld [vmem:[%s1 + $0x8] sm:$0xff]
  %v23 = vld [vmem:[%s2] sm:$0xff]
  %v24 = vld [vmem:[%s2 + $0x8] sm:$0xff]
  %v25 = vld [vmem:[%s0] sm:$0xf]
  %v26 = vld [vmem:[%s0 + $0x4] sm:$0xf]
  %v27 = vld [vmem:[%s3] sm:$0xf]
  %v28 = vld [vmem:[%s3 + $0x4] sm:$0xf]
  %v29 = vld [vmem:[%s3 + $0x8] sm:$0xf]
  %v30 = vld [vmem:[%s3 + $0xc] sm:$0xf]
  %v33 = vunpack.c.l.b16 %v25
  %v34 = vunpack.c.l.b16 %v26
  %v35 = vpack.c.b16 %v34, %v33
  %v40 = vunpack.c.l.b16 %v27
  %v41 = vunpack.c.l.b16 %v28
  %v42 = vunpack.c.l.b16 %v29
  %v43 = vunpack.c.l.b16 %v30
  %v44 = vpack.c.b16 %v41, %v40
  %v45 = vpack.c.b16 %v43, %v42
  %vm48 = vcmask 261120
  %v50 = vsel %vm48, %v35, 0
  %52 = vmatpush.bf16.msra.mxu0 0
  %53 = vmatpush.bf16.msra.mxu0 0
  %54 = vmatpush.bf16.msra.mxu0 0
  %55 = vmatpush.bf16.msra.mxu0 0
  %56 = vmatpush.bf16.msra.mxu0 0
  %57 = vmatpush.bf16.msra.mxu0 0
  %58 = vmatpush.bf16.msra.mxu0 %v45
  %59 = vmatpush.bf16.msra.mxu0 %v44
  %60 = vmatmul.bf16.gmra.mxu0 %v50
  %v61 = vpop.f32.mrf.mxu0
  %v62 = vadd.f32 0.0, %v61
  %v63 = vpop.f32.mrf.mxu0
  %v64 = vadd.f32 0.0, %v63
  %65 = vdwg.mxu0
  %v66 = vld [vmem:[%s4] sm:$0x1]
  %v68 = vperm.slane %v66, 0
  %v70 = vadd.f32 %v68, %v62
  %v71 = vadd.f32 %v68, %v64
  %v72 = vmul.f32 %v23, %v70
  %v73 = vmul.f32 %v24, %v71
  %v74 = vadd.f32 %v21, %v72
  %v75 = vadd.f32 %v22, %v73
  %v76 = vpack.c.bf16 %v74, %v74
  %v77 = vpack.c.bf16 %v75, %v75
  %78 = vst [vmem:[%s5] sm:$0xf] %v76
  %79 = vst [vmem:[%s5 + $0x4] sm:$0xf] %v77
  %s80 = scalar_lea.vmem %s0, 8
  %v81 = vld [vmem:[%s80] sm:$0xf]
  %v82 = vld [vmem:[%s80 + $0x4] sm:$0xf]
  %s83 = scalar_lea.vmem %s3, 16
  %v84 = vld [vmem:[%s83] sm:$0xf]
  %v85 = vld [vmem:[%s83 + $0x4] sm:$0xf]
  %v86 = vld [vmem:[%s83 + $0x8] sm:$0xf]
  %v87 = vld [vmem:[%s83 + $0xc] sm:$0xf]
  %v90 = vunpack.c.l.b16 %v81
  %v91 = vunpack.c.l.b16 %v82
  %v92 = vpack.c.b16 %v91, %v90
  %v97 = vunpack.c.l.b16 %v84
  %v98 = vunpack.c.l.b16 %v85
  %v99 = vunpack.c.l.b16 %v86
  %v100 = vunpack.c.l.b16 %v87
  %v101 = vpack.c.b16 %v98, %v97
  %v102 = vpack.c.b16 %v100, %v99
  %v106 = vsel %vm48, %v92, 0
  %108 = vmatpush.bf16.msra.mxu0 0
  %109 = vmatpush.bf16.msra.mxu0 0
  %110 = vmatpush.bf16.msra.mxu0 0
  %111 = vmatpush.bf16.msra.mxu0 0
  %112 = vmatpush.bf16.msra.mxu0 0
  %113 = vmatpush.bf16.msra.mxu0 0
  %114 = vmatpush.bf16.msra.mxu0 %v102
  %115 = vmatpush.bf16.msra.mxu0 %v101
  %116 = vmatmul.bf16.gmra.mxu0 %v106
  %v117 = vpop.f32.mrf.mxu0
  %v118 = vadd.f32 0.0, %v117
  %v119 = vpop.f32.mrf.mxu0
  %v120 = vadd.f32 0.0, %v119
  %121 = vdwg.mxu0
  %s122 = scalar_lea.vmem %s4, 1
  %v123 = vld [vmem:[%s122] sm:$0x1]
  %v125 = vperm.slane %v123, 0
  %v127 = vadd.f32 %v125, %v118
  %v128 = vadd.f32 %v125, %v120
  %v129 = vmul.f32 %v23, %v127
  %v130 = vmul.f32 %v24, %v128
  %v131 = vadd.f32 %v21, %v129
  %v132 = vadd.f32 %v22, %v130
  %v133 = vpack.c.bf16 %v131, %v131
  %v134 = vpack.c.bf16 %v132, %v132
  %s135 = scalar_lea.vmem %s5, 8
  %136 = vst [vmem:[%s135] sm:$0xf] %v133
  %137 = vst [vmem:[%s135 + $0x4] sm:$0xf] %v134
  %s138 = scalar_lea.vmem %s0, 16
  %v139 = vld [vmem:[%s138] sm:$0xf]
  %v140 = vld [vmem:[%s138 + $0x4] sm:$0xf]
  %s141 = scalar_lea.vmem %s3, 32
  %v142 = vld [vmem:[%s141] sm:$0xf]
  %v143 = vld [vmem:[%s141 + $0x4] sm:$0xf]
  %v144 = vld [vmem:[%s141 + $0x8] sm:$0xf]
  %v145 = vld [vmem:[%s141 + $0xc] sm:$0xf]
  %v148 = vunpack.c.l.b16 %v139
  %v149 = vunpack.c.l.b16 %v140
  %v150 = vpack.c.b16 %v149, %v148
  %v155 = vunpack.c.l.b16 %v142
  %v156 = vunpack.c.l.b16 %v143
  %v157 = vunpack.c.l.b16 %v144
  %v158 = vunpack.c.l.b16 %v145
  %v159 = vpack.c.b16 %v156, %v155
  %v160 = vpack.c.b16 %v158, %v157
  %v164 = vsel %vm48, %v150, 0
  %166 = vmatpush.bf16.msra.mxu0 0
  %167 = vmatpush.bf16.msra.mxu0 0
  %168 = vmatpush.bf16.msra.mxu0 0
  %169 = vmatpush.bf16.msra.mxu0 0
  %170 = vmatpush.bf16.msra.mxu0 0
  %171 = vmatpush.bf16.msra.mxu0 0
  %172 = vmatpush.bf16.msra.mxu0 %v160
  %173 = vmatpush.bf16.msra.mxu0 %v159
  %174 = vmatmul.bf16.gmra.mxu0 %v164
  %v175 = vpop.f32.mrf.mxu0
  %v176 = vadd.f32 0.0, %v175
  %v177 = vpop.f32.mrf.mxu0
  %v178 = vadd.f32 0.0, %v177
  %179 = vdwg.mxu0
  %s180 = scalar_lea.vmem %s4, 2
  %v181 = vld [vmem:[%s180] sm:$0x1]
  %v183 = vperm.slane %v181, 0
  %v185 = vadd.f32 %v183, %v176
  %v186 = vadd.f32 %v183, %v178
  %v187 = vmul.f32 %v23, %v185
  %v188 = vmul.f32 %v24, %v186
  %v189 = vadd.f32 %v21, %v187
  %v190 = vadd.f32 %v22, %v188
  %v191 = vpack.c.bf16 %v189, %v189
  %v192 = vpack.c.bf16 %v190, %v190
  %s193 = scalar_lea.vmem %s5, 16
  %194 = vst [vmem:[%s193] sm:$0xf] %v191
  %195 = vst [vmem:[%s193 + $0x4] sm:$0xf] %v192
  %s196 = scalar_lea.vmem %s0, 24
  %v197 = vld [vmem:[%s196] sm:$0xf]
  %v198 = vld [vmem:[%s196 + $0x4] sm:$0xf]
  %s199 = scalar_lea.vmem %s3, 48
  %v200 = vld [vmem:[%s199] sm:$0xf]
  %v201 = vld [vmem:[%s199 + $0x4] sm:$0xf]
  %v202 = vld [vmem:[%s199 + $0x8] sm:$0xf]
  %v203 = vld [vmem:[%s199 + $0xc] sm:$0xf]
  %v206 = vunpack.c.l.b16 %v197
  %v207 = vunpack.c.l.b16 %v198
  %v208 = vpack.c.b16 %v207, %v206
  %v213 = vunpack.c.l.b16 %v200
  %v214 = vunpack.c.l.b16 %v201
  %v215 = vunpack.c.l.b16 %v202
  %v216 = vunpack.c.l.b16 %v203
  %v217 = vpack.c.b16 %v214, %v213
  %v218 = vpack.c.b16 %v216, %v215
  %v222 = vsel %vm48, %v208, 0
  %224 = vmatpush.bf16.msra.mxu0 0
  %225 = vmatpush.bf16.msra.mxu0 0
  %226 = vmatpush.bf16.msra.mxu0 0
  %227 = vmatpush.bf16.msra.mxu0 0
  %228 = vmatpush.bf16.msra.mxu0 0
  %229 = vmatpush.bf16.msra.mxu0 0
  %230 = vmatpush.bf16.msra.mxu0 %v218
  %231 = vmatpush.bf16.msra.mxu0 %v217
  %232 = vmatmul.bf16.gmra.mxu0 %v222
  %v233 = vpop.f32.mrf.mxu0
  %v234 = vadd.f32 0.0, %v233
  %v235 = vpop.f32.mrf.mxu0
  %v236 = vadd.f32 0.0, %v235
  %237 = vdwg.mxu0
  %s238 = scalar_lea.vmem %s4, 3
  %v239 = vld [vmem:[%s238] sm:$0x1]
  %v241 = vperm.slane %v239, 0
  %v243 = vadd.f32 %v241, %v234
  %v244 = vadd.f32 %v241, %v236
  %v245 = vmul.f32 %v23, %v243
  %v246 = vmul.f32 %v24, %v244
  %v247 = vadd.f32 %v21, %v245
  %v248 = vadd.f32 %v22, %v246
  %v249 = vpack.c.bf16 %v247, %v247
  %v250 = vpack.c.bf16 %v248, %v248
  %s251 = scalar_lea.vmem %s5, 24
  %252 = vst [vmem:[%s251] sm:$0xf] %v249
  %253 = vst [vmem:[%s251 + $0x4] sm:$0xf] %v250
  %s254 = scalar_lea.vmem %s0, 32
  %v255 = vld [vmem:[%s254] sm:$0xf]
  %v256 = vld [vmem:[%s254 + $0x4] sm:$0xf]
  %s257 = scalar_lea.vmem %s3, 64
  %v258 = vld [vmem:[%s257] sm:$0xf]
  %v259 = vld [vmem:[%s257 + $0x4] sm:$0xf]
  %v260 = vld [vmem:[%s257 + $0x8] sm:$0xf]
  %v261 = vld [vmem:[%s257 + $0xc] sm:$0xf]
  %v264 = vunpack.c.l.b16 %v255
  %v265 = vunpack.c.l.b16 %v256
  %v266 = vpack.c.b16 %v265, %v264
  %v271 = vunpack.c.l.b16 %v258
  %v272 = vunpack.c.l.b16 %v259
  %v273 = vunpack.c.l.b16 %v260
  %v274 = vunpack.c.l.b16 %v261
  %v275 = vpack.c.b16 %v272, %v271
  %v276 = vpack.c.b16 %v274, %v273
  %v280 = vsel %vm48, %v266, 0
  %282 = vmatpush.bf16.msra.mxu0 0
  %283 = vmatpush.bf16.msra.mxu0 0
  %284 = vmatpush.bf16.msra.mxu0 0
  %285 = vmatpush.bf16.msra.mxu0 0
  %286 = vmatpush.bf16.msra.mxu0 0
  %287 = vmatpush.bf16.msra.mxu0 0
  %288 = vmatpush.bf16.msra.mxu0 %v276
  %289 = vmatpush.bf16.msra.mxu0 %v275
  %290 = vmatmul.bf16.gmra.mxu0 %v280
  %v291 = vpop.f32.mrf.mxu0
  %v292 = vadd.f32 0.0, %v291
  %v293 = vpop.f32.mrf.mxu0
  %v294 = vadd.f32 0.0, %v293
  %295 = vdwg.mxu0
  %s296 = scalar_lea.vmem %s4, 4
  %v297 = vld [vmem:[%s296] sm:$0x1]
  %v299 = vperm.slane %v297, 0
  %v301 = vadd.f32 %v299, %v292
  %v302 = vadd.f32 %v299, %v294
  %v303 = vmul.f32 %v23, %v301
  %v304 = vmul.f32 %v24, %v302
  %v305 = vadd.f32 %v21, %v303
  %v306 = vadd.f32 %v22, %v304
  %v307 = vpack.c.bf16 %v305, %v305
  %v308 = vpack.c.bf16 %v306, %v306
  %s309 = scalar_lea.vmem %s5, 32
  %310 = vst [vmem:[%s309] sm:$0xf] %v307
  %311 = vst [vmem:[%s309 + $0x4] sm:$0xf] %v308
  // Predicated region
  $region22: #{path_rwkv_forward.27} parent=0 // pred_check
    _
  $region23: #{path_rwkv_forward.27} parent=0 // pred_check_branch
    %313 = sbr.rel (0) target = $region25
  $region24: #{path_rwkv_forward.27} parent=0 // pred_region
    _
  $region25: #{path_rwkv_forward.27} parent=0 // pred_fallthru
    _
  // Predicated region
  $region26: #{path_rwkv_forward.27} parent=0 // pred_check
    _
  $region27: #{path_rwkv_forward.27} parent=0 // pred_check_branch
    %315 = sbr.rel (0) target = $region29
  $region28: #{path_rwkv_forward.27} parent=0 // pred_region
    _
  $region29: #{path_rwkv_forward.27} parent=0 // pred_fallthru
    _

// kernel: path_rwkv_forward.30
$region0: #{path_rwkv_forward.30}
  #allocation0 [shape = 'u32[]', space=smem, size = 0x4, offset = 0x4, fixed_abs, tag = 'smem constant byte address 0x4 - core index']
  #allocation1 [shape = 'u32[72,128]{1,0:T(1,128)}', space=vmem, size = 0x9000, scoped, tag = 'internal scratch']
  %s0 = inlined_call_operand.vmem [shape: bf16[16,128], index: 0, kind: input, shape index: {}]
  %s1 = inlined_call_operand.vmem [shape: bf16[128,128], index: 1, kind: input, shape index: {}]
  %s2 = inlined_call_operand.vmem [shape: f32[16,128], index: 2, kind: output, shape index: {}]
  %s3 = sld [smem:[#allocation0]]
  $region18: #{path_rwkv_forward.30} parent=0
    _
  %s5 = ssub.s32 1, %s3
  %s6 = scalar_select 0, %s5, %s3
  // Predicated region
  $region2: #{path_rwkv_forward.30} parent=0 // pred_check
    _
  $region3: #{path_rwkv_forward.30} parent=0 // pred_check_branch
    %8 = sbr.rel (0) target = $region5
  $region4: #{path_rwkv_forward.30} parent=0 // pred_region
    _
  $region5: #{path_rwkv_forward.30} parent=0 // pred_fallthru
    _
  // Predicated region
  $region6: #{path_rwkv_forward.30} parent=0 // pred_check
    _
  $region7: #{path_rwkv_forward.30} parent=0 // pred_check_branch
    %10 = sbr.rel (0) target = $region9
  $region8: #{path_rwkv_forward.30} parent=0 // pred_region
    _
  $region9: #{path_rwkv_forward.30} parent=0 // pred_fallthru
    _
  %v11 = vld [vmem:[%s0] sm:$0xf]
  %v12 = vld [vmem:[%s0 + $0x4] sm:$0xf]
  %v13 = vld [vmem:[%s1] sm:$0xf]
  %v14 = vld [vmem:[%s1 + $0x4] sm:$0xf]
  %v15 = vld [vmem:[%s1 + $0x8] sm:$0xf]
  %v16 = vld [vmem:[%s1 + $0xc] sm:$0xf]
  %v17 = vld [vmem:[%s1 + $0x10] sm:$0xf]
  %v18 = vld [vmem:[%s1 + $0x14] sm:$0xf]
  %v19 = vld [vmem:[%s1 + $0x18] sm:$0xf]
  %v20 = vld [vmem:[%s1 + $0x1c] sm:$0xf]
  %v21 = vld [vmem:[%s1 + $0x20] sm:$0xf]
  %v22 = vld [vmem:[%s1 + $0x24] sm:$0xf]
  %v23 = vld [vmem:[%s1 + $0x28] sm:$0xf]
  %v24 = vld [vmem:[%s1 + $0x2c] sm:$0xf]
  %v25 = vld [vmem:[%s1 + $0x30] sm:$0xf]
  %v26 = vld [vmem:[%s1 + $0x34] sm:$0xf]
  %v27 = vld [vmem:[%s1 + $0x38] sm:$0xf]
  %v28 = vld [vmem:[%s1 + $0x3c] sm:$0xf]
  %v31 = vunpack.c.l.b16 %v11
  %v32 = vunpack.c.l.b16 %v12
  %v33 = vpack.c.b16 %v32, %v31
  %v51 = vunpack.c.l.b16 %v13
  %v52 = vunpack.c.l.b16 %v14
  %v53 = vunpack.c.l.b16 %v15
  %v54 = vunpack.c.l.b16 %v16
  %v55 = vunpack.c.l.b16 %v17
  %v56 = vunpack.c.l.b16 %v18
  %v57 = vunpack.c.l.b16 %v19
  %v58 = vunpack.c.l.b16 %v20
  %v59 = vunpack.c.l.b16 %v21
  %v60 = vunpack.c.l.b16 %v22
  %v61 = vunpack.c.l.b16 %v23
  %v62 = vunpack.c.l.b16 %v24
  %v63 = vunpack.c.l.b16 %v25
  %v64 = vunpack.c.l.b16 %v26
  %v65 = vunpack.c.l.b16 %v27
  %v66 = vunpack.c.l.b16 %v28
  %v67 = vpack.c.b16 %v52, %v51
  %v68 = vpack.c.b16 %v54, %v53
  %v69 = vpack.c.b16 %v56, %v55
  %v70 = vpack.c.b16 %v58, %v57
  %v71 = vpack.c.b16 %v60, %v59
  %v72 = vpack.c.b16 %v62, %v61
  %v73 = vpack.c.b16 %v64, %v63
  %v74 = vpack.c.b16 %v66, %v65
  %83 = vmatpush.bf16.msra.mxu0 %v74
  %84 = vmatpush.bf16.msra.mxu0 %v73
  %85 = vmatpush.bf16.msra.mxu0 %v72
  %86 = vmatpush.bf16.msra.mxu0 %v71
  %87 = vmatpush.bf16.msra.mxu0 %v70
  %88 = vmatpush.bf16.msra.mxu0 %v69
  %89 = vmatpush.bf16.msra.mxu0 %v68
  %90 = vmatpush.bf16.msra.mxu0 %v67
  %91 = vmatmul.bf16.gmra.mxu0 %v33
  %v92 = vpop.f32.mrf.mxu0
  %v93 = vadd.f32 0.0, %v92
  %v94 = vpop.f32.mrf.mxu0
  %v95 = vadd.f32 0.0, %v94
  %96 = vdwg.mxu0
  %97 = vst [vmem:[%s2] sm:$0xff] %v93
  %98 = vst [vmem:[%s2 + $0x8] sm:$0xff] %v95
  // Predicated region
  $region10: #{path_rwkv_forward.30} parent=0 // pred_check
    _
  $region11: #{path_rwkv_forward.30} parent=0 // pred_check_branch
    %100 = sbr.rel (0) target = $region13
  $region12: #{path_rwkv_forward.30} parent=0 // pred_region
    _
  $region13: #{path_rwkv_forward.30} parent=0 // pred_fallthru
    _
  // Predicated region
  $region14: #{path_rwkv_forward.30} parent=0 // pred_check
    _
  $region15: #{path_rwkv_forward.30} parent=0 // pred_check_branch
    %102 = sbr.rel (0) target = $region17
  $region16: #{path_rwkv_forward.30} parent=0 // pred_region
    _
  $region17: #{path_rwkv_forward.30} parent=0 // pred_fallthru
    _

// kernel: path_rwkv_forward.32
$region0: #{path_rwkv_forward.32}
  #allocation0 [shape = 'u32[]', space=smem, size = 0x4, offset = 0x4, fixed_abs, tag = 'smem constant byte address 0x4 - core index']
  #allocation1 [shape = 'u32[72,128]{1,0:T(1,128)}', space=vmem, size = 0x9000, scoped, tag = 'internal scratch']
  #allocation2 [shape = 'f32[2,64,64]{2,1,0:T(8,128)}', space=vmem, size = 0x10000, scoped, tag = 'scratch operand']
  %s0 = inlined_call_operand.vmem [shape: f32[2,8,128], index: 0, kind: input, shape index: {}]
  %s1 = inlined_call_operand.vmem [shape: f32[2,8,128], index: 1, kind: input, shape index: {}]
  %s2 = inlined_call_operand.vmem [shape: f32[2,8,128], index: 2, kind: input, shape index: {}]
  %s3 = inlined_call_operand.vmem [shape: f32[1,128], index: 3, kind: input, shape index: {}]
  %s4 = inlined_call_operand.vmem [shape: f32[2,8,128], index: 4, kind: output, shape index: {}]
  %s5 = sld [smem:[#allocation0]]
  $region53: #{path_rwkv_forward.32} parent=0
    _
  %s7 = ssub.s32 1, %s5
  %s8 = scalar_select 0, %s7, %s5
  loop: start=0, step=1, limit=4
  $region2: #{path_rwkv_forward.32} parent=0 // loop_pre_header
    _
  $region3: #{path_rwkv_forward.32} parent=0 // loop_header
    %s10 = sphi 0, %s14
    %p11 = scmp.ge.s32.totalorder %s10, 4
    %s17 = sphi 0, %s36
    %s18 = sphi 0, %s32
    %s19 = sphi 0, %s28
    %s20 = sphi 0, %s17
    %s21 = sphi 0, %s18
    %s22 = sphi 0, %s19
    %s23 = sphi 0, %s20
    %s24 = sphi 0, %s21
    %s25 = sphi 0, %s22
    %s43 = sphi 0, %s45
    %s46 = sphi 0, %s43
    %s47 = sphi 0, %s46
    %s63 = sphi 0, %s47
    %s73 = sphi 0, %s75
    %s76 = sphi 0, %s73
    %s77 = sphi 0, %s76
    %s93 = sphi 0, %s77
    %s103 = sphi 0, %s105
    %s106 = sphi 0, %s103
    %s107 = sphi 0, %s106
    %s123 = sphi 0, %s107
    %s129 = sphi 0, %s131
    %s132 = sphi 0, %s129
    %s133 = sphi 0, %s132
    %s149 = sphi 0, %s133
    %s159 = sphi 0, %s161
    %s162 = sphi 0, %s159
    %s163 = sphi 0, %s162
    %s179 = sphi 0, %s163
  $region4: #{path_rwkv_forward.32} parent=0 // loop_header_branch
    %13 = sbr.rel (%p11) target = $region8
  $region5: #{path_rwkv_forward.32} parent=0 // loop_body
    %s15 = ssub.s32 %s10, 1
    %s16 = ssub.s32 %s10, 2
    %s26 = sadd.s32 1, %s19
    %p27 = scmp.ge.s32.totalorder %s26, 1
    %s28 = scalar_select %p27, 0, %s26
    %s29 = sadd.s32 1, %s18
    %s30 = scalar_select %p27, %s29, %s18
    %p31 = scmp.ge.s32.totalorder %s30, 1
    %s32 = scalar_select %p31, 0, %s30
    %s33 = sadd.s32 1, %s17
    %s34 = scalar_select %p31, %s33, %s17
    %p35 = scmp.ge.s32.totalorder %s34, 2
    %s36 = scalar_select %p35, 0, %s34
    %s37 = ssub.s32 %s17, %s36
    %s38 = ssub.s32 %s19, %s28
    %s39 = sor.u32 %s37, %s38
    %s40 = ssub.s32 %s18, %s32
    %s41 = sor.u32 %s39, %s40
    %p42 = scmp.eq.s32.totalorder %s41, 0
    %s44 = sadd.s32 %s43, 1
    %s45 = scalar_select %p42, %s43, %s44
    %p48 = pneg %p42
    %p49 = scmp.eq.s32.totalorder %s10, 1
    %p50 = por %p48, %p49
    %p51 = scmp.ne.s32.totalorder %s43, %s46
    %p52 = scmp.eq.s32.totalorder %s10, 0
    %p53 = por %p51, %p52
    %p54 = scmp.ne.s32.totalorder %s43, %s46
    %p55 = scmp.eq.s32.totalorder %s15, 1
    %p56 = por %p54, %p55
    %p57 = scmp.ne.s32.totalorder %s46, %s47
    %p58 = scmp.eq.s32.totalorder %s15, 0
    %p59 = por %p57, %p58
    %p60 = scmp.ne.s32.totalorder %s46, %s47
    %p61 = scmp.eq.s32.totalorder %s16, 1
    %p62 = por %p60, %p61
    %p64 = scmp.ne.s32.totalorder %s47, %s63
    %p65 = scmp.eq.s32.totalorder %s16, 0
    %p66 = por %p64, %p65
    %s67 = ssub.s32 %s17, %s36
    %s68 = ssub.s32 %s19, %s28
    %s69 = sor.u32 %s67, %s68
    %s70 = ssub.s32 %s18, %s32
    %s71 = sor.u32 %s69, %s70
    %p72 = scmp.eq.s32.totalorder %s71, 0
    %s74 = sadd.s32 %s73, 1
    %s75 = scalar_select %p72, %s73, %s74
    %p78 = pneg %p72
    %p79 = scmp.eq.s32.totalorder %s10, 1
    %p80 = por %p78, %p79
    %p81 = scmp.ne.s32.totalorder %s73, %s76
    %p82 = scmp.eq.s32.totalorder %s10, 0
    %p83 = por %p81, %p82
    %p84 = scmp.ne.s32.totalorder %s73, %s76
    %p85 = scmp.eq.s32.totalorder %s15, 1
    %p86 = por %p84, %p85
    %p87 = scmp.ne.s32.totalorder %s76, %s77
    %p88 = scmp.eq.s32.totalorder %s15, 0
    %p89 = por %p87, %p88
    %p90 = scmp.ne.s32.totalorder %s76, %s77
    %p91 = scmp.eq.s32.totalorder %s16, 1
    %p92 = por %p90, %p91
    %p94 = scmp.ne.s32.totalorder %s77, %s93
    %p95 = scmp.eq.s32.totalorder %s16, 0
    %p96 = por %p94, %p95
    %s97 = ssub.s32 %s17, %s36
    %s98 = ssub.s32 %s19, %s28
    %s99 = sor.u32 %s97, %s98
    %s100 = ssub.s32 %s18, %s32
    %s101 = sor.u32 %s99, %s100
    %p102 = scmp.eq.s32.totalorder %s101, 0
    %s104 = sadd.s32 %s103, 1
    %s105 = scalar_select %p102, %s103, %s104
    %p108 = pneg %p102
    %p109 = scmp.eq.s32.totalorder %s10, 1
    %p110 = por %p108, %p109
    %p111 = scmp.ne.s32.totalorder %s103, %s106
    %p112 = scmp.eq.s32.totalorder %s10, 0
    %p113 = por %p111, %p112
    %p114 = scmp.ne.s32.totalorder %s103, %s106
    %p115 = scmp.eq.s32.totalorder %s15, 1
    %p116 = por %p114, %p115
    %p117 = scmp.ne.s32.totalorder %s106, %s107
    %p118 = scmp.eq.s32.totalorder %s15, 0
    %p119 = por %p117, %p118
    %p120 = scmp.ne.s32.totalorder %s106, %s107
    %p121 = scmp.eq.s32.totalorder %s16, 1
    %p122 = por %p120, %p121
    %p124 = scmp.ne.s32.totalorder %s107, %s123
    %p125 = scmp.eq.s32.totalorder %s16, 0
    %p126 = por %p124, %p125
    %s127 = ssub.s32 %s18, %s32
    %p128 = scmp.eq.s32.totalorder %s127, 0
    %s130 = sadd.s32 %s129, 1
    %s131 = scalar_select %p128, %s129, %s130
    %p134 = pneg %p128
    %p135 = scmp.eq.s32.totalorder %s10, 1
    %p136 = por %p134, %p135
    %p137 = scmp.ne.s32.totalorder %s129, %s132
    %p138 = scmp.eq.s32.totalorder %s10, 0
    %p139 = por %p137, %p138
    %p140 = scmp.ne.s32.totalorder %s129, %s132
    %p141 = scmp.eq.s32.totalorder %s15, 1
    %p142 = por %p140, %p141
    %p143 = scmp.ne.s32.totalorder %s132, %s133
    %p144 = scmp.eq.s32.totalorder %s15, 0
    %p145 = por %p143, %p144
    %p146 = scmp.ne.s32.totalorder %s132, %s133
    %p147 = scmp.eq.s32.totalorder %s16, 1
    %p148 = por %p146, %p147
    %p150 = scmp.ne.s32.totalorder %s133, %s149
    %p151 = scmp.eq.s32.totalorder %s16, 0
    %p152 = por %p150, %p151
    %s153 = ssub.s32 %s17, %s36
    %s154 = ssub.s32 %s19, %s28
    %s155 = sor.u32 %s153, %s154
    %s156 = ssub.s32 %s18, %s32
    %s157 = sor.u32 %s155, %s156
    %p158 = scmp.eq.s32.totalorder %s157, 0
    %s160 = sadd.s32 %s159, 1
    %s161 = scalar_select %p158, %s159, %s160
    %p164 = pneg %p158
    %p165 = scmp.eq.s32.totalorder %s10, 1
    %p166 = por %p164, %p165
    %p167 = scmp.ne.s32.totalorder %s159, %s162
    %p168 = scmp.eq.s32.totalorder %s10, 0
    %p169 = por %p167, %p168
    %p170 = scmp.ne.s32.totalorder %s159, %s162
    %p171 = scmp.eq.s32.totalorder %s15, 1
    %p172 = por %p170, %p171
    %p173 = scmp.ne.s32.totalorder %s162, %s163
    %p174 = scmp.eq.s32.totalorder %s15, 0
    %p175 = por %p173, %p174
    %p176 = scmp.ne.s32.totalorder %s162, %s163
    %p177 = scmp.eq.s32.totalorder %s16, 1
    %p178 = por %p176, %p177
    %p180 = scmp.ne.s32.totalorder %s163, %s179
    %p181 = scmp.eq.s32.totalorder %s16, 0
    %p182 = por %p180, %p181
    %p183 = scmp.le.s32.totalorder 1, %s10
    %p184 = scmp.lt.s32.totalorder %s10, 3
    %p185 = pnand %p183, %p184
    %p186 = pneg %p185
    // Predicated region
    $region9: #{path_rwkv_forward.32} parent=5 // pred_check
      _
    $region10: #{path_rwkv_forward.32} parent=5 // pred_check_branch
      %188 = sbr.rel (%p185) target = $region12
    $region11: #{path_rwkv_forward.32} parent=5 // pred_region
      %s189 = ssub.s32 %s10, 1
      // Predicated region
      $region13: #{path_rwkv_forward.32} parent=11 // pred_check
        %p190 = pneg %p145
      $region14: #{path_rwkv_forward.32} parent=11 // pred_check_branch
        %192 = sbr.rel (%p190) target = $region16
      $region15: #{path_rwkv_forward.32} parent=11 // pred_region
        %p193 = scmp.lt.s32.totalorder %s21, 0
        %s194 = scalar_select %p193, %s21, 0
        %s195 = scalar_lea.vmem %s3, %s194
      $region16: #{path_rwkv_forward.32} parent=11 // pred_fallthru
        _
    $region12: #{path_rwkv_forward.32} parent=5 // pred_fallthru
      _
    %p196 = scmp.lt.s32.totalorder %s10, 2
    // Predicated region
    $region17: #{path_rwkv_forward.32} parent=5 // pred_check
      %p197 = pneg %p196
    $region18: #{path_rwkv_forward.32} parent=5 // pred_check_branch
      %199 = sbr.rel (%p197) target = $region20
    $region19: #{path_rwkv_forward.32} parent=5 // pred_region
      // Predicated region
      $region21: #{path_rwkv_forward.32} parent=19 // pred_check
        %p200 = pneg %p53
      $region22: #{path_rwkv_forward.32} parent=19 // pred_check_branch
        %202 = sbr.rel (%p200) target = $region24
      $region23: #{path_rwkv_forward.32} parent=19 // pred_region
        %p203 = scmp.lt.s32.totalorder %s17, 1
        %s204 = scalar_select %p203, %s17, 1
        %p205 = scmp.lt.s32.totalorder %s19, 0
        %s206 = scalar_select %p205, %s19, 0
        %p207 = scmp.lt.s32.totalorder %s18, 0
        %s208 = scalar_select %p207, %s18, 0
        %s209 = sadd.s32 %s208, %s206
        %s210 = sadd.s32 %s209, %s204
        %s211 = smul.addr %s210, 8
        %s212 = scalar_lea.vmem %s0, %s211
      $region24: #{path_rwkv_forward.32} parent=19 // pred_fallthru
        _
      // Predicated region
      $region25: #{path_rwkv_forward.32} parent=19 // pred_check
        %p213 = pneg %p83
      $region26: #{path_rwkv_forward.32} parent=19 // pred_check_branch
        %215 = sbr.rel (%p213) target = $region28
      $region27: #{path_rwkv_forward.32} parent=19 // pred_region
        %p216 = scmp.lt.s32.totalorder %s17, 1
        %s217 = scalar_select %p216, %s17, 1
        %p218 = scmp.lt.s32.totalorder %s19, 0
        %s219 = scalar_select %p218, %s19, 0
        %p220 = scmp.lt.s32.totalorder %s18, 0
        %s221 = scalar_select %p220, %s18, 0
        %s222 = sadd.s32 %s221, %s219
        %s223 = sadd.s32 %s222, %s217
        %s224 = smul.addr %s223, 8
        %s225 = scalar_lea.vmem %s1, %s224
      $region28: #{path_rwkv_forward.32} parent=19 // pred_fallthru
        _
      // Predicated region
      $region29: #{path_rwkv_forward.32} parent=19 // pred_check
        %p226 = pneg %p113
      $region30: #{path_rwkv_forward.32} parent=19 // pred_check_branch
        %228 = sbr.rel (%p226) target = $region32
      $region31: #{path_rwkv_forward.32} parent=19 // pred_region
        %p229 = scmp.lt.s32.totalorder %s17, 1
        %s230 = scalar_select %p229, %s17, 1
        %p231 = scmp.lt.s32.totalorder %s19, 0
        %s232 = scalar_select %p231, %s19, 0
        %p233 = scmp.lt.s32.totalorder %s18, 0
        %s234 = scalar_select %p233, %s18, 0
        %s235 = sadd.s32 %s234, %s232
        %s236 = sadd.s32 %s235, %s230
        %s237 = smul.addr %s236, 8
        %s238 = scalar_lea.vmem %s2, %s237
      $region32: #{path_rwkv_forward.32} parent=19 // pred_fallthru
        _
    $region20: #{path_rwkv_forward.32} parent=5 // pred_fallthru
      _
    %p239 = scmp.le.s32.totalorder 1, %s10
    %p240 = scmp.lt.s32.totalorder %s10, 3
    %p241 = pnand %p239, %p240
    %p242 = pneg %p241
    // Predicated region
    $region33: #{path_rwkv_forward.32} parent=5 // pred_check
      _
    $region34: #{path_rwkv_forward.32} parent=5 // pred_check_branch
      %244 = sbr.rel (%p241) target = $region36
    $region35: #{path_rwkv_forward.32} parent=5 // pred_region
      %s245 = ssub.s32 %s10, 1
      %p246 = scmp.lt.s32.totalorder %s20, 1
      %s247 = scalar_select %p246, %s20, 1
      %p248 = scmp.lt.s32.totalorder %s22, 0
      %s249 = scalar_select %p248, %s22, 0
      %p250 = scmp.lt.s32.totalorder %s21, 0
      %s251 = scalar_select %p250, %s21, 0
      %s252 = sadd.s32 %s251, %s249
      %s253 = sadd.s32 %s252, %s247
      %s254 = smul.addr %s253, 8
      %s255 = scalar_lea.vmem %s0, %s254
      %p256 = pneg %p59
      %p257 = pneg %p56
      %p258 = scmp.lt.s32.totalorder %s20, 1
      %s259 = scalar_select %p258, %s20, 1
      %p260 = scmp.lt.s32.totalorder %s22, 0
      %s261 = scalar_select %p260, %s22, 0
      %p262 = scmp.lt.s32.totalorder %s21, 0
      %s263 = scalar_select %p262, %s21, 0
      %s264 = sadd.s32 %s263, %s261
      %s265 = sadd.s32 %s264, %s259
      %s266 = smul.addr %s265, 8
      %s267 = scalar_lea.vmem %s1, %s266
      %p268 = pneg %p89
      %p269 = pneg %p86
      %p270 = scmp.lt.s32.totalorder %s20, 1
      %s271 = scalar_select %p270, %s20, 1
      %p272 = scmp.lt.s32.totalorder %s22, 0
      %s273 = scalar_select %p272, %s22, 0
      %p274 = scmp.lt.s32.totalorder %s21, 0
      %s275 = scalar_select %p274, %s21, 0
      %s276 = sadd.s32 %s275, %s273
      %s277 = sadd.s32 %s276, %s271
      %s278 = smul.addr %s277, 8
      %s279 = scalar_lea.vmem %s2, %s278
      %p280 = pneg %p119
      %p281 = pneg %p116
      %p282 = scmp.lt.s32.totalorder %s21, 0
      %s283 = scalar_select %p282, %s21, 0
      %s284 = scalar_lea.vmem %s3, %s283
      %p285 = pneg %p145
      %p286 = pneg %p142
      %p287 = pneg %p175
      %p288 = pneg %p172
      %p289 = scmp.lt.s32.totalorder %s20, 1
      %s290 = scalar_select %p289, %s20, 1
      %p291 = scmp.lt.s32.totalorder %s22, 0
      %s292 = scalar_select %p291, %s22, 0
      %p293 = scmp.lt.s32.totalorder %s21, 0
      %s294 = scalar_select %p293, %s21, 0
      %s295 = sadd.s32 %s294, %s292
      %s296 = sadd.s32 %s295, %s290
      %s297 = smul.addr %s296, 8
      %s298 = scalar_lea.vmem %s4, %s297
      %p299 = scmp.lt.s32.totalorder %s20, 1
      %s300 = scalar_select %p299, %s20, 1
      %p301 = scmp.lt.s32.totalorder %s22, 0
      %s302 = scalar_select %p301, %s22, 0
      %p303 = scmp.lt.s32.totalorder %s21, 0
      %s304 = scalar_select %p303, %s21, 0
      %s305 = sadd.s32 %s304, %s302
      %s306 = sadd.s32 %s305, %s300
      %s307 = smul.addr %s306, 8
      %s308 = scalar_lea.vmem %s0, %s307
      %p309 = scmp.lt.s32.totalorder %s20, 1
      %s310 = scalar_select %p309, %s20, 1
      %p311 = scmp.lt.s32.totalorder %s22, 0
      %s312 = scalar_select %p311, %s22, 0
      %p313 = scmp.lt.s32.totalorder %s21, 0
      %s314 = scalar_select %p313, %s21, 0
      %s315 = sadd.s32 %s314, %s312
      %s316 = sadd.s32 %s315, %s310
      %s317 = smul.addr %s316, 8
      %s318 = scalar_lea.vmem %s1, %s317
      %p319 = scmp.lt.s32.totalorder %s20, 1
      %s320 = scalar_select %p319, %s20, 1
      %p321 = scmp.lt.s32.totalorder %s22, 0
      %s322 = scalar_select %p321, %s22, 0
      %p323 = scmp.lt.s32.totalorder %s21, 0
      %s324 = scalar_select %p323, %s21, 0
      %s325 = sadd.s32 %s324, %s322
      %s326 = sadd.s32 %s325, %s320
      %s327 = smul.addr %s326, 8
      %s328 = scalar_lea.vmem %s2, %s327
      %p329 = scmp.lt.s32.totalorder %s21, 0
      %s330 = scalar_select %p329, %s21, 0
      %s331 = scalar_lea.vmem %s3, %s330
      %p332 = scmp.lt.s32.totalorder %s20, 1
      %s333 = scalar_select %p332, %s20, 1
      %p334 = scmp.lt.s32.totalorder %s22, 0
      %s335 = scalar_select %p334, %s22, 0
      %p336 = scmp.lt.s32.totalorder %s21, 0
      %s337 = scalar_select %p336, %s21, 0
      %s338 = sadd.s32 %s337, %s335
      %s339 = sadd.s32 %s338, %s333
      %s340 = smul.addr %s339, 8
      %s341 = scalar_lea.vmem %s4, %s340
      %p343 = scmp.eq.s32.totalorder %s22, 0
      // Predicated region
      $region37: #{path_rwkv_forward.32} parent=35 // pred_check
        %p344 = pneg %p343
      $region38: #{path_rwkv_forward.32} parent=35 // pred_check_branch
        %346 = sbr.rel (%p344) target = $region40
      $region39: #{path_rwkv_forward.32} parent=35 // pred_region
        %vm347 = vcmask 523264
        %348 = vst.msk [vmem:[#allocation2] sm:$0xff] %vm347, 0.0
        %349 = vst.msk [vmem:[#allocation2 + $0x8] sm:$0xff] %vm347, 0.0
        %350 = vst.msk [vmem:[#allocation2 + $0x10] sm:$0xff] %vm347, 0.0
        %351 = vst.msk [vmem:[#allocation2 + $0x18] sm:$0xff] %vm347, 0.0
        %352 = vst.msk [vmem:[#allocation2 + $0x20] sm:$0xff] %vm347, 0.0
        %353 = vst.msk [vmem:[#allocation2 + $0x28] sm:$0xff] %vm347, 0.0
        %354 = vst.msk [vmem:[#allocation2 + $0x30] sm:$0xff] %vm347, 0.0
        %355 = vst.msk [vmem:[#allocation2 + $0x38] sm:$0xff] %vm347, 0.0
        %356 = vst.msk [vmem:[#allocation2 + $0x40] sm:$0xff] %vm347, 0.0
        %357 = vst.msk [vmem:[#allocation2 + $0x48] sm:$0xff] %vm347, 0.0
        %358 = vst.msk [vmem:[#allocation2 + $0x50] sm:$0xff] %vm347, 0.0
        %359 = vst.msk [vmem:[#allocation2 + $0x58] sm:$0xff] %vm347, 0.0
        %360 = vst.msk [vmem:[#allocation2 + $0x60] sm:$0xff] %vm347, 0.0
        %361 = vst.msk [vmem:[#allocation2 + $0x68] sm:$0xff] %vm347, 0.0
        %362 = vst.msk [vmem:[#allocation2 + $0x70] sm:$0xff] %vm347, 0.0
        %363 = vst.msk [vmem:[#allocation2 + $0x78] sm:$0xff] %vm347, 0.0
      $region40: #{path_rwkv_forward.32} parent=35 // pred_fallthru
        _
      %v364 = vld [vmem:[%s308] sm:$0xff]
      %v365 = vld [vmem:[%s318] sm:$0xff]
      %v366 = vld [vmem:[%s328] sm:$0xff]
      %v367 = vld [vmem:[%s331] sm:$0x1]
      %v368 = vmul.f32 %v366, 1.442695
      %v369 = vpow.pop %v368
      %v370 = vsub.f32 0.0, %v369
      %v371 = vlaneseq
      %v372 = vshrl.u32 %v371, 7
      %v373 = vlaneseq
      %v374 = vand.u32 %v373, 127
      %vm375 = vcmp.gt.s32.totalorder %v372, %v374
      %vm376 = vcmp.eq.s32.totalorder %v372, %v374
      %v377 = vsel %vm375, 1, 0
      %v378 = vcvt.s32.f32 %v377
      %vm379 = vcmask 64512
      %v381 = vsel %vm379, %v378, 0
      %383 = vmatpush.msra.mxu0 0.0
      %384 = vmatpush.msra.mxu0 0.0
      %385 = vmatpush.msra.mxu0 0.0
      %386 = vmatpush.msra.mxu0 0.0
      %387 = vmatpush.msra.mxu0 0.0
      %388 = vmatpush.msra.mxu0 0.0
      %389 = vmatpush.msra.mxu0 0.0
      %390 = vmatpush.msra.mxu0 0.0
      %391 = vmatpush.msra.mxu0 0.0
      %392 = vmatpush.msra.mxu0 0.0
      %393 = vmatpush.msra.mxu0 0.0
      %394 = vmatpush.msra.mxu0 0.0
      %395 = vmatpush.msra.mxu0 0.0
      %396 = vmatpush.msra.mxu0 0.0
      %397 = vmatpush.msra.mxu0 0.0
      %398 = vmatpush.msra.mxu0 %v370
      %399 = vmatmul.f32.gmra.mxu0 %v381
      %v400 = vpop.f32.mrf.mxu0
      %v401 = vadd.f32 0.0, %v400
      %402 = vdwg.mxu0
      %v403 = vadd.f32 %v401, %v370
      %v404 = vmul.f32 %v401, 1.442695
      %v405 = vpow.pop %v404
      %v406 = vmul.f32 %v364, %v405
      %v407 = vsub.f32 0.0, %v401
      %v408 = vmul.f32 %v407, 1.442695
      %v409 = vpow.pop %v408
      %v410 = vperm.slane %v409, 4
      %v411 = vmul.f32 %v406, %v410
      %v412 = vpack.c.bf16 %v411, %v411
      %v413 = vperm.slane %v401, 4
      %v414 = vsub.f32 %v413, %v403
      %v415 = vmul.f32 %v414, 1.442695
      %v416 = vpow.pop %v415
      %v417 = vmul.f32 %v366, %v416
      %v418 = vpack.c.bf16 %v417, %v417
      %v419 = vperm.slane %v403, 7
      %v420 = vsub.f32 %v419, %v403
      %v421 = vmul.f32 %v420, 1.442695
      %v422 = vpow.pop %v421
      %v423 = vmul.f32 %v366, %v422
      %v424 = vpack.c.bf16 %v423, %v423
      %v425 = vpack.c.bf16 %v365, %v365
      %v426 = vpack.c.bf16 %v406, %v406
      %v428 = vperm.slane %v367, 0
      %v430 = vmul.f32 %v364, %v428
      %v431 = vmul.f32 %v430, %v366
      %vm432 = vcmask 523264
      %v433 = vsel %vm432, %v431, 0.0
      %434 = vadd.xlane.f32.xlu0 %v433
      %v435 = vpop.xlane.xlu0 %434
      %v437 = vsel %vm432, %v412, 0
      %v440 = vsel %vm432, %v418, 0
      %442 = vmatpush.bf16.xpose.msra.mxu0 0
      %443 = vmatpush.bf16.xpose.msra.mxu0 0
      %444 = vmatpush.bf16.xpose.msra.mxu0 0
      %445 = vmatpush.bf16.xpose.msra.mxu0 0
      %446 = vmatpush.bf16.xpose.msra.mxu0 0
      %447 = vmatpush.bf16.xpose.msra.mxu0 0
      %448 = vmatpush.bf16.xpose.msra.mxu0 0
      %449 = vmatpush.bf16.xpose.msra.mxu0 %v440
      %450 = vmatmul.bf16.gmra.mxu0 %v437
      %v451 = vpop.f32.mrf.mxu0
      %v452 = vadd.f32 0.0, %v451
      %v453 = vpop.f32.mrf.mxu0
      %454 = vdwg.mxu0
      %v455 = vsel %vm375, %v452, 0.0
      %v456 = vsel %vm376, %v435, 0.0
      %v457 = vadd.f32 %v455, %v456
      %v458 = vpack.c.bf16 %v457, %v457
      %v459 = vld [vmem:[#allocation2] sm:$0xff]
      %v460 = vld [vmem:[#allocation2 + $0x8] sm:$0xff]
      %v461 = vld [vmem:[#allocation2 + $0x10] sm:$0xff]
      %v462 = vld [vmem:[#allocation2 + $0x18] sm:$0xff]
      %v463 = vld [vmem:[#allocation2 + $0x20] sm:$0xff]
      %v464 = vld [vmem:[#allocation2 + $0x28] sm:$0xff]
      %v465 = vld [vmem:[#allocation2 + $0x30] sm:$0xff]
      %v466 = vld [vmem:[#allocation2 + $0x38] sm:$0xff]
      %v467 = vpack.c.bf16 %v460, %v459
      %v468 = vpack.c.bf16 %v462, %v461
      %v469 = vpack.c.bf16 %v464, %v463
      %v470 = vpack.c.bf16 %v466, %v465
      %v472 = vsel %vm432, %v426, 0
      %474 = vmatpush.bf16.msra.mxu0 0
      %475 = vmatpush.bf16.msra.mxu0 0
      %476 = vmatpush.bf16.msra.mxu0 0
      %477 = vmatpush.bf16.msra.mxu0 0
      %478 = vmatpush.bf16.msra.mxu0 %v470
      %479 = vmatpush.bf16.msra.mxu0 %v469
      %480 = vmatpush.bf16.msra.mxu0 %v468
      %481 = vmatpush.bf16.msra.mxu0 %v467
      %482 = vmatmul.bf16.gmra.mxu0 %v472
      %v483 = vpop.f32.mrf.mxu0
      %v484 = vadd.f32 0.0, %v483
      %v485 = vpop.f32.mrf.mxu0
      %486 = vdwg.mxu0
      %v488 = vsel %vm379, %v458, 0
      %vm490 = vcmask 1043456
      %v492 = vsel %vm490, %v425, 0
      %494 = vmatpush.bf16.msra.mxu0 0
      %495 = vmatpush.bf16.msra.mxu0 0
      %496 = vmatpush.bf16.msra.mxu0 0
      %497 = vmatpush.bf16.msra.mxu0 0
      %498 = vmatpush.bf16.msra.mxu0 0
      %499 = vmatpush.bf16.msra.mxu0 0
      %500 = vmatpush.bf16.msra.mxu0 0
      %501 = vmatpush.bf16.msra.mxu0 %v492
      %502 = vmatmul.bf16.gmra.mxu0 %v488
      %v503 = vpop.f32.mrf.mxu0
      %v504 = vadd.f32 %v484, %v503
      %v505 = vpop.f32.mrf.mxu0
      %506 = vdwg.mxu0
      %507 = vst.msk [vmem:[%s341] sm:$0xff] %vm432, %v504
      %v508 = vmul.f32 %v403, 1.442695
      %v509 = vpow.pop %v508
      %v511 = vrot.slane %v509, 7
      %513 = vxpose.xlu0.b32.start [1/16] %v511, 128
      %514 = vxpose.xlu0.b32.cont [2/16] 0.0, 128
      %515 = vxpose.xlu0.b32.cont [3/16] 0.0, 128
      %516 = vxpose.xlu0.b32.cont [4/16] 0.0, 128
      %517 = vxpose.xlu0.b32.cont [5/16] 0.0, 128
      %518 = vxpose.xlu0.b32.cont [6/16] 0.0, 128
      %519 = vxpose.xlu0.b32.cont [7/16] 0.0, 128
      %520 = vxpose.xlu0.b32.cont [8/16] 0.0, 128
      %521 = vxpose.xlu0.b32.cont [9/16] 0.0, 128
      %522 = vxpose.xlu0.b32.cont [10/16] 0.0, 128
      %523 = vxpose.xlu0.b32.cont [11/16] 0.0, 128
      %524 = vxpose.xlu0.b32.cont [12/16] 0.0, 128
      %525 = vxpose.xlu0.b32.cont [13/16] 0.0, 128
      %526 = vxpose.xlu0.b32.cont [14/16] 0.0, 128
      %527 = vxpose.xlu0.b32.cont [15/16] 0.0, 128
      %528 = vxpose.xlu0.b32.end [16/16] 0.0, 128
      %v529 = vpop.trf.xlu0
      %v530 = vpop.trf.xlu0
      %v531 = vpop.trf.xlu0
      %v532 = vpop.trf.xlu0
      %v533 = vpop.trf.xlu0
      %v534 = vpop.trf.xlu0
      %v535 = vpop.trf.xlu0
      %v536 = vpop.trf.xlu0
      %v537 = vpop.trf.xlu0
      %v538 = vpop.trf.xlu0
      %v539 = vpop.trf.xlu0
      %v540 = vpop.trf.xlu0
      %v541 = vpop.trf.xlu0
      %v542 = vpop.trf.xlu0
      %v543 = vpop.trf.xlu0
      %v544 = vpop.trf.xlu0
      %546 = vset.pattern.permute.xlu0 0
      %547 = vperm.xlu0 %546, %v529
      %v548 = vpop.permute.xlu0 %547
      %551 = vset.pattern.permute.xlu0 0
      %552 = vperm.xlu0 %551, %v530
      %v553 = vpop.permute.xlu0 %552
      %556 = vset.pattern.permute.xlu0 0
      %557 = vperm.xlu0 %556, %v531
      %v558 = vpop.permute.xlu0 %557
      %561 = vset.pattern.permute.xlu0 0
      %562 = vperm.xlu0 %561, %v532
      %v563 = vpop.permute.xlu0 %562
      %566 = vset.pattern.permute.xlu0 0
      %567 = vperm.xlu0 %566, %v533
      %v568 = vpop.permute.xlu0 %567
      %571 = vset.pattern.permute.xlu0 0
      %572 = vperm.xlu0 %571, %v534
      %v573 = vpop.permute.xlu0 %572
      %576 = vset.pattern.permute.xlu0 0
      %577 = vperm.xlu0 %576, %v535
      %v578 = vpop.permute.xlu0 %577
      %581 = vset.pattern.permute.xlu0 0
      %582 = vperm.xlu0 %581, %v536
      %v583 = vpop.permute.xlu0 %582
      %v585 = vmul.f32 %v548, %v459
      %v586 = vmul.f32 %v553, %v460
      %v587 = vmul.f32 %v558, %v461
      %v588 = vmul.f32 %v563, %v462
      %v589 = vmul.f32 %v568, %v463
      %v590 = vmul.f32 %v573, %v464
      %v591 = vmul.f32 %v578, %v465
      %v592 = vmul.f32 %v583, %v466
      %593 = vxpose.xlu0.c.b16.start [1/8] %v424, 128
      %594 = vxpose.xlu0.c.b16.cont [2/8] 0, 128
      %595 = vxpose.xlu0.c.b16.cont [3/8] 0, 128
      %596 = vxpose.xlu0.c.b16.cont [4/8] 0, 128
      %597 = vxpose.xlu0.c.b16.cont [5/8] 0, 128
      %598 = vxpose.xlu0.c.b16.cont [6/8] 0, 128
      %599 = vxpose.xlu0.c.b16.cont [7/8] 0, 128
      %600 = vxpose.xlu0.c.b16.end [8/8] 0, 128
      %v601 = vpop.trf.xlu0
      %v602 = vpop.trf.xlu0
      %v603 = vpop.trf.xlu0
      %v604 = vpop.trf.xlu0
      %v605 = vpop.trf.xlu0
      %v606 = vpop.trf.xlu0
      %v607 = vpop.trf.xlu0
      %v608 = vpop.trf.xlu0
      %v610 = vsel %vm379, %v601, 0
      %v613 = vsel %vm379, %v602, 0
      %v616 = vsel %vm379, %v603, 0
      %v619 = vsel %vm379, %v604, 0
      %621 = vmatpush.bf16.msra.mxu0 0
      %622 = vmatpush.bf16.msra.mxu0 0
      %623 = vmatpush.bf16.msra.mxu0 0
      %624 = vmatpush.bf16.msra.mxu0 0
      %625 = vmatpush.bf16.msra.mxu0 0
      %626 = vmatpush.bf16.msra.mxu0 0
      %627 = vmatpush.bf16.msra.mxu0 0
      %628 = vmatpush.bf16.msra.mxu0 %v492
      %629 = vmatmul.bf16.gmra.mxu0 %v610
      %v630 = vpop.f32.mrf.mxu0
      %v631 = vadd.f32 0.0, %v630
      %v632 = vpop.f32.mrf.mxu0
      %v633 = vadd.f32 0.0, %v632
      %634 = vmatmul.bf16.gmra.mxu0 %v613
      %v635 = vpop.f32.mrf.mxu0
      %v636 = vadd.f32 0.0, %v635
      %v637 = vpop.f32.mrf.mxu0
      %v638 = vadd.f32 0.0, %v637
      %639 = vmatmul.bf16.gmra.mxu0 %v616
      %v640 = vpop.f32.mrf.mxu0
      %v641 = vadd.f32 0.0, %v640
      %v642 = vpop.f32.mrf.mxu0
      %v643 = vadd.f32 0.0, %v642
      %644 = vmatmul.bf16.gmra.mxu0 %v619
      %v645 = vpop.f32.mrf.mxu0
      %v646 = vadd.f32 0.0, %v645
      %v647 = vpop.f32.mrf.mxu0
      %v648 = vadd.f32 0.0, %v647
      %649 = vdwg.mxu0
      %v650 = vadd.f32 %v585, %v631
      %v651 = vadd.f32 %v586, %v633
      %v652 = vadd.f32 %v587, %v636
      %v653 = vadd.f32 %v588, %v638
      %v654 = vadd.f32 %v589, %v641
      %v655 = vadd.f32 %v590, %v643
      %v656 = vadd.f32 %v591, %v646
      %v657 = vadd.f32 %v592, %v648
      %658 = vst.msk [vmem:[#allocation2] sm:$0xff] %vm432, %v650
      %659 = vst.msk [vmem:[#allocation2 + $0x8] sm:$0xff] %vm432, %v651
      %660 = vst.msk [vmem:[#allocation2 + $0x10] sm:$0xff] %vm432, %v652
      %661 = vst.msk [vmem:[#allocation2 + $0x18] sm:$0xff] %vm432, %v653
      %662 = vst.msk [vmem:[#allocation2 + $0x20] sm:$0xff] %vm432, %v654
      %663 = vst.msk [vmem:[#allocation2 + $0x28] sm:$0xff] %vm432, %v655
      %664 = vst.msk [vmem:[#allocation2 + $0x30] sm:$0xff] %vm432, %v656
      %665 = vst.msk [vmem:[#allocation2 + $0x38] sm:$0xff] %vm432, %v657
      %667 = vrot.lane.b32.xlu0 %v431, 64
      %v668 = vpop.permute.xlu0 %667
      %v670 = vsel %vm432, %v668, 0.0
      %671 = vadd.xlane.f32.xlu0 %v670
      %v672 = vpop.xlane.xlu0 %671
      %v674 = vunpack.c.l.b16 %v412
      %v675 = vpack.c.b16 %v674, %v674
      %676 = vrot.lane.b32.xlu0 %v675, 64
      %v677 = vpop.permute.xlu0 %676
      %v679 = vunpack.c.l.b16 %v418
      %v680 = vpack.c.b16 %v679, %v679
      %681 = vrot.lane.b32.xlu0 %v680, 64
      %v682 = vpop.permute.xlu0 %681
      %v684 = vsel %vm432, %v677, 0
      %v687 = vsel %vm432, %v682, 0
      %689 = vmatpush.bf16.xpose.msra.mxu0 0
      %690 = vmatpush.bf16.xpose.msra.mxu0 0
      %691 = vmatpush.bf16.xpose.msra.mxu0 0
      %692 = vmatpush.bf16.xpose.msra.mxu0 0
      %693 = vmatpush.bf16.xpose.msra.mxu0 0
      %694 = vmatpush.bf16.xpose.msra.mxu0 0
      %695 = vmatpush.bf16.xpose.msra.mxu0 0
      %696 = vmatpush.bf16.xpose.msra.mxu0 %v687
      %697 = vmatmul.bf16.gmra.mxu0 %v684
      %v698 = vpop.f32.mrf.mxu0
      %v699 = vadd.f32 0.0, %v698
      %v700 = vpop.f32.mrf.mxu0
      %701 = vdwg.mxu0
      %v702 = vsel %vm375, %v699, 0.0
      %v703 = vsel %vm376, %v672, 0.0
      %v704 = vadd.f32 %v702, %v703
      %v705 = vpack.c.bf16 %v704, %v704
      %s706 = scalar_lea.vmem [#allocation2], 64
      %v707 = vld [vmem:[%s706] sm:$0xff]
      %v708 = vld [vmem:[%s706 + $0x8] sm:$0xff]
      %v709 = vld [vmem:[%s706 + $0x10] sm:$0xff]
      %v710 = vld [vmem:[%s706 + $0x18] sm:$0xff]
      %v711 = vld [vmem:[%s706 + $0x20] sm:$0xff]
      %v712 = vld [vmem:[%s706 + $0x28] sm:$0xff]
      %v713 = vld [vmem:[%s706 + $0x30] sm:$0xff]
      %v714 = vld [vmem:[%s706 + $0x38] sm:$0xff]
      %v715 = vpack.c.bf16 %v708, %v707
      %v716 = vpack.c.bf16 %v710, %v709
      %v717 = vpack.c.bf16 %v712, %v711
      %v718 = vpack.c.bf16 %v714, %v713
      %v720 = vunpack.c.l.b16 %v426
      %v721 = vpack.c.b16 %v720, %v720
      %722 = vrot.lane.b32.xlu0 %v721, 64
      %v723 = vpop.permute.xlu0 %722
      %v725 = vsel %vm432, %v723, 0
      %727 = vmatpush.bf16.msra.mxu0 0
      %728 = vmatpush.bf16.msra.mxu0 0
      %729 = vmatpush.bf16.msra.mxu0 0
      %730 = vmatpush.bf16.msra.mxu0 0
      %731 = vmatpush.bf16.msra.mxu0 %v718
      %732 = vmatpush.bf16.msra.mxu0 %v717
      %733 = vmatpush.bf16.msra.mxu0 %v716
      %734 = vmatpush.bf16.msra.mxu0 %v715
      %735 = vmatmul.bf16.gmra.mxu0 %v725
      %v736 = vpop.f32.mrf.mxu0
      %v737 = vadd.f32 0.0, %v736
      %v738 = vpop.f32.mrf.mxu0
      %739 = vdwg.mxu0
      %v741 = vunpack.c.l.b16 %v425
      %v742 = vpack.c.b16 %v741, %v741
      %743 = vrot.lane.b32.xlu0 %v742, 64
      %v744 = vpop.permute.xlu0 %743
      %v746 = vsel %vm379, %v705, 0
      %v749 = vsel %vm490, %v744, 0
      %751 = vmatpush.bf16.msra.mxu0 0
      %752 = vmatpush.bf16.msra.mxu0 0
      %753 = vmatpush.bf16.msra.mxu0 0
      %754 = vmatpush.bf16.msra.mxu0 0
      %755 = vmatpush.bf16.msra.mxu0 0
      %756 = vmatpush.bf16.msra.mxu0 0
      %757 = vmatpush.bf16.msra.mxu0 0
      %758 = vmatpush.bf16.msra.mxu0 %v749
      %759 = vmatmul.bf16.gmra.mxu0 %v746
      %v760 = vpop.f32.mrf.mxu0
      %v761 = vadd.f32 %v737, %v760
      %v762 = vpop.f32.mrf.mxu0
      %763 = vdwg.mxu0
      %765 = vrot.lane.b32.xlu0 %v761, 64
      %v766 = vpop.permute.xlu0 %765
      %vm768 = vcmask 1048064
      %769 = vst.msk [vmem:[%s341] sm:$0xff] %vm768, %v766
      %770 = vrot.lane.b32.xlu0 %v511, 64
      %v771 = vpop.permute.xlu0 %770
      %773 = vxpose.xlu0.b32.start [1/16] %v771, 128
      %774 = vxpose.xlu0.b32.cont [2/16] 0.0, 128
      %775 = vxpose.xlu0.b32.cont [3/16] 0.0, 128
      %776 = vxpose.xlu0.b32.cont [4/16] 0.0, 128
      %777 = vxpose.xlu0.b32.cont [5/16] 0.0, 128
      %778 = vxpose.xlu0.b32.cont [6/16] 0.0, 128
      %779 = vxpose.xlu0.b32.cont [7/16] 0.0, 128
      %780 = vxpose.xlu0.b32.cont [8/16] 0.0, 128
      %781 = vxpose.xlu0.b32.cont [9/16] 0.0, 128
      %782 = vxpose.xlu0.b32.cont [10/16] 0.0, 128
      %783 = vxpose.xlu0.b32.cont [11/16] 0.0, 128
      %784 = vxpose.xlu0.b32.cont [12/16] 0.0, 128
      %785 = vxpose.xlu0.b32.cont [13/16] 0.0, 128
      %786 = vxpose.xlu0.b32.cont [14/16] 0.0, 128
      %787 = vxpose.xlu0.b32.cont [15/16] 0.0, 128
      %788 = vxpose.xlu0.b32.end [16/16] 0.0, 128
      %v789 = vpop.trf.xlu0
      %v790 = vpop.trf.xlu0
      %v791 = vpop.trf.xlu0
      %v792 = vpop.trf.xlu0
      %v793 = vpop.trf.xlu0
      %v794 = vpop.trf.xlu0
      %v795 = vpop.trf.xlu0
      %v796 = vpop.trf.xlu0
      %v797 = vpop.trf.xlu0
      %v798 = vpop.trf.xlu0
      %v799 = vpop.trf.xlu0
      %v800 = vpop.trf.xlu0
      %v801 = vpop.trf.xlu0
      %v802 = vpop.trf.xlu0
      %v803 = vpop.trf.xlu0
      %v804 = vpop.trf.xlu0
      %806 = vset.pattern.permute.xlu0 0
      %807 = vperm.xlu0 %806, %v789
      %v808 = vpop.permute.xlu0 %807
      %811 = vset.pattern.permute.xlu0 0
      %812 = vperm.xlu0 %811, %v790
      %v813 = vpop.permute.xlu0 %812
      %816 = vset.pattern.permute.xlu0 0
      %817 = vperm.xlu0 %816, %v791
      %v818 = vpop.permute.xlu0 %817
      %821 = vset.pattern.permute.xlu0 0
      %822 = vperm.xlu0 %821, %v792
      %v823 = vpop.permute.xlu0 %822
      %826 = vset.pattern.permute.xlu0 0
      %827 = vperm.xlu0 %826, %v793
      %v828 = vpop.permute.xlu0 %827
      %831 = vset.pattern.permute.xlu0 0
      %832 = vperm.xlu0 %831, %v794
      %v833 = vpop.permute.xlu0 %832
      %836 = vset.pattern.permute.xlu0 0
      %837 = vperm.xlu0 %836, %v795
      %v838 = vpop.permute.xlu0 %837
      %841 = vset.pattern.permute.xlu0 0
      %842 = vperm.xlu0 %841, %v796
      %v843 = vpop.permute.xlu0 %842
      %v845 = vmul.f32 %v808, %v707
      %v846 = vmul.f32 %v813, %v708
      %v847 = vmul.f32 %v818, %v709
      %v848 = vmul.f32 %v823, %v710
      %v849 = vmul.f32 %v828, %v711
      %v850 = vmul.f32 %v833, %v712
      %v851 = vmul.f32 %v838, %v713
      %v852 = vmul.f32 %v843, %v714
      %v854 = vunpack.c.l.b16 %v424
      %v855 = vpack.c.b16 %v854, %v854
      %856 = vrot.lane.b32.xlu0 %v855, 64
      %v857 = vpop.permute.xlu0 %856
      %859 = vxpose.xlu0.c.b16.start [1/8] %v857, 128
      %860 = vxpose.xlu0.c.b16.cont [2/8] 0, 128
      %861 = vxpose.xlu0.c.b16.cont [3/8] 0, 128
      %862 = vxpose.xlu0.c.b16.cont [4/8] 0, 128
      %863 = vxpose.xlu0.c.b16.cont [5/8] 0, 128
      %864 = vxpose.xlu0.c.b16.cont [6/8] 0, 128
      %865 = vxpose.xlu0.c.b16.cont [7/8] 0, 128
      %866 = vxpose.xlu0.c.b16.end [8/8] 0, 128
      %v867 = vpop.trf.xlu0
      %v868 = vpop.trf.xlu0
      %v869 = vpop.trf.xlu0
      %v870 = vpop.trf.xlu0
      %v871 = vpop.trf.xlu0
      %v872 = vpop.trf.xlu0
      %v873 = vpop.trf.xlu0
      %v874 = vpop.trf.xlu0
      %v876 = vsel %vm379, %v867, 0
      %v879 = vsel %vm379, %v868, 0
      %v882 = vsel %vm379, %v869, 0
      %v885 = vsel %vm379, %v870, 0
      %887 = vmatpush.bf16.msra.mxu0 0
      %888 = vmatpush.bf16.msra.mxu0 0
      %889 = vmatpush.bf16.msra.mxu0 0
      %890 = vmatpush.bf16.msra.mxu0 0
      %891 = vmatpush.bf16.msra.mxu0 0
      %892 = vmatpush.bf16.msra.mxu0 0
      %893 = vmatpush.bf16.msra.mxu0 0
      %894 = vmatpush.bf16.msra.mxu0 %v749
      %895 = vmatmul.bf16.gmra.mxu0 %v876
      %v896 = vpop.f32.mrf.mxu0
      %v897 = vadd.f32 0.0, %v896
      %v898 = vpop.f32.mrf.mxu0
      %v899 = vadd.f32 0.0, %v898
      %900 = vmatmul.bf16.gmra.mxu0 %v879
      %v901 = vpop.f32.mrf.mxu0
      %v902 = vadd.f32 0.0, %v901
      %v903 = vpop.f32.mrf.mxu0
      %v904 = vadd.f32 0.0, %v903
      %905 = vmatmul.bf16.gmra.mxu0 %v882
      %v906 = vpop.f32.mrf.mxu0
      %v907 = vadd.f32 0.0, %v906
      %v908 = vpop.f32.mrf.mxu0
      %v909 = vadd.f32 0.0, %v908
      %910 = vmatmul.bf16.gmra.mxu0 %v885
      %v911 = vpop.f32.mrf.mxu0
      %v912 = vadd.f32 0.0, %v911
      %v913 = vpop.f32.mrf.mxu0
      %v914 = vadd.f32 0.0, %v913
      %915 = vdwg.mxu0
      %v916 = vadd.f32 %v845, %v897
      %v917 = vadd.f32 %v846, %v899
      %v918 = vadd.f32 %v847, %v902
      %v919 = vadd.f32 %v848, %v904
      %v920 = vadd.f32 %v849, %v907
      %v921 = vadd.f32 %v850, %v909
      %v922 = vadd.f32 %v851, %v912
      %v923 = vadd.f32 %v852, %v914
      %924 = vst.msk [vmem:[%s706] sm:$0xff] %vm432, %v916
      %925 = vst.msk [vmem:[%s706 + $0x8] sm:$0xff] %vm432, %v917
      %926 = vst.msk [vmem:[%s706 + $0x10] sm:$0xff] %vm432, %v918
      %927 = vst.msk [vmem:[%s706 + $0x18] sm:$0xff] %vm432, %v919
      %928 = vst.msk [vmem:[%s706 + $0x20] sm:$0xff] %vm432, %v920
      %929 = vst.msk [vmem:[%s706 + $0x28] sm:$0xff] %vm432, %v921
      %930 = vst.msk [vmem:[%s706 + $0x30] sm:$0xff] %vm432, %v922
      %931 = vst.msk [vmem:[%s706 + $0x38] sm:$0xff] %vm432, %v923
      %p932 = scmp.lt.s32.totalorder %s20, 1
      %s933 = scalar_select %p932, %s20, 1
      %p934 = scmp.lt.s32.totalorder %s22, 0
      %s935 = scalar_select %p934, %s22, 0
      %p936 = scmp.lt.s32.totalorder %s21, 0
      %s937 = scalar_select %p936, %s21, 0
      %s938 = sadd.s32 %s937, %s935
      %s939 = sadd.s32 %s938, %s933
      %s940 = smul.addr %s939, 8
      %s941 = scalar_lea.vmem %s4, %s940
      // Predicated region
      $region41: #{path_rwkv_forward.32} parent=35 // pred_check
        %p942 = pneg %p172
      $region42: #{path_rwkv_forward.32} parent=35 // pred_check_branch
        %944 = sbr.rel (%p942) target = $region44
      $region43: #{path_rwkv_forward.32} parent=35 // pred_region
        _
      $region44: #{path_rwkv_forward.32} parent=35 // pred_fallthru
        _
    $region36: #{path_rwkv_forward.32} parent=5 // pred_fallthru
      _
    %p945 = scmp.le.s32.totalorder 2, %s10
    // Predicated region
    $region45: #{path_rwkv_forward.32} parent=5 // pred_check
      %p946 = pneg %p945
    $region46: #{path_rwkv_forward.32} parent=5 // pred_check_branch
      %948 = sbr.rel (%p946) target = $region48
    $region47: #{path_rwkv_forward.32} parent=5 // pred_region
      %s949 = ssub.s32 %s10, 2
      // Predicated region
      $region49: #{path_rwkv_forward.32} parent=47 // pred_check
        %p950 = pneg %p178
      $region50: #{path_rwkv_forward.32} parent=47 // pred_check_branch
        %952 = sbr.rel (%p950) target = $region52
      $region51: #{path_rwkv_forward.32} parent=47 // pred_region
        %p953 = scmp.lt.s32.totalorder %s23, 1
        %s954 = scalar_select %p953, %s23, 1
        %p955 = scmp.lt.s32.totalorder %s25, 0
        %s956 = scalar_select %p955, %s25, 0
        %p957 = scmp.lt.s32.totalorder %s24, 0
        %s958 = scalar_select %p957, %s24, 0
        %s959 = sadd.s32 %s958, %s956
        %s960 = sadd.s32 %s959, %s954
        %s961 = smul.addr %s960, 8
        %s962 = scalar_lea.vmem %s4, %s961
      $region52: #{path_rwkv_forward.32} parent=47 // pred_fallthru
        _
    $region48: #{path_rwkv_forward.32} parent=5 // pred_fallthru
      _
  $region6: #{path_rwkv_forward.32} parent=0 // loop_footer
    %s14 = sadd.s32 1, %s10
  $region7: #{path_rwkv_forward.32} parent=0 // loop_footer_branch
    %9 = sbr.rel target = $region3
  $region8: #{path_rwkv_forward.32} parent=0 // loop_exit
    _

// kernel: path_rwkv_forward.34
$region0: #{path_rwkv_forward.34}
  #allocation0 [shape = 'u32[]', space=smem, size = 0x4, offset = 0x4, fixed_abs, tag = 'smem constant byte address 0x4 - core index']
  #allocation1 [shape = 'u32[72,128]{1,0:T(1,128)}', space=vmem, size = 0x9000, scoped, tag = 'internal scratch']
  %s0 = inlined_call_operand.vmem [shape: bf16[16,128], index: 0, kind: input, shape index: {}]
  %s1 = inlined_call_operand.vmem [shape: bf16[16,128], index: 1, kind: input, shape index: {}]
  %s2 = inlined_call_operand.hbm [shape: bf16[128,128], index: 2, kind: input, shape index: {}]
  %s3 = inlined_call_operand.vmem [shape: f32[16,128], index: 3, kind: output, shape index: {}]
  %s4 = sld [smem:[#allocation0]]
  $region26: #{path_rwkv_forward.34} parent=0
    _
  %s6 = ssub.s32 1, %s4
  %s7 = scalar_select 0, %s6, %s4
  $region1: #{path_rwkv_forward.34} parent=0
    #allocation2 [shape = 'u8[32768]{0}', space=vmem, size = 0x8000, scoped, tag = 'input window, operand 2, single buffered']
    #allocation3 [shape = 's32[1]{0}', space=sflag, size = 0x4, scoped, tag = 'scoped memory for path_rwkv_forward.34']
    %8 = vsyncpa [#allocation3], 0
    // Predicated region
    $region2: #{path_rwkv_forward.34} parent=1 // pred_check
      _
    $region3: #{path_rwkv_forward.34} parent=1 // pred_check_branch
      %10 = sbr.rel (0) target = $region5
    $region4: #{path_rwkv_forward.34} parent=1 // pred_region
      _
    $region5: #{path_rwkv_forward.34} parent=1 // pred_fallthru
      _
    // Predicated region
    $region6: #{path_rwkv_forward.34} parent=1 // pred_check
      _
    $region7: #{path_rwkv_forward.34} parent=1 // pred_check_branch
      %12 = sbr.rel (0) target = $region9
    $region8: #{path_rwkv_forward.34} parent=1 // pred_region
      _
    $region9: #{path_rwkv_forward.34} parent=1 // pred_fallthru
      _
    // Predicated region
    $region10: #{path_rwkv_forward.34} parent=1 // pred_check
      _
    $region11: #{path_rwkv_forward.34} parent=1 // pred_check_branch
      %14 = sbr.rel (0) target = $region13
    $region12: #{path_rwkv_forward.34} parent=1 // pred_region
      %16 = vsyncadd [#allocation3], 0
      %s17 = sshll.u32 %s2, 4
      %s18 = int_to_ptr.hbm [resolvable:$true] %s17
      %s19 = sshll.u32 [#allocation2], 4
      %s20 = int_to_ptr.vmem [resolvable:$true] %s19
      %25 = dma.hbm_to_vmem [thread:$0]  %s18, 1024, %s20, [#allocation3], 64, 64, 4
    $region13: #{path_rwkv_forward.34} parent=1 // pred_fallthru
      _
    // Predicated region
    $region14: #{path_rwkv_forward.34} parent=1 // pred_check
      _
    $region15: #{path_rwkv_forward.34} parent=1 // pred_check_branch
      %27 = sbr.rel (0) target = $region17
    $region16: #{path_rwkv_forward.34} parent=1 // pred_region
      %29 = dma.done [#allocation3], 1024
    $region17: #{path_rwkv_forward.34} parent=1 // pred_fallthru
      _
    %v30 = vld [vmem:[%s0] sm:$0xf]
    %v31 = vld [vmem:[%s0 + $0x4] sm:$0xf]
    %v32 = vld [vmem:[%s1] sm:$0xf]
    %v33 = vld [vmem:[%s1 + $0x4] sm:$0xf]
    %v34 = vunpack.c.l.bf16 %v30
    %v35 = vunpack.c.l.bf16 %v31
    %v36 = vunpack.c.l.bf16 %v32
    %v37 = vunpack.c.l.bf16 %v33
    %v38 = vmul.f32 %v34, %v36
    %v39 = vmul.f32 %v35, %v37
    %v40 = vpack.c.bf16 %v39, %v38
    %v41 = vld [vmem:[#allocation2] sm:$0xf]
    %v42 = vld [vmem:[#allocation2 + $0x4] sm:$0xf]
    %v43 = vld [vmem:[#allocation2 + $0x8] sm:$0xf]
    %v44 = vld [vmem:[#allocation2 + $0xc] sm:$0xf]
    %v45 = vld [vmem:[#allocation2 + $0x10] sm:$0xf]
    %v46 = vld [vmem:[#allocation2 + $0x14] sm:$0xf]
    %v47 = vld [vmem:[#allocation2 + $0x18] sm:$0xf]
    %v48 = vld [vmem:[#allocation2 + $0x1c] sm:$0xf]
    %v49 = vld [vmem:[#allocation2 + $0x20] sm:$0xf]
    %v50 = vld [vmem:[#allocation2 + $0x24] sm:$0xf]
    %v51 = vld [vmem:[#allocation2 + $0x28] sm:$0xf]
    %v52 = vld [vmem:[#allocation2 + $0x2c] sm:$0xf]
    %v53 = vld [vmem:[#allocation2 + $0x30] sm:$0xf]
    %v54 = vld [vmem:[#allocation2 + $0x34] sm:$0xf]
    %v55 = vld [vmem:[#allocation2 + $0x38] sm:$0xf]
    %v56 = vld [vmem:[#allocation2 + $0x3c] sm:$0xf]
    %v73 = vunpack.c.l.b16 %v41
    %v74 = vunpack.c.l.b16 %v42
    %v75 = vunpack.c.l.b16 %v43
    %v76 = vunpack.c.l.b16 %v44
    %v77 = vunpack.c.l.b16 %v45
    %v78 = vunpack.c.l.b16 %v46
    %v79 = vunpack.c.l.b16 %v47
    %v80 = vunpack.c.l.b16 %v48
    %v81 = vunpack.c.l.b16 %v49
    %v82 = vunpack.c.l.b16 %v50
    %v83 = vunpack.c.l.b16 %v51
    %v84 = vunpack.c.l.b16 %v52
    %v85 = vunpack.c.l.b16 %v53
    %v86 = vunpack.c.l.b16 %v54
    %v87 = vunpack.c.l.b16 %v55
    %v88 = vunpack.c.l.b16 %v56
    %v89 = vpack.c.b16 %v74, %v73
    %v90 = vpack.c.b16 %v76, %v75
    %v91 = vpack.c.b16 %v78, %v77
    %v92 = vpack.c.b16 %v80, %v79
    %v93 = vpack.c.b16 %v82, %v81
    %v94 = vpack.c.b16 %v84, %v83
    %v95 = vpack.c.b16 %v86, %v85
    %v96 = vpack.c.b16 %v88, %v87
    %105 = vmatpush.bf16.msra.mxu0 %v96
    %106 = vmatpush.bf16.msra.mxu0 %v95
    %107 = vmatpush.bf16.msra.mxu0 %v94
    %108 = vmatpush.bf16.msra.mxu0 %v93
    %109 = vmatpush.bf16.msra.mxu0 %v92
    %110 = vmatpush.bf16.msra.mxu0 %v91
    %111 = vmatpush.bf16.msra.mxu0 %v90
    %112 = vmatpush.bf16.msra.mxu0 %v89
    %113 = vmatmul.bf16.gmra.mxu0 %v40
    %v114 = vpop.f32.mrf.mxu0
    %v115 = vadd.f32 0.0, %v114
    %v116 = vpop.f32.mrf.mxu0
    %v117 = vadd.f32 0.0, %v116
    %118 = vdwg.mxu0
    %119 = vst [vmem:[%s3] sm:$0xff] %v115
    %120 = vst [vmem:[%s3 + $0x8] sm:$0xff] %v117
    // Predicated region
    $region18: #{path_rwkv_forward.34} parent=1 // pred_check
      _
    $region19: #{path_rwkv_forward.34} parent=1 // pred_check_branch
      %122 = sbr.rel (0) target = $region21
    $region20: #{path_rwkv_forward.34} parent=1 // pred_region
      _
    $region21: #{path_rwkv_forward.34} parent=1 // pred_fallthru
      _
    // Predicated region
    $region22: #{path_rwkv_forward.34} parent=1 // pred_check
      _
    $region23: #{path_rwkv_forward.34} parent=1 // pred_check_branch
      %124 = sbr.rel (0) target = $region25
    $region24: #{path_rwkv_forward.34} parent=1 // pred_region
      _
    $region25: #{path_rwkv_forward.34} parent=1 // pred_fallthru
      _
    %125 = vsyncpa [#allocation3], 1

// kernel: path_rwkv_forward.33
$region0: #{path_rwkv_forward.33}
  #allocation0 [shape = 'u32[]', space=smem, size = 0x4, offset = 0x4, fixed_abs, tag = 'smem constant byte address 0x4 - core index']
  #allocation1 [shape = 'u32[72,128]{1,0:T(1,128)}', space=vmem, size = 0x9000, scoped, tag = 'internal scratch']
  %s0 = inlined_call_operand.vmem [shape: f32[16,128], index: 0, kind: input, shape index: {}]
  %s1 = inlined_call_operand.vmem [shape: f32[128,2], index: 1, kind: input, shape index: {}]
  %s2 = inlined_call_operand.vmem [shape: f32[1,128], index: 2, kind: input, shape index: {}]
  %s3 = inlined_call_operand.vmem [shape: f32[1,128], index: 3, kind: input, shape index: {}]
  %s4 = inlined_call_operand.vmem [shape: bf16[16,128], index: 4, kind: output, shape index: {}]
  %s5 = sld [smem:[#allocation0]]
  $region26: #{path_rwkv_forward.33} parent=0
    _
  %s7 = ssub.s32 1, %s5
  %s8 = scalar_select 0, %s7, %s5
  // Predicated region
  $region2: #{path_rwkv_forward.33} parent=0 // pred_check
    _
  $region3: #{path_rwkv_forward.33} parent=0 // pred_check_branch
    %10 = sbr.rel (0) target = $region5
  $region4: #{path_rwkv_forward.33} parent=0 // pred_region
    _
  $region5: #{path_rwkv_forward.33} parent=0 // pred_fallthru
    _
  // Predicated region
  $region6: #{path_rwkv_forward.33} parent=0 // pred_check
    _
  $region7: #{path_rwkv_forward.33} parent=0 // pred_check_branch
    %12 = sbr.rel (0) target = $region9
  $region8: #{path_rwkv_forward.33} parent=0 // pred_region
    _
  $region9: #{path_rwkv_forward.33} parent=0 // pred_fallthru
    _
  // Predicated region
  $region10: #{path_rwkv_forward.33} parent=0 // pred_check
    _
  $region11: #{path_rwkv_forward.33} parent=0 // pred_check_branch
    %14 = sbr.rel (0) target = $region13
  $region12: #{path_rwkv_forward.33} parent=0 // pred_region
    _
  $region13: #{path_rwkv_forward.33} parent=0 // pred_fallthru
    _
  // Predicated region
  $region14: #{path_rwkv_forward.33} parent=0 // pred_check
    _
  $region15: #{path_rwkv_forward.33} parent=0 // pred_check_branch
    %16 = sbr.rel (0) target = $region17
  $region16: #{path_rwkv_forward.33} parent=0 // pred_region
    _
  $region17: #{path_rwkv_forward.33} parent=0 // pred_fallthru
    _
  %v17 = vld [vmem:[%s0] sm:$0xff]
  %v18 = vld [vmem:[%s0 + $0x8] sm:$0xff]
  %v19 = vld [vmem:[%s1] sm:$0xff]
  %v20 = vld [vmem:[%s1 + $0x8] sm:$0xff]
  %v21 = vld [vmem:[%s1 + $0x10] sm:$0xff]
  %v22 = vld [vmem:[%s1 + $0x18] sm:$0xff]
  %v23 = vld [vmem:[%s1 + $0x20] sm:$0xff]
  %v24 = vld [vmem:[%s1 + $0x28] sm:$0xff]
  %v25 = vld [vmem:[%s1 + $0x30] sm:$0xff]
  %v26 = vld [vmem:[%s1 + $0x38] sm:$0xff]
  %v27 = vld [vmem:[%s1 + $0x40] sm:$0xff]
  %v28 = vld [vmem:[%s1 + $0x48] sm:$0xff]
  %v29 = vld [vmem:[%s1 + $0x50] sm:$0xff]
  %v30 = vld [vmem:[%s1 + $0x58] sm:$0xff]
  %v31 = vld [vmem:[%s1 + $0x60] sm:$0xff]
  %v32 = vld [vmem:[%s1 + $0x68] sm:$0xff]
  %v33 = vld [vmem:[%s1 + $0x70] sm:$0xff]
  %v34 = vld [vmem:[%s1 + $0x78] sm:$0xff]
  %35 = vmatpush.msra.mxu0 %v34
  %36 = vmatpush.msra.mxu0 %v33
  %37 = vmatpush.msra.mxu0 %v32
  %38 = vmatpush.msra.mxu0 %v31
  %39 = vmatpush.msra.mxu0 %v30
  %40 = vmatpush.msra.mxu0 %v29
  %41 = vmatpush.msra.mxu0 %v28
  %42 = vmatpush.msra.mxu0 %v27
  %43 = vmatpush.msra.mxu0 %v26
  %44 = vmatpush.msra.mxu0 %v25
  %45 = vmatpush.msra.mxu0 %v24
  %46 = vmatpush.msra.mxu0 %v23
  %47 = vmatpush.msra.mxu0 %v22
  %48 = vmatpush.msra.mxu0 %v21
  %49 = vmatpush.msra.mxu0 %v20
  %50 = vmatpush.msra.mxu0 %v19
  %51 = vmatmul.f32.gmra.mxu0 %v17
  %v52 = vpop.f32.mrf.mxu0
  %v53 = vadd.f32 0.0, %v52
  %54 = vmatmul.f32.gmra.mxu0 %v18
  %v55 = vpop.f32.mrf.mxu0
  %v56 = vadd.f32 0.0, %v55
  %57 = vdwg.mxu0
  %v58 = vmul.f32 %v53, 0.015625
  %v59 = vmul.f32 %v56, 0.015625
  %v60 = vmul.f32 %v17, %v17
  %v61 = vmul.f32 %v18, %v18
  %62 = vmatpush.msra.mxu0 %v34
  %63 = vmatpush.msra.mxu0 %v33
  %64 = vmatpush.msra.mxu0 %v32
  %65 = vmatpush.msra.mxu0 %v31
  %66 = vmatpush.msra.mxu0 %v30
  %67 = vmatpush.msra.mxu0 %v29
  %68 = vmatpush.msra.mxu0 %v28
  %69 = vmatpush.msra.mxu0 %v27
  %70 = vmatpush.msra.mxu0 %v26
  %71 = vmatpush.msra.mxu0 %v25
  %72 = vmatpush.msra.mxu0 %v24
  %73 = vmatpush.msra.mxu0 %v23
  %74 = vmatpush.msra.mxu0 %v22
  %75 = vmatpush.msra.mxu0 %v21
  %76 = vmatpush.msra.mxu0 %v20
  %77 = vmatpush.msra.mxu0 %v19
  %78 = vmatmul.f32.gmra.mxu0 %v60
  %v79 = vpop.f32.mrf.mxu0
  %v80 = vadd.f32 0.0, %v79
  %81 = vmatmul.f32.gmra.mxu0 %v61
  %v82 = vpop.f32.mrf.mxu0
  %v83 = vadd.f32 0.0, %v82
  %84 = vdwg.mxu0
  %v85 = vmul.f32 %v80, 0.015625
  %v86 = vmul.f32 %v83, 0.015625
  %vm87 = vcmask 15360
  %v89 = vsel %vm87, %v58, 0
  %v92 = vsel %vm87, %v59, 0
  %v95 = vsel %vm87, %v19, 0
  %v98 = vsel %vm87, %v20, 0
  %v101 = vsel %vm87, %v21, 0
  %v104 = vsel %vm87, %v22, 0
  %v107 = vsel %vm87, %v23, 0
  %v110 = vsel %vm87, %v24, 0
  %v113 = vsel %vm87, %v25, 0
  %v116 = vsel %vm87, %v26, 0
  %v119 = vsel %vm87, %v27, 0
  %v122 = vsel %vm87, %v28, 0
  %v125 = vsel %vm87, %v29, 0
  %v128 = vsel %vm87, %v30, 0
  %v131 = vsel %vm87, %v31, 0
  %v134 = vsel %vm87, %v32, 0
  %v137 = vsel %vm87, %v33, 0
  %v140 = vsel %vm87, %v34, 0
  %142 = vmatpush.xpose.msra.mxu0 %v140
  %143 = vmatpush.xpose.msra.mxu0 %v137
  %144 = vmatpush.xpose.msra.mxu0 %v134
  %145 = vmatpush.xpose.msra.mxu0 %v131
  %146 = vmatpush.xpose.msra.mxu0 %v128
  %147 = vmatpush.xpose.msra.mxu0 %v125
  %148 = vmatpush.xpose.msra.mxu0 %v122
  %149 = vmatpush.xpose.msra.mxu0 %v119
  %150 = vmatpush.xpose.msra.mxu0 %v116
  %151 = vmatpush.xpose.msra.mxu0 %v113
  %152 = vmatpush.xpose.msra.mxu0 %v110
  %153 = vmatpush.xpose.msra.mxu0 %v107
  %154 = vmatpush.xpose.msra.mxu0 %v104
  %155 = vmatpush.xpose.msra.mxu0 %v101
  %156 = vmatpush.xpose.msra.mxu0 %v98
  %157 = vmatpush.xpose.msra.mxu0 %v95
  %158 = vmatmul.f32.gmra.mxu0 %v89
  %v159 = vpop.f32.mrf.mxu0
  %v160 = vadd.f32 0.0, %v159
  %161 = vmatmul.f32.gmra.mxu0 %v92
  %v162 = vpop.f32.mrf.mxu0
  %v163 = vadd.f32 0.0, %v162
  %164 = vdwg.mxu0
  %v166 = vsel %vm87, %v85, 0
  %v169 = vsel %vm87, %v86, 0
  %171 = vmatpush.xpose.msra.mxu0 %v140
  %172 = vmatpush.xpose.msra.mxu0 %v137
  %173 = vmatpush.xpose.msra.mxu0 %v134
  %174 = vmatpush.xpose.msra.mxu0 %v131
  %175 = vmatpush.xpose.msra.mxu0 %v128
  %176 = vmatpush.xpose.msra.mxu0 %v125
  %177 = vmatpush.xpose.msra.mxu0 %v122
  %178 = vmatpush.xpose.msra.mxu0 %v119
  %179 = vmatpush.xpose.msra.mxu0 %v116
  %180 = vmatpush.xpose.msra.mxu0 %v113
  %181 = vmatpush.xpose.msra.mxu0 %v110
  %182 = vmatpush.xpose.msra.mxu0 %v107
  %183 = vmatpush.xpose.msra.mxu0 %v104
  %184 = vmatpush.xpose.msra.mxu0 %v101
  %185 = vmatpush.xpose.msra.mxu0 %v98
  %186 = vmatpush.xpose.msra.mxu0 %v95
  %187 = vmatmul.f32.gmra.mxu0 %v166
  %v188 = vpop.f32.mrf.mxu0
  %v189 = vadd.f32 0.0, %v188
  %190 = vmatmul.f32.gmra.mxu0 %v169
  %v191 = vpop.f32.mrf.mxu0
  %v192 = vadd.f32 0.0, %v191
  %193 = vdwg.mxu0
  %v194 = vmul.f32 %v160, %v160
  %v195 = vmul.f32 %v163, %v163
  %v196 = vsub.f32 %v189, %v194
  %v197 = vsub.f32 %v192, %v195
  %v198 = vmax.f32 %v196, 0.0
  %v199 = vmax.f32 %v197, 0.0
  %v200 = vsub.f32 %v17, %v160
  %v201 = vsub.f32 %v18, %v163
  %v202 = vadd.f32 %v198, 2e-05
  %v203 = vadd.f32 %v199, 2e-05
  %v204 = vrsqrt.pop %v202
  %v205 = vmul.f32 %v204, %v202
  %v206 = vmul.f32 %v205, %v204
  %v207 = vmul.f32 0.5, %v206
  %v208 = vsub.f32 1.5, %v207
  %v209 = vmul.f32 %v204, %v208
  %vm210 = vweird.f32 %v202
  %vm211 = vweird.f32 %v204
  %vm212 = vmor %vm210, %vm211
  %v213 = vsel %vm212, %v204, %v209
  %v214 = vrsqrt.pop %v203
  %v215 = vmul.f32 %v214, %v203
  %v216 = vmul.f32 %v215, %v214
  %v217 = vmul.f32 0.5, %v216
  %v218 = vsub.f32 1.5, %v217
  %v219 = vmul.f32 %v214, %v218
  %vm220 = vweird.f32 %v203
  %vm221 = vweird.f32 %v214
  %vm222 = vmor %vm220, %vm221
  %v223 = vsel %vm222, %v214, %v219
  %v224 = vmul.f32 %v200, %v213
  %v225 = vmul.f32 %v201, %v223
  %v226 = vld [vmem:[%s2] sm:$0x1]
  %v228 = vperm.slane %v226, 0
  %v230 = vmul.f32 %v224, %v228
  %v231 = vmul.f32 %v225, %v228
  %v232 = vld [vmem:[%s3] sm:$0x1]
  %v234 = vperm.slane %v232, 0
  %v236 = vadd.f32 %v230, %v234
  %v237 = vadd.f32 %v231, %v234
  %v238 = vpack.c.bf16 %v236, %v236
  %v239 = vpack.c.bf16 %v237, %v237
  %240 = vst [vmem:[%s4] sm:$0xf] %v238
  %241 = vst [vmem:[%s4 + $0x4] sm:$0xf] %v239
  // Predicated region
  $region18: #{path_rwkv_forward.33} parent=0 // pred_check
    _
  $region19: #{path_rwkv_forward.33} parent=0 // pred_check_branch
    %243 = sbr.rel (0) target = $region21
  $region20: #{path_rwkv_forward.33} parent=0 // pred_region
    _
  $region21: #{path_rwkv_forward.33} parent=0 // pred_fallthru
    _
  // Predicated region
  $region22: #{path_rwkv_forward.33} parent=0 // pred_check
    _
  $region23: #{path_rwkv_forward.33} parent=0 // pred_check_branch
    %245 = sbr.rel (0) target = $region25
  $region24: #{path_rwkv_forward.33} parent=0 // pred_region
    _
  $region25: #{path_rwkv_forward.33} parent=0 // pred_fallthru
    _

// kernel: path_rwkv_forward.31
$region0: #{path_rwkv_forward.31}
  #allocation0 [shape = 'u32[]', space=smem, size = 0x4, offset = 0x4, fixed_abs, tag = 'smem constant byte address 0x4 - core index']
  #allocation1 [shape = 'u32[72,128]{1,0:T(1,128)}', space=vmem, size = 0x9000, scoped, tag = 'internal scratch']
  %s0 = inlined_call_operand.vmem [shape: bf16[16,128], index: 0, kind: input, shape index: {}]
  %s1 = inlined_call_operand.vmem [shape: bf16[128,160], index: 1, kind: input, shape index: {}]
  %s2 = inlined_call_operand.vmem [shape: bf16[160,128], index: 2, kind: input, shape index: {}]
  %s3 = inlined_call_operand.vmem [shape: bf16[16,128], index: 3, kind: output, shape index: {}]
  %s4 = sld [smem:[#allocation0]]
  $region22: #{path_rwkv_forward.31} parent=0
    _
  %s6 = ssub.s32 1, %s4
  %s7 = scalar_select 0, %s6, %s4
  // Predicated region
  $region2: #{path_rwkv_forward.31} parent=0 // pred_check
    _
  $region3: #{path_rwkv_forward.31} parent=0 // pred_check_branch
    %9 = sbr.rel (0) target = $region5
  $region4: #{path_rwkv_forward.31} parent=0 // pred_region
    _
  $region5: #{path_rwkv_forward.31} parent=0 // pred_fallthru
    _
  // Predicated region
  $region6: #{path_rwkv_forward.31} parent=0 // pred_check
    _
  $region7: #{path_rwkv_forward.31} parent=0 // pred_check_branch
    %11 = sbr.rel (0) target = $region9
  $region8: #{path_rwkv_forward.31} parent=0 // pred_region
    _
  $region9: #{path_rwkv_forward.31} parent=0 // pred_fallthru
    _
  // Predicated region
  $region10: #{path_rwkv_forward.31} parent=0 // pred_check
    _
  $region11: #{path_rwkv_forward.31} parent=0 // pred_check_branch
    %13 = sbr.rel (0) target = $region13
  $region12: #{path_rwkv_forward.31} parent=0 // pred_region
    _
  $region13: #{path_rwkv_forward.31} parent=0 // pred_fallthru
    _
  %v15 = vld [vmem:[%s0] sm:$0xf]
  %v16 = vld [vmem:[%s0 + $0x4] sm:$0xf]
  %v17 = vld [vmem:[%s1] sm:$0xff]
  %v18 = vld [vmem:[%s1 + $0x8] sm:$0xff]
  %v19 = vld [vmem:[%s1 + $0x10] sm:$0xff]
  %v20 = vld [vmem:[%s1 + $0x18] sm:$0xff]
  %v21 = vld [vmem:[%s1 + $0x20] sm:$0xff]
  %v22 = vld [vmem:[%s1 + $0x28] sm:$0xff]
  %v23 = vld [vmem:[%s1 + $0x30] sm:$0xff]
  %v24 = vld [vmem:[%s1 + $0x38] sm:$0xff]
  %v25 = vld [vmem:[%s1 + $0x40] sm:$0xff]
  %v26 = vld [vmem:[%s1 + $0x48] sm:$0xff]
  %v27 = vld [vmem:[%s1 + $0x50] sm:$0xff]
  %v28 = vld [vmem:[%s1 + $0x58] sm:$0xff]
  %v29 = vld [vmem:[%s1 + $0x60] sm:$0xff]
  %v30 = vld [vmem:[%s1 + $0x68] sm:$0xff]
  %v31 = vld [vmem:[%s1 + $0x70] sm:$0xff]
  %v32 = vld [vmem:[%s1 + $0x78] sm:$0xff]
  %v35 = vunpack.c.l.b16 %v15
  %v36 = vunpack.c.l.b16 %v16
  %v37 = vpack.c.b16 %v36, %v35
  %v55 = vunpack.c.l.b16 %v17
  %v56 = vunpack.c.h.b16 %v17
  %v57 = vunpack.c.l.b16 %v18
  %v58 = vunpack.c.h.b16 %v18
  %v59 = vunpack.c.l.b16 %v19
  %v60 = vunpack.c.h.b16 %v19
  %v61 = vunpack.c.l.b16 %v20
  %v62 = vunpack.c.h.b16 %v20
  %v63 = vunpack.c.l.b16 %v21
  %v64 = vunpack.c.h.b16 %v21
  %v65 = vunpack.c.l.b16 %v22
  %v66 = vunpack.c.h.b16 %v22
  %v67 = vunpack.c.l.b16 %v23
  %v68 = vunpack.c.h.b16 %v23
  %v69 = vunpack.c.l.b16 %v24
  %v70 = vunpack.c.h.b16 %v24
  %v71 = vunpack.c.l.b16 %v25
  %v72 = vunpack.c.h.b16 %v25
  %v73 = vunpack.c.l.b16 %v26
  %v74 = vunpack.c.h.b16 %v26
  %v75 = vunpack.c.l.b16 %v27
  %v76 = vunpack.c.h.b16 %v27
  %v77 = vunpack.c.l.b16 %v28
  %v78 = vunpack.c.h.b16 %v28
  %v79 = vunpack.c.l.b16 %v29
  %v80 = vunpack.c.h.b16 %v29
  %v81 = vunpack.c.l.b16 %v30
  %v82 = vunpack.c.h.b16 %v30
  %v83 = vunpack.c.l.b16 %v31
  %v84 = vunpack.c.h.b16 %v31
  %v85 = vunpack.c.l.b16 %v32
  %v86 = vunpack.c.h.b16 %v32
  %v87 = vpack.c.b16 %v57, %v55
  %v88 = vpack.c.b16 %v58, %v56
  %v89 = vpack.c.b16 %v61, %v59
  %v90 = vpack.c.b16 %v62, %v60
  %v91 = vpack.c.b16 %v65, %v63
  %v92 = vpack.c.b16 %v66, %v64
  %v93 = vpack.c.b16 %v69, %v67
  %v94 = vpack.c.b16 %v70, %v68
  %v95 = vpack.c.b16 %v73, %v71
  %v96 = vpack.c.b16 %v74, %v72
  %v97 = vpack.c.b16 %v77, %v75
  %v98 = vpack.c.b16 %v78, %v76
  %v99 = vpack.c.b16 %v81, %v79
  %v100 = vpack.c.b16 %v82, %v80
  %v101 = vpack.c.b16 %v85, %v83
  %v102 = vpack.c.b16 %v86, %v84
  %119 = vmatpush.bf16.msra.mxu0 %v101
  %120 = vmatpush.bf16.msra.mxu0 %v99
  %121 = vmatpush.bf16.msra.mxu0 %v97
  %122 = vmatpush.bf16.msra.mxu0 %v95
  %123 = vmatpush.bf16.msra.mxu0 %v93
  %124 = vmatpush.bf16.msra.mxu0 %v91
  %125 = vmatpush.bf16.msra.mxu0 %v89
  %126 = vmatpush.bf16.msra.mxu0 %v87
  %127 = vmatmul.bf16.gmra.mxu0 %v37
  %v128 = vpop.f32.mrf.mxu0
  %v129 = vadd.f32 0.0, %v128
  %v130 = vpop.f32.mrf.mxu0
  %v131 = vadd.f32 0.0, %v130
  %132 = vdwg.mxu0
  %133 = vmatpush.bf16.msra.mxu0 %v102
  %134 = vmatpush.bf16.msra.mxu0 %v100
  %135 = vmatpush.bf16.msra.mxu0 %v98
  %136 = vmatpush.bf16.msra.mxu0 %v96
  %137 = vmatpush.bf16.msra.mxu0 %v94
  %138 = vmatpush.bf16.msra.mxu0 %v92
  %139 = vmatpush.bf16.msra.mxu0 %v90
  %140 = vmatpush.bf16.msra.mxu0 %v88
  %141 = vmatmul.bf16.gmra.mxu0 %v37
  %v142 = vpop.f32.mrf.mxu0
  %v143 = vadd.f32 0.0, %v142
  %v144 = vpop.f32.mrf.mxu0
  %v145 = vadd.f32 0.0, %v144
  %146 = vdwg.mxu0
  %v147 = vtanh.pop %v129
  %v148 = vtanh.pop %v143
  %v149 = vtanh.pop %v131
  %v150 = vtanh.pop %v145
  %v151 = vpack.c.bf16 %v149, %v147
  %v152 = vpack.c.bf16 %v150, %v148
  %v153 = vld [vmem:[%s2] sm:$0xf]
  %v154 = vld [vmem:[%s2 + $0x4] sm:$0xf]
  %v155 = vld [vmem:[%s2 + $0x8] sm:$0xf]
  %v156 = vld [vmem:[%s2 + $0xc] sm:$0xf]
  %v157 = vld [vmem:[%s2 + $0x10] sm:$0xf]
  %v158 = vld [vmem:[%s2 + $0x14] sm:$0xf]
  %v159 = vld [vmem:[%s2 + $0x18] sm:$0xf]
  %v160 = vld [vmem:[%s2 + $0x1c] sm:$0xf]
  %v161 = vld [vmem:[%s2 + $0x20] sm:$0xf]
  %v162 = vld [vmem:[%s2 + $0x24] sm:$0xf]
  %v163 = vld [vmem:[%s2 + $0x28] sm:$0xf]
  %v164 = vld [vmem:[%s2 + $0x2c] sm:$0xf]
  %v165 = vld [vmem:[%s2 + $0x30] sm:$0xf]
  %v166 = vld [vmem:[%s2 + $0x34] sm:$0xf]
  %v167 = vld [vmem:[%s2 + $0x38] sm:$0xf]
  %v168 = vld [vmem:[%s2 + $0x3c] sm:$0xf]
  %v169 = vld [vmem:[%s2 + $0x40] sm:$0xf]
  %v170 = vld [vmem:[%s2 + $0x44] sm:$0xf]
  %v171 = vld [vmem:[%s2 + $0x48] sm:$0xf]
  %v172 = vld [vmem:[%s2 + $0x4c] sm:$0xf]
  %v193 = vunpack.c.l.b16 %v153
  %v194 = vunpack.c.l.b16 %v154
  %v195 = vunpack.c.l.b16 %v155
  %v196 = vunpack.c.l.b16 %v156
  %v197 = vunpack.c.l.b16 %v157
  %v198 = vunpack.c.l.b16 %v158
  %v199 = vunpack.c.l.b16 %v159
  %v200 = vunpack.c.l.b16 %v160
  %v201 = vunpack.c.l.b16 %v161
  %v202 = vunpack.c.l.b16 %v162
  %v203 = vunpack.c.l.b16 %v163
  %v204 = vunpack.c.l.b16 %v164
  %v205 = vunpack.c.l.b16 %v165
  %v206 = vunpack.c.l.b16 %v166
  %v207 = vunpack.c.l.b16 %v167
  %v208 = vunpack.c.l.b16 %v168
  %v209 = vunpack.c.l.b16 %v169
  %v210 = vunpack.c.l.b16 %v170
  %v211 = vunpack.c.l.b16 %v171
  %v212 = vunpack.c.l.b16 %v172
  %v213 = vpack.c.b16 %v194, %v193
  %v214 = vpack.c.b16 %v196, %v195
  %v215 = vpack.c.b16 %v198, %v197
  %v216 = vpack.c.b16 %v200, %v199
  %v217 = vpack.c.b16 %v202, %v201
  %v218 = vpack.c.b16 %v204, %v203
  %v219 = vpack.c.b16 %v206, %v205
  %v220 = vpack.c.b16 %v208, %v207
  %v221 = vpack.c.b16 %v210, %v209
  %v222 = vpack.c.b16 %v212, %v211
  %vm233 = vcmask 261120
  %v235 = vsel %vm233, %v152, 0
  %237 = vmatpush.bf16.msra.mxu0 %v220
  %238 = vmatpush.bf16.msra.mxu0 %v219
  %239 = vmatpush.bf16.msra.mxu0 %v218
  %240 = vmatpush.bf16.msra.mxu0 %v217
  %241 = vmatpush.bf16.msra.mxu0 %v216
  %242 = vmatpush.bf16.msra.mxu0 %v215
  %243 = vmatpush.bf16.msra.mxu0 %v214
  %244 = vmatpush.bf16.msra.mxu0 %v213
  %245 = vmatmul.bf16.gmra.mxu0 %v151
  %v246 = vpop.f32.mrf.mxu0
  %v247 = vadd.f32 0.0, %v246
  %v248 = vpop.f32.mrf.mxu0
  %v249 = vadd.f32 0.0, %v248
  %250 = vdwg.mxu0
  %251 = vmatpush.bf16.msra.mxu0 0
  %252 = vmatpush.bf16.msra.mxu0 0
  %253 = vmatpush.bf16.msra.mxu0 0
  %254 = vmatpush.bf16.msra.mxu0 0
  %255 = vmatpush.bf16.msra.mxu0 0
  %256 = vmatpush.bf16.msra.mxu0 0
  %257 = vmatpush.bf16.msra.mxu0 %v222
  %258 = vmatpush.bf16.msra.mxu0 %v221
  %259 = vmatmul.bf16.gmra.mxu0 %v235
  %v260 = vpop.f32.mrf.mxu0
  %v261 = vadd.f32 %v247, %v260
  %v262 = vpop.f32.mrf.mxu0
  %v263 = vadd.f32 %v249, %v262
  %264 = vdwg.mxu0
  %v265 = vpack.c.bf16 %v261, %v261
  %v266 = vpack.c.bf16 %v263, %v263
  %267 = vst [vmem:[%s3] sm:$0xf] %v265
  %268 = vst [vmem:[%s3 + $0x4] sm:$0xf] %v266
  // Predicated region
  $region14: #{path_rwkv_forward.31} parent=0 // pred_check
    _
  $region15: #{path_rwkv_forward.31} parent=0 // pred_check_branch
    %270 = sbr.rel (0) target = $region17
  $region16: #{path_rwkv_forward.31} parent=0 // pred_region
    _
  $region17: #{path_rwkv_forward.31} parent=0 // pred_fallthru
    _
  // Predicated region
  $region18: #{path_rwkv_forward.31} parent=0 // pred_check
    _
  $region19: #{path_rwkv_forward.31} parent=0 // pred_check_branch
    %272 = sbr.rel (0) target = $region21
  $region20: #{path_rwkv_forward.31} parent=0 // pred_region
    _
  $region21: #{path_rwkv_forward.31} parent=0 // pred_fallthru
    _

// kernel: path_rwkv_forward.36
$region0: #{path_rwkv_forward.36}
  #allocation0 [shape = 'u32[]', space=smem, size = 0x4, offset = 0x4, fixed_abs, tag = 'smem constant byte address 0x4 - core index']
  #allocation1 [shape = 'u32[72,128]{1,0:T(1,128)}', space=vmem, size = 0x9000, scoped, tag = 'internal scratch']
  #allocation2 [shape = 'f32[16,128]{1,0:T(8,128)}', space=vmem, size = 0x2000, scoped, tag = 'scratch operand']
  %s0 = inlined_call_operand.vmem [shape: f32[16,128], index: 0, kind: input, shape index: {}]
  %s1 = inlined_call_operand.vmem [shape: bf16[128,512], index: 1, kind: input, shape index: {}]
  %s2 = inlined_call_operand.vmem [shape: bf16[512,128], index: 2, kind: input, shape index: {}]
  %s3 = inlined_call_operand.vmem [shape: f32[16,128], index: 3, kind: output, shape index: {}]
  %s4 = sld [smem:[#allocation0]]
  $region30: #{path_rwkv_forward.36} parent=0
    _
  %s6 = ssub.s32 1, %s4
  %s7 = scalar_select 0, %s6, %s4
  // Predicated region
  $region2: #{path_rwkv_forward.36} parent=0 // pred_check
    _
  $region3: #{path_rwkv_forward.36} parent=0 // pred_check_branch
    %9 = sbr.rel (0) target = $region5
  $region4: #{path_rwkv_forward.36} parent=0 // pred_region
    _
  $region5: #{path_rwkv_forward.36} parent=0 // pred_fallthru
    _
  // Predicated region
  $region6: #{path_rwkv_forward.36} parent=0 // pred_check
    _
  $region7: #{path_rwkv_forward.36} parent=0 // pred_check_branch
    %11 = sbr.rel (0) target = $region9
  $region8: #{path_rwkv_forward.36} parent=0 // pred_region
    _
  $region9: #{path_rwkv_forward.36} parent=0 // pred_fallthru
    _
  // Predicated region
  $region10: #{path_rwkv_forward.36} parent=0 // pred_check
    _
  $region11: #{path_rwkv_forward.36} parent=0 // pred_check_branch
    %13 = sbr.rel (0) target = $region13
  $region12: #{path_rwkv_forward.36} parent=0 // pred_region
    _
  $region13: #{path_rwkv_forward.36} parent=0 // pred_fallthru
    _
  %p14 = scmp.eq.s32.totalorder 0, 0
  // Predicated region
  $region14: #{path_rwkv_forward.36} parent=0 // pred_check
    %p15 = pneg %p14
  $region15: #{path_rwkv_forward.36} parent=0 // pred_check_branch
    %17 = sbr.rel (%p15) target = $region17
  $region16: #{path_rwkv_forward.36} parent=0 // pred_region
    %18 = vst [vmem:[#allocation2] sm:$0xff] 0.0
    %19 = vst [vmem:[#allocation2 + $0x8] sm:$0xff] 0.0
  $region17: #{path_rwkv_forward.36} parent=0 // pred_fallthru
    _
  %v20 = vld [vmem:[%s0] sm:$0xff]
  %v21 = vld [vmem:[%s0 + $0x8] sm:$0xff]
  %v22 = vpack.c.bf16 %v21, %v20
  %v23 = vld [vmem:[%s1] sm:$0xff]
  %v24 = vld [vmem:[%s1 + $0x8] sm:$0xff]
  %v25 = vld [vmem:[%s1 + $0x10] sm:$0xff]
  %v26 = vld [vmem:[%s1 + $0x18] sm:$0xff]
  %v27 = vld [vmem:[%s1 + $0x20] sm:$0xff]
  %v28 = vld [vmem:[%s1 + $0x28] sm:$0xff]
  %v29 = vld [vmem:[%s1 + $0x30] sm:$0xff]
  %v30 = vld [vmem:[%s1 + $0x38] sm:$0xff]
  %v31 = vld [vmem:[%s1 + $0x40] sm:$0xff]
  %v32 = vld [vmem:[%s1 + $0x48] sm:$0xff]
  %v33 = vld [vmem:[%s1 + $0x50] sm:$0xff]
  %v34 = vld [vmem:[%s1 + $0x58] sm:$0xff]
  %v35 = vld [vmem:[%s1 + $0x60] sm:$0xff]
  %v36 = vld [vmem:[%s1 + $0x68] sm:$0xff]
  %v37 = vld [vmem:[%s1 + $0x70] sm:$0xff]
  %v38 = vld [vmem:[%s1 + $0x78] sm:$0xff]
  %v39 = vld [vmem:[%s1 + $0x80] sm:$0xff]
  %v40 = vld [vmem:[%s1 + $0x88] sm:$0xff]
  %v41 = vld [vmem:[%s1 + $0x90] sm:$0xff]
  %v42 = vld [vmem:[%s1 + $0x98] sm:$0xff]
  %v43 = vld [vmem:[%s1 + $0xa0] sm:$0xff]
  %v44 = vld [vmem:[%s1 + $0xa8] sm:$0xff]
  %v45 = vld [vmem:[%s1 + $0xb0] sm:$0xff]
  %v46 = vld [vmem:[%s1 + $0xb8] sm:$0xff]
  %v47 = vld [vmem:[%s1 + $0xc0] sm:$0xff]
  %v48 = vld [vmem:[%s1 + $0xc8] sm:$0xff]
  %v49 = vld [vmem:[%s1 + $0xd0] sm:$0xff]
  %v50 = vld [vmem:[%s1 + $0xd8] sm:$0xff]
  %v51 = vld [vmem:[%s1 + $0xe0] sm:$0xff]
  %v52 = vld [vmem:[%s1 + $0xe8] sm:$0xff]
  %v53 = vld [vmem:[%s1 + $0xf0] sm:$0xff]
  %v54 = vld [vmem:[%s1 + $0xf8] sm:$0xff]
  %v87 = vunpack.c.l.b16 %v23
  %v88 = vunpack.c.h.b16 %v23
  %v89 = vunpack.c.l.b16 %v24
  %v90 = vunpack.c.h.b16 %v24
  %v91 = vunpack.c.l.b16 %v25
  %v92 = vunpack.c.h.b16 %v25
  %v93 = vunpack.c.l.b16 %v26
  %v94 = vunpack.c.h.b16 %v26
  %v95 = vunpack.c.l.b16 %v27
  %v96 = vunpack.c.h.b16 %v27
  %v97 = vunpack.c.l.b16 %v28
  %v98 = vunpack.c.h.b16 %v28
  %v99 = vunpack.c.l.b16 %v29
  %v100 = vunpack.c.h.b16 %v29
  %v101 = vunpack.c.l.b16 %v30
  %v102 = vunpack.c.h.b16 %v30
  %v103 = vunpack.c.l.b16 %v31
  %v104 = vunpack.c.h.b16 %v31
  %v105 = vunpack.c.l.b16 %v32
  %v106 = vunpack.c.h.b16 %v32
  %v107 = vunpack.c.l.b16 %v33
  %v108 = vunpack.c.h.b16 %v33
  %v109 = vunpack.c.l.b16 %v34
  %v110 = vunpack.c.h.b16 %v34
  %v111 = vunpack.c.l.b16 %v35
  %v112 = vunpack.c.h.b16 %v35
  %v113 = vunpack.c.l.b16 %v36
  %v114 = vunpack.c.h.b16 %v36
  %v115 = vunpack.c.l.b16 %v37
  %v116 = vunpack.c.h.b16 %v37
  %v117 = vunpack.c.l.b16 %v38
  %v118 = vunpack.c.h.b16 %v38
  %v119 = vunpack.c.l.b16 %v39
  %v120 = vunpack.c.h.b16 %v39
  %v121 = vunpack.c.l.b16 %v40
  %v122 = vunpack.c.h.b16 %v40
  %v123 = vunpack.c.l.b16 %v41
  %v124 = vunpack.c.h.b16 %v41
  %v125 = vunpack.c.l.b16 %v42
  %v126 = vunpack.c.h.b16 %v42
  %v127 = vunpack.c.l.b16 %v43
  %v128 = vunpack.c.h.b16 %v43
  %v129 = vunpack.c.l.b16 %v44
  %v130 = vunpack.c.h.b16 %v44
  %v131 = vunpack.c.l.b16 %v45
  %v132 = vunpack.c.h.b16 %v45
  %v133 = vunpack.c.l.b16 %v46
  %v134 = vunpack.c.h.b16 %v46
  %v135 = vunpack.c.l.b16 %v47
  %v136 = vunpack.c.h.b16 %v47
  %v137 = vunpack.c.l.b16 %v48
  %v138 = vunpack.c.h.b16 %v48
  %v139 = vunpack.c.l.b16 %v49
  %v140 = vunpack.c.h.b16 %v49
  %v141 = vunpack.c.l.b16 %v50
  %v142 = vunpack.c.h.b16 %v50
  %v143 = vunpack.c.l.b16 %v51
  %v144 = vunpack.c.h.b16 %v51
  %v145 = vunpack.c.l.b16 %v52
  %v146 = vunpack.c.h.b16 %v52
  %v147 = vunpack.c.l.b16 %v53
  %v148 = vunpack.c.h.b16 %v53
  %v149 = vunpack.c.l.b16 %v54
  %v150 = vunpack.c.h.b16 %v54
  %v151 = vpack.c.b16 %v91, %v87
  %v152 = vpack.c.b16 %v92, %v88
  %v153 = vpack.c.b16 %v93, %v89
  %v154 = vpack.c.b16 %v94, %v90
  %v155 = vpack.c.b16 %v99, %v95
  %v156 = vpack.c.b16 %v100, %v96
  %v157 = vpack.c.b16 %v101, %v97
  %v158 = vpack.c.b16 %v102, %v98
  %v159 = vpack.c.b16 %v107, %v103
  %v160 = vpack.c.b16 %v108, %v104
  %v161 = vpack.c.b16 %v109, %v105
  %v162 = vpack.c.b16 %v110, %v106
  %v163 = vpack.c.b16 %v115, %v111
  %v164 = vpack.c.b16 %v116, %v112
  %v165 = vpack.c.b16 %v117, %v113
  %v166 = vpack.c.b16 %v118, %v114
  %v167 = vpack.c.b16 %v123, %v119
  %v168 = vpack.c.b16 %v124, %v120
  %v169 = vpack.c.b16 %v125, %v121
  %v170 = vpack.c.b16 %v126, %v122
  %v171 = vpack.c.b16 %v131, %v127
  %v172 = vpack.c.b16 %v132, %v128
  %v173 = vpack.c.b16 %v133, %v129
  %v174 = vpack.c.b16 %v134, %v130
  %v175 = vpack.c.b16 %v139, %v135
  %v176 = vpack.c.b16 %v140, %v136
  %v177 = vpack.c.b16 %v141, %v137
  %v178 = vpack.c.b16 %v142, %v138
  %v179 = vpack.c.b16 %v147, %v143
  %v180 = vpack.c.b16 %v148, %v144
  %v181 = vpack.c.b16 %v149, %v145
  %v182 = vpack.c.b16 %v150, %v146
  %215 = vmatpush.bf16.msra.mxu0 %v179
  %216 = vmatpush.bf16.msra.mxu0 %v175
  %217 = vmatpush.bf16.msra.mxu0 %v171
  %218 = vmatpush.bf16.msra.mxu0 %v167
  %219 = vmatpush.bf16.msra.mxu0 %v163
  %220 = vmatpush.bf16.msra.mxu0 %v159
  %221 = vmatpush.bf16.msra.mxu0 %v155
  %222 = vmatpush.bf16.msra.mxu0 %v151
  %223 = vmatmul.bf16.gmra.mxu0 %v22
  %v224 = vpop.f32.mrf.mxu0
  %v225 = vadd.f32 0.0, %v224
  %v226 = vpop.f32.mrf.mxu0
  %v227 = vadd.f32 0.0, %v226
  %228 = vdwg.mxu0
  %229 = vmatpush.bf16.msra.mxu0 %v180
  %230 = vmatpush.bf16.msra.mxu0 %v176
  %231 = vmatpush.bf16.msra.mxu0 %v172
  %232 = vmatpush.bf16.msra.mxu0 %v168
  %233 = vmatpush.bf16.msra.mxu0 %v164
  %234 = vmatpush.bf16.msra.mxu0 %v160
  %235 = vmatpush.bf16.msra.mxu0 %v156
  %236 = vmatpush.bf16.msra.mxu0 %v152
  %237 = vmatmul.bf16.gmra.mxu0 %v22
  %v238 = vpop.f32.mrf.mxu0
  %v239 = vadd.f32 0.0, %v238
  %v240 = vpop.f32.mrf.mxu0
  %v241 = vadd.f32 0.0, %v240
  %242 = vdwg.mxu0
  %243 = vmatpush.bf16.msra.mxu0 %v181
  %244 = vmatpush.bf16.msra.mxu0 %v177
  %245 = vmatpush.bf16.msra.mxu0 %v173
  %246 = vmatpush.bf16.msra.mxu0 %v169
  %247 = vmatpush.bf16.msra.mxu0 %v165
  %248 = vmatpush.bf16.msra.mxu0 %v161
  %249 = vmatpush.bf16.msra.mxu0 %v157
  %250 = vmatpush.bf16.msra.mxu0 %v153
  %251 = vmatmul.bf16.gmra.mxu0 %v22
  %v252 = vpop.f32.mrf.mxu0
  %v253 = vadd.f32 0.0, %v252
  %v254 = vpop.f32.mrf.mxu0
  %v255 = vadd.f32 0.0, %v254
  %256 = vdwg.mxu0
  %257 = vmatpush.bf16.msra.mxu0 %v182
  %258 = vmatpush.bf16.msra.mxu0 %v178
  %259 = vmatpush.bf16.msra.mxu0 %v174
  %260 = vmatpush.bf16.msra.mxu0 %v170
  %261 = vmatpush.bf16.msra.mxu0 %v166
  %262 = vmatpush.bf16.msra.mxu0 %v162
  %263 = vmatpush.bf16.msra.mxu0 %v158
  %264 = vmatpush.bf16.msra.mxu0 %v154
  %265 = vmatmul.bf16.gmra.mxu0 %v22
  %v266 = vpop.f32.mrf.mxu0
  %v267 = vadd.f32 0.0, %v266
  %v268 = vpop.f32.mrf.mxu0
  %v269 = vadd.f32 0.0, %v268
  %270 = vdwg.mxu0
  %v271 = vmax.f32 %v225, 0.0
  %v272 = vmax.f32 %v239, 0.0
  %v273 = vmax.f32 %v253, 0.0
  %v274 = vmax.f32 %v267, 0.0
  %v275 = vmax.f32 %v227, 0.0
  %v276 = vmax.f32 %v241, 0.0
  %v277 = vmax.f32 %v255, 0.0
  %v278 = vmax.f32 %v269, 0.0
  %v279 = vmul.f32 %v271, %v271
  %v280 = vmul.f32 %v272, %v272
  %v281 = vmul.f32 %v273, %v273
  %v282 = vmul.f32 %v274, %v274
  %v283 = vmul.f32 %v275, %v275
  %v284 = vmul.f32 %v276, %v276
  %v285 = vmul.f32 %v277, %v277
  %v286 = vmul.f32 %v278, %v278
  %v287 = vld [vmem:[#allocation2] sm:$0xff]
  %v288 = vld [vmem:[#allocation2 + $0x8] sm:$0xff]
  %v289 = vpack.c.bf16 %v283, %v279
  %v290 = vpack.c.bf16 %v284, %v280
  %v291 = vpack.c.bf16 %v285, %v281
  %v292 = vpack.c.bf16 %v286, %v282
  %v293 = vld [vmem:[%s2] sm:$0xf]
  %v294 = vld [vmem:[%s2 + $0x4] sm:$0xf]
  %v295 = vld [vmem:[%s2 + $0x8] sm:$0xf]
  %v296 = vld [vmem:[%s2 + $0xc] sm:$0xf]
  %v297 = vld [vmem:[%s2 + $0x10] sm:$0xf]
  %v298 = vld [vmem:[%s2 + $0x14] sm:$0xf]
  %v299 = vld [vmem:[%s2 + $0x18] sm:$0xf]
  %v300 = vld [vmem:[%s2 + $0x1c] sm:$0xf]
  %v301 = vld [vmem:[%s2 + $0x20] sm:$0xf]
  %v302 = vld [vmem:[%s2 + $0x24] sm:$0xf]
  %v303 = vld [vmem:[%s2 + $0x28] sm:$0xf]
  %v304 = vld [vmem:[%s2 + $0x2c] sm:$0xf]
  %v305 = vld [vmem:[%s2 + $0x30] sm:$0xf]
  %v306 = vld [vmem:[%s2 + $0x34] sm:$0xf]
  %v307 = vld [vmem:[%s2 + $0x38] sm:$0xf]
  %v308 = vld [vmem:[%s2 + $0x3c] sm:$0xf]
  %v309 = vld [vmem:[%s2 + $0x40] sm:$0xf]
  %v310 = vld [vmem:[%s2 + $0x44] sm:$0xf]
  %v311 = vld [vmem:[%s2 + $0x48] sm:$0xf]
  %v312 = vld [vmem:[%s2 + $0x4c] sm:$0xf]
  %v313 = vld [vmem:[%s2 + $0x50] sm:$0xf]
  %v314 = vld [vmem:[%s2 + $0x54] sm:$0xf]
  %v315 = vld [vmem:[%s2 + $0x58] sm:$0xf]
  %v316 = vld [vmem:[%s2 + $0x5c] sm:$0xf]
  %v317 = vld [vmem:[%s2 + $0x60] sm:$0xf]
  %v318 = vld [vmem:[%s2 + $0x64] sm:$0xf]
  %v319 = vld [vmem:[%s2 + $0x68] sm:$0xf]
  %v320 = vld [vmem:[%s2 + $0x6c] sm:$0xf]
  %v321 = vld [vmem:[%s2 + $0x70] sm:$0xf]
  %v322 = vld [vmem:[%s2 + $0x74] sm:$0xf]
  %v323 = vld [vmem:[%s2 + $0x78] sm:$0xf]
  %v324 = vld [vmem:[%s2 + $0x7c] sm:$0xf]
  %v325 = vld [vmem:[%s2 + $0x80] sm:$0xf]
  %v326 = vld [vmem:[%s2 + $0x84] sm:$0xf]
  %v327 = vld [vmem:[%s2 + $0x88] sm:$0xf]
  %v328 = vld [vmem:[%s2 + $0x8c] sm:$0xf]
  %v329 = vld [vmem:[%s2 + $0x90] sm:$0xf]
  %v330 = vld [vmem:[%s2 + $0x94] sm:$0xf]
  %v331 = vld [vmem:[%s2 + $0x98] sm:$0xf]
  %v332 = vld [vmem:[%s2 + $0x9c] sm:$0xf]
  %v333 = vld [vmem:[%s2 + $0xa0] sm:$0xf]
  %v334 = vld [vmem:[%s2 + $0xa4] sm:$0xf]
  %v335 = vld [vmem:[%s2 + $0xa8] sm:$0xf]
  %v336 = vld [vmem:[%s2 + $0xac] sm:$0xf]
  %v337 = vld [vmem:[%s2 + $0xb0] sm:$0xf]
  %v338 = vld [vmem:[%s2 + $0xb4] sm:$0xf]
  %v339 = vld [vmem:[%s2 + $0xb8] sm:$0xf]
  %v340 = vld [vmem:[%s2 + $0xbc] sm:$0xf]
  %v341 = vld [vmem:[%s2 + $0xc0] sm:$0xf]
  %v342 = vld [vmem:[%s2 + $0xc4] sm:$0xf]
  %v343 = vld [vmem:[%s2 + $0xc8] sm:$0xf]
  %v344 = vld [vmem:[%s2 + $0xcc] sm:$0xf]
  %v345 = vld [vmem:[%s2 + $0xd0] sm:$0xf]
  %v346 = vld [vmem:[%s2 + $0xd4] sm:$0xf]
  %v347 = vld [vmem:[%s2 + $0xd8] sm:$0xf]
  %v348 = vld [vmem:[%s2 + $0xdc] sm:$0xf]
  %v349 = vld [vmem:[%s2 + $0xe0] sm:$0xf]
  %v350 = vld [vmem:[%s2 + $0xe4] sm:$0xf]
  %v351 = vld [vmem:[%s2 + $0xe8] sm:$0xf]
  %v352 = vld [vmem:[%s2 + $0xec] sm:$0xf]
  %v353 = vld [vmem:[%s2 + $0xf0] sm:$0xf]
  %v354 = vld [vmem:[%s2 + $0xf4] sm:$0xf]
  %v355 = vld [vmem:[%s2 + $0xf8] sm:$0xf]
  %v356 = vld [vmem:[%s2 + $0xfc] sm:$0xf]
  %v421 = vunpack.c.l.b16 %v293
  %v422 = vunpack.c.l.b16 %v294
  %v423 = vunpack.c.l.b16 %v295
  %v424 = vunpack.c.l.b16 %v296
  %v425 = vunpack.c.l.b16 %v297
  %v426 = vunpack.c.l.b16 %v298
  %v427 = vunpack.c.l.b16 %v299
  %v428 = vunpack.c.l.b16 %v300
  %v429 = vunpack.c.l.b16 %v301
  %v430 = vunpack.c.l.b16 %v302
  %v431 = vunpack.c.l.b16 %v303
  %v432 = vunpack.c.l.b16 %v304
  %v433 = vunpack.c.l.b16 %v305
  %v434 = vunpack.c.l.b16 %v306
  %v435 = vunpack.c.l.b16 %v307
  %v436 = vunpack.c.l.b16 %v308
  %v437 = vunpack.c.l.b16 %v309
  %v438 = vunpack.c.l.b16 %v310
  %v439 = vunpack.c.l.b16 %v311
  %v440 = vunpack.c.l.b16 %v312
  %v441 = vunpack.c.l.b16 %v313
  %v442 = vunpack.c.l.b16 %v314
  %v443 = vunpack.c.l.b16 %v315
  %v444 = vunpack.c.l.b16 %v316
  %v445 = vunpack.c.l.b16 %v317
  %v446 = vunpack.c.l.b16 %v318
  %v447 = vunpack.c.l.b16 %v319
  %v448 = vunpack.c.l.b16 %v320
  %v449 = vunpack.c.l.b16 %v321
  %v450 = vunpack.c.l.b16 %v322
  %v451 = vunpack.c.l.b16 %v323
  %v452 = vunpack.c.l.b16 %v324
  %v453 = vunpack.c.l.b16 %v325
  %v454 = vunpack.c.l.b16 %v326
  %v455 = vunpack.c.l.b16 %v327
  %v456 = vunpack.c.l.b16 %v328
  %v457 = vunpack.c.l.b16 %v329
  %v458 = vunpack.c.l.b16 %v330
  %v459 = vunpack.c.l.b16 %v331
  %v460 = vunpack.c.l.b16 %v332
  %v461 = vunpack.c.l.b16 %v333
  %v462 = vunpack.c.l.b16 %v334
  %v463 = vunpack.c.l.b16 %v335
  %v464 = vunpack.c.l.b16 %v336
  %v465 = vunpack.c.l.b16 %v337
  %v466 = vunpack.c.l.b16 %v338
  %v467 = vunpack.c.l.b16 %v339
  %v468 = vunpack.c.l.b16 %v340
  %v469 = vunpack.c.l.b16 %v341
  %v470 = vunpack.c.l.b16 %v342
  %v471 = vunpack.c.l.b16 %v343
  %v472 = vunpack.c.l.b16 %v344
  %v473 = vunpack.c.l.b16 %v345
  %v474 = vunpack.c.l.b16 %v346
  %v475 = vunpack.c.l.b16 %v347
  %v476 = vunpack.c.l.b16 %v348
  %v477 = vunpack.c.l.b16 %v349
  %v478 = vunpack.c.l.b16 %v350
  %v479 = vunpack.c.l.b16 %v351
  %v480 = vunpack.c.l.b16 %v352
  %v481 = vunpack.c.l.b16 %v353
  %v482 = vunpack.c.l.b16 %v354
  %v483 = vunpack.c.l.b16 %v355
  %v484 = vunpack.c.l.b16 %v356
  %v485 = vpack.c.b16 %v422, %v421
  %v486 = vpack.c.b16 %v424, %v423
  %v487 = vpack.c.b16 %v426, %v425
  %v488 = vpack.c.b16 %v428, %v427
  %v489 = vpack.c.b16 %v430, %v429
  %v490 = vpack.c.b16 %v432, %v431
  %v491 = vpack.c.b16 %v434, %v433
  %v492 = vpack.c.b16 %v436, %v435
  %v493 = vpack.c.b16 %v438, %v437
  %v494 = vpack.c.b16 %v440, %v439
  %v495 = vpack.c.b16 %v442, %v441
  %v496 = vpack.c.b16 %v444, %v443
  %v497 = vpack.c.b16 %v446, %v445
  %v498 = vpack.c.b16 %v448, %v447
  %v499 = vpack.c.b16 %v450, %v449
  %v500 = vpack.c.b16 %v452, %v451
  %v501 = vpack.c.b16 %v454, %v453
  %v502 = vpack.c.b16 %v456, %v455
  %v503 = vpack.c.b16 %v458, %v457
  %v504 = vpack.c.b16 %v460, %v459
  %v505 = vpack.c.b16 %v462, %v461
  %v506 = vpack.c.b16 %v464, %v463
  %v507 = vpack.c.b16 %v466, %v465
  %v508 = vpack.c.b16 %v468, %v467
  %v509 = vpack.c.b16 %v470, %v469
  %v510 = vpack.c.b16 %v472, %v471
  %v511 = vpack.c.b16 %v474, %v473
  %v512 = vpack.c.b16 %v476, %v475
  %v513 = vpack.c.b16 %v478, %v477
  %v514 = vpack.c.b16 %v480, %v479
  %v515 = vpack.c.b16 %v482, %v481
  %v516 = vpack.c.b16 %v484, %v483
  %549 = vmatpush.bf16.msra.mxu0 %v492
  %550 = vmatpush.bf16.msra.mxu0 %v491
  %551 = vmatpush.bf16.msra.mxu0 %v490
  %552 = vmatpush.bf16.msra.mxu0 %v489
  %553 = vmatpush.bf16.msra.mxu0 %v488
  %554 = vmatpush.bf16.msra.mxu0 %v487
  %555 = vmatpush.bf16.msra.mxu0 %v486
  %556 = vmatpush.bf16.msra.mxu0 %v485
  %557 = vmatmul.bf16.gmra.mxu0 %v289
  %v558 = vpop.f32.mrf.mxu0
  %v559 = vadd.f32 0.0, %v558
  %v560 = vpop.f32.mrf.mxu0
  %v561 = vadd.f32 0.0, %v560
  %562 = vdwg.mxu0
  %563 = vmatpush.bf16.msra.mxu0 %v500
  %564 = vmatpush.bf16.msra.mxu0 %v499
  %565 = vmatpush.bf16.msra.mxu0 %v498
  %566 = vmatpush.bf16.msra.mxu0 %v497
  %567 = vmatpush.bf16.msra.mxu0 %v496
  %568 = vmatpush.bf16.msra.mxu0 %v495
  %569 = vmatpush.bf16.msra.mxu0 %v494
  %570 = vmatpush.bf16.msra.mxu0 %v493
  %571 = vmatmul.bf16.gmra.mxu0 %v290
  %v572 = vpop.f32.mrf.mxu0
  %v573 = vadd.f32 %v559, %v572
  %v574 = vpop.f32.mrf.mxu0
  %v575 = vadd.f32 %v561, %v574
  %576 = vdwg.mxu0
  %577 = vmatpush.bf16.msra.mxu0 %v508
  %578 = vmatpush.bf16.msra.mxu0 %v507
  %579 = vmatpush.bf16.msra.mxu0 %v506
  %580 = vmatpush.bf16.msra.mxu0 %v505
  %581 = vmatpush.bf16.msra.mxu0 %v504
  %582 = vmatpush.bf16.msra.mxu0 %v503
  %583 = vmatpush.bf16.msra.mxu0 %v502
  %584 = vmatpush.bf16.msra.mxu0 %v501
  %585 = vmatmul.bf16.gmra.mxu0 %v291
  %v586 = vpop.f32.mrf.mxu0
  %v587 = vadd.f32 %v573, %v586
  %v588 = vpop.f32.mrf.mxu0
  %v589 = vadd.f32 %v575, %v588
  %590 = vdwg.mxu0
  %591 = vmatpush.bf16.msra.mxu0 %v516
  %592 = vmatpush.bf16.msra.mxu0 %v515
  %593 = vmatpush.bf16.msra.mxu0 %v514
  %594 = vmatpush.bf16.msra.mxu0 %v513
  %595 = vmatpush.bf16.msra.mxu0 %v512
  %596 = vmatpush.bf16.msra.mxu0 %v511
  %597 = vmatpush.bf16.msra.mxu0 %v510
  %598 = vmatpush.bf16.msra.mxu0 %v509
  %599 = vmatmul.bf16.gmra.mxu0 %v292
  %v600 = vpop.f32.mrf.mxu0
  %v601 = vadd.f32 %v587, %v600
  %v602 = vpop.f32.mrf.mxu0
  %v603 = vadd.f32 %v589, %v602
  %604 = vdwg.mxu0
  %v605 = vadd.f32 %v287, %v601
  %v606 = vadd.f32 %v288, %v603
  %607 = vst [vmem:[#allocation2] sm:$0xff] %v605
  %608 = vst [vmem:[#allocation2 + $0x8] sm:$0xff] %v606
  // Predicated region
  $region18: #{path_rwkv_forward.36} parent=0 // pred_check
    %p609 = pneg %p14
  $region19: #{path_rwkv_forward.36} parent=0 // pred_check_branch
    %611 = sbr.rel (%p609) target = $region21
  $region20: #{path_rwkv_forward.36} parent=0 // pred_region
    %v612 = vld [vmem:[#allocation2] sm:$0xff]
    %v613 = vld [vmem:[#allocation2 + $0x8] sm:$0xff]
    %614 = vst [vmem:[%s3] sm:$0xff] %v612
    %615 = vst [vmem:[%s3 + $0x8] sm:$0xff] %v613
  $region21: #{path_rwkv_forward.36} parent=0 // pred_fallthru
    _
  // Predicated region
  $region22: #{path_rwkv_forward.36} parent=0 // pred_check
    _
  $region23: #{path_rwkv_forward.36} parent=0 // pred_check_branch
    %617 = sbr.rel (0) target = $region25
  $region24: #{path_rwkv_forward.36} parent=0 // pred_region
    _
  $region25: #{path_rwkv_forward.36} parent=0 // pred_fallthru
    _
  // Predicated region
  $region26: #{path_rwkv_forward.36} parent=0 // pred_check
    _
  $region27: #{path_rwkv_forward.36} parent=0 // pred_check_branch
    %619 = sbr.rel (0) target = $region29
  $region28: #{path_rwkv_forward.36} parent=0 // pred_region
    _
  $region29: #{path_rwkv_forward.36} parent=0 // pred_fallthru
    _

// kernel: path_rwkv_forward.42
$region0: #{path_rwkv_forward.42}
  #allocation0 [shape = 'u32[]', space=smem, size = 0x4, offset = 0x4, fixed_abs, tag = 'smem constant byte address 0x4 - core index']
  #allocation1 [shape = 'u32[72,128]{1,0:T(1,128)}', space=vmem, size = 0x9000, scoped, tag = 'internal scratch']
  %s0 = inlined_call_operand.vmem [shape: bf16[16,128], index: 0, kind: input, shape index: {}]
  %s1 = inlined_call_operand.hbm [shape: bf16[128,128], index: 1, kind: input, shape index: {}]
  %s2 = inlined_call_operand.vmem [shape: f32[16,128], index: 2, kind: output, shape index: {}]
  %s3 = sld [smem:[#allocation0]]
  $region22: #{path_rwkv_forward.42} parent=0
    _
  %s5 = ssub.s32 1, %s3
  %s6 = scalar_select 0, %s5, %s3
  $region1: #{path_rwkv_forward.42} parent=0
    #allocation2 [shape = 'u8[32768]{0}', space=vmem, size = 0x8000, scoped, tag = 'input window, operand 1, single buffered']
    #allocation3 [shape = 's32[1]{0}', space=sflag, size = 0x4, scoped, tag = 'scoped memory for path_rwkv_forward.42']
    %7 = vsyncpa [#allocation3], 0
    // Predicated region
    $region2: #{path_rwkv_forward.42} parent=1 // pred_check
      _
    $region3: #{path_rwkv_forward.42} parent=1 // pred_check_branch
      %9 = sbr.rel (0) target = $region5
    $region4: #{path_rwkv_forward.42} parent=1 // pred_region
      _
    $region5: #{path_rwkv_forward.42} parent=1 // pred_fallthru
      _
    // Predicated region
    $region6: #{path_rwkv_forward.42} parent=1 // pred_check
      _
    $region7: #{path_rwkv_forward.42} parent=1 // pred_check_branch
      %11 = sbr.rel (0) target = $region9
    $region8: #{path_rwkv_forward.42} parent=1 // pred_region
      %13 = vsyncadd [#allocation3], 0
      %s14 = sshll.u32 %s1, 4
      %s15 = int_to_ptr.hbm [resolvable:$true] %s14
      %s16 = sshll.u32 [#allocation2], 4
      %s17 = int_to_ptr.vmem [resolvable:$true] %s16
      %22 = dma.hbm_to_vmem [thread:$0]  %s15, 1024, %s17, [#allocation3], 64, 64, 4
    $region9: #{path_rwkv_forward.42} parent=1 // pred_fallthru
      _
    // Predicated region
    $region10: #{path_rwkv_forward.42} parent=1 // pred_check
      _
    $region11: #{path_rwkv_forward.42} parent=1 // pred_check_branch
      %24 = sbr.rel (0) target = $region13
    $region12: #{path_rwkv_forward.42} parent=1 // pred_region
      %26 = dma.done [#allocation3], 1024
    $region13: #{path_rwkv_forward.42} parent=1 // pred_fallthru
      _
    %v27 = vld [vmem:[%s0] sm:$0xf]
    %v28 = vld [vmem:[%s0 + $0x4] sm:$0xf]
    %v29 = vld [vmem:[#allocation2] sm:$0xf]
    %v30 = vld [vmem:[#allocation2 + $0x4] sm:$0xf]
    %v31 = vld [vmem:[#allocation2 + $0x8] sm:$0xf]
    %v32 = vld [vmem:[#allocation2 + $0xc] sm:$0xf]
    %v33 = vld [vmem:[#allocation2 + $0x10] sm:$0xf]
    %v34 = vld [vmem:[#allocation2 + $0x14] sm:$0xf]
    %v35 = vld [vmem:[#allocation2 + $0x18] sm:$0xf]
    %v36 = vld [vmem:[#allocation2 + $0x1c] sm:$0xf]
    %v37 = vld [vmem:[#allocation2 + $0x20] sm:$0xf]
    %v38 = vld [vmem:[#allocation2 + $0x24] sm:$0xf]
    %v39 = vld [vmem:[#allocation2 + $0x28] sm:$0xf]
    %v40 = vld [vmem:[#allocation2 + $0x2c] sm:$0xf]
    %v41 = vld [vmem:[#allocation2 + $0x30] sm:$0xf]
    %v42 = vld [vmem:[#allocation2 + $0x34] sm:$0xf]
    %v43 = vld [vmem:[#allocation2 + $0x38] sm:$0xf]
    %v44 = vld [vmem:[#allocation2 + $0x3c] sm:$0xf]
    %v47 = vunpack.c.l.b16 %v27
    %v48 = vunpack.c.l.b16 %v28
    %v49 = vpack.c.b16 %v48, %v47
    %v67 = vunpack.c.l.b16 %v29
    %v68 = vunpack.c.l.b16 %v30
    %v69 = vunpack.c.l.b16 %v31
    %v70 = vunpack.c.l.b16 %v32
    %v71 = vunpack.c.l.b16 %v33
    %v72 = vunpack.c.l.b16 %v34
    %v73 = vunpack.c.l.b16 %v35
    %v74 = vunpack.c.l.b16 %v36
    %v75 = vunpack.c.l.b16 %v37
    %v76 = vunpack.c.l.b16 %v38
    %v77 = vunpack.c.l.b16 %v39
    %v78 = vunpack.c.l.b16 %v40
    %v79 = vunpack.c.l.b16 %v41
    %v80 = vunpack.c.l.b16 %v42
    %v81 = vunpack.c.l.b16 %v43
    %v82 = vunpack.c.l.b16 %v44
    %v83 = vpack.c.b16 %v68, %v67
    %v84 = vpack.c.b16 %v70, %v69
    %v85 = vpack.c.b16 %v72, %v71
    %v86 = vpack.c.b16 %v74, %v73
    %v87 = vpack.c.b16 %v76, %v75
    %v88 = vpack.c.b16 %v78, %v77
    %v89 = vpack.c.b16 %v80, %v79
    %v90 = vpack.c.b16 %v82, %v81
    %99 = vmatpush.bf16.msra.mxu0 %v90
    %100 = vmatpush.bf16.msra.mxu0 %v89
    %101 = vmatpush.bf16.msra.mxu0 %v88
    %102 = vmatpush.bf16.msra.mxu0 %v87
    %103 = vmatpush.bf16.msra.mxu0 %v86
    %104 = vmatpush.bf16.msra.mxu0 %v85
    %105 = vmatpush.bf16.msra.mxu0 %v84
    %106 = vmatpush.bf16.msra.mxu0 %v83
    %107 = vmatmul.bf16.gmra.mxu0 %v49
    %v108 = vpop.f32.mrf.mxu0
    %v109 = vadd.f32 0.0, %v108
    %v110 = vpop.f32.mrf.mxu0
    %v111 = vadd.f32 0.0, %v110
    %112 = vdwg.mxu0
    %113 = vst [vmem:[%s2] sm:$0xff] %v109
    %114 = vst [vmem:[%s2 + $0x8] sm:$0xff] %v111
    // Predicated region
    $region14: #{path_rwkv_forward.42} parent=1 // pred_check
      _
    $region15: #{path_rwkv_forward.42} parent=1 // pred_check_branch
      %116 = sbr.rel (0) target = $region17
    $region16: #{path_rwkv_forward.42} parent=1 // pred_region
      _
    $region17: #{path_rwkv_forward.42} parent=1 // pred_fallthru
      _
    // Predicated region
    $region18: #{path_rwkv_forward.42} parent=1 // pred_check
      _
    $region19: #{path_rwkv_forward.42} parent=1 // pred_check_branch
      %118 = sbr.rel (0) target = $region21
    $region20: #{path_rwkv_forward.42} parent=1 // pred_region
      _
    $region21: #{path_rwkv_forward.42} parent=1 // pred_fallthru
      _
    %119 = vsyncpa [#allocation3], 1

// kernel: path_rwkv_forward.40
$region0: #{path_rwkv_forward.40}
  #allocation0 [shape = 'u32[]', space=smem, size = 0x4, offset = 0x4, fixed_abs, tag = 'smem constant byte address 0x4 - core index']
  #allocation1 [shape = 'u32[72,128]{1,0:T(1,128)}', space=vmem, size = 0x9000, scoped, tag = 'internal scratch']
  %s0 = inlined_call_operand.vmem [shape: bf16[16,128], index: 0, kind: input, shape index: {}]
  %s1 = inlined_call_operand.vmem [shape: bf16[128,64], index: 1, kind: input, shape index: {}]
  %s2 = inlined_call_operand.hbm [shape: bf16[64,128], index: 2, kind: input, shape index: {}]
  %s3 = inlined_call_operand.vmem [shape: f32[1,128], index: 3, kind: input, shape index: {}]
  %s4 = inlined_call_operand.vmem [shape: f32[16,128], index: 4, kind: output, shape index: {}]
  %s5 = sld [smem:[#allocation0]]
  $region30: #{path_rwkv_forward.40} parent=0
    _
  %s7 = ssub.s32 1, %s5
  %s8 = scalar_select 0, %s7, %s5
  $region1: #{path_rwkv_forward.40} parent=0
    #allocation2 [shape = 'u8[16384]{0}', space=vmem, size = 0x4000, scoped, tag = 'input window, operand 2, single buffered']
    #allocation3 [shape = 's32[1]{0}', space=sflag, size = 0x4, scoped, tag = 'scoped memory for path_rwkv_forward.40']
    %9 = vsyncpa [#allocation3], 0
    // Predicated region
    $region2: #{path_rwkv_forward.40} parent=1 // pred_check
      _
    $region3: #{path_rwkv_forward.40} parent=1 // pred_check_branch
      %11 = sbr.rel (0) target = $region5
    $region4: #{path_rwkv_forward.40} parent=1 // pred_region
      _
    $region5: #{path_rwkv_forward.40} parent=1 // pred_fallthru
      _
    // Predicated region
    $region6: #{path_rwkv_forward.40} parent=1 // pred_check
      _
    $region7: #{path_rwkv_forward.40} parent=1 // pred_check_branch
      %13 = sbr.rel (0) target = $region9
    $region8: #{path_rwkv_forward.40} parent=1 // pred_region
      _
    $region9: #{path_rwkv_forward.40} parent=1 // pred_fallthru
      _
    // Predicated region
    $region10: #{path_rwkv_forward.40} parent=1 // pred_check
      _
    $region11: #{path_rwkv_forward.40} parent=1 // pred_check_branch
      %15 = sbr.rel (0) target = $region13
    $region12: #{path_rwkv_forward.40} parent=1 // pred_region
      %17 = vsyncadd [#allocation3], 0
      %s18 = sshll.u32 %s2, 4
      %s19 = int_to_ptr.hbm [resolvable:$true] %s18
      %s20 = sshll.u32 [#allocation2], 4
      %s21 = int_to_ptr.vmem [resolvable:$true] %s20
      %26 = dma.hbm_to_vmem [thread:$0]  %s19, 512, %s21, [#allocation3], 64, 64, 4
    $region13: #{path_rwkv_forward.40} parent=1 // pred_fallthru
      _
    // Predicated region
    $region14: #{path_rwkv_forward.40} parent=1 // pred_check
      _
    $region15: #{path_rwkv_forward.40} parent=1 // pred_check_branch
      %28 = sbr.rel (0) target = $region17
    $region16: #{path_rwkv_forward.40} parent=1 // pred_region
      _
    $region17: #{path_rwkv_forward.40} parent=1 // pred_fallthru
      _
    // Predicated region
    $region18: #{path_rwkv_forward.40} parent=1 // pred_check
      _
    $region19: #{path_rwkv_forward.40} parent=1 // pred_check_branch
      %30 = sbr.rel (0) target = $region21
    $region20: #{path_rwkv_forward.40} parent=1 // pred_region
      %32 = dma.done [#allocation3], 512
    $region21: #{path_rwkv_forward.40} parent=1 // pred_fallthru
      _
    %v34 = vld [vmem:[%s0] sm:$0xf]
    %v35 = vld [vmem:[%s0 + $0x4] sm:$0xf]
    %v36 = vld [vmem:[%s1] sm:$0xf]
    %v37 = vld [vmem:[%s1 + $0x4] sm:$0xf]
    %v38 = vld [vmem:[%s1 + $0x8] sm:$0xf]
    %v39 = vld [vmem:[%s1 + $0xc] sm:$0xf]
    %v40 = vld [vmem:[%s1 + $0x10] sm:$0xf]
    %v41 = vld [vmem:[%s1 + $0x14] sm:$0xf]
    %v42 = vld [vmem:[%s1 + $0x18] sm:$0xf]
    %v43 = vld [vmem:[%s1 + $0x1c] sm:$0xf]
    %v44 = vld [vmem:[%s1 + $0x20] sm:$0xf]
    %v45 = vld [vmem:[%s1 + $0x24] sm:$0xf]
    %v46 = vld [vmem:[%s1 + $0x28] sm:$0xf]
    %v47 = vld [vmem:[%s1 + $0x2c] sm:$0xf]
    %v48 = vld [vmem:[%s1 + $0x30] sm:$0xf]
    %v49 = vld [vmem:[%s1 + $0x34] sm:$0xf]
    %v50 = vld [vmem:[%s1 + $0x38] sm:$0xf]
    %v51 = vld [vmem:[%s1 + $0x3c] sm:$0xf]
    %v54 = vunpack.c.l.b16 %v34
    %v55 = vunpack.c.l.b16 %v35
    %v56 = vpack.c.b16 %v55, %v54
    %v74 = vunpack.c.l.b16 %v36
    %v75 = vunpack.c.l.b16 %v37
    %v76 = vunpack.c.l.b16 %v38
    %v77 = vunpack.c.l.b16 %v39
    %v78 = vunpack.c.l.b16 %v40
    %v79 = vunpack.c.l.b16 %v41
    %v80 = vunpack.c.l.b16 %v42
    %v81 = vunpack.c.l.b16 %v43
    %v82 = vunpack.c.l.b16 %v44
    %v83 = vunpack.c.l.b16 %v45
    %v84 = vunpack.c.l.b16 %v46
    %v85 = vunpack.c.l.b16 %v47
    %v86 = vunpack.c.l.b16 %v48
    %v87 = vunpack.c.l.b16 %v49
    %v88 = vunpack.c.l.b16 %v50
    %v89 = vunpack.c.l.b16 %v51
    %v90 = vpack.c.b16 %v75, %v74
    %v91 = vpack.c.b16 %v77, %v76
    %v92 = vpack.c.b16 %v79, %v78
    %v93 = vpack.c.b16 %v81, %v80
    %v94 = vpack.c.b16 %v83, %v82
    %v95 = vpack.c.b16 %v85, %v84
    %v96 = vpack.c.b16 %v87, %v86
    %v97 = vpack.c.b16 %v89, %v88
    %106 = vmatpush.bf16.msra.mxu0 %v97
    %107 = vmatpush.bf16.msra.mxu0 %v96
    %108 = vmatpush.bf16.msra.mxu0 %v95
    %109 = vmatpush.bf16.msra.mxu0 %v94
    %110 = vmatpush.bf16.msra.mxu0 %v93
    %111 = vmatpush.bf16.msra.mxu0 %v92
    %112 = vmatpush.bf16.msra.mxu0 %v91
    %113 = vmatpush.bf16.msra.mxu0 %v90
    %114 = vmatmul.bf16.gmra.mxu0 %v56
    %v115 = vpop.f32.mrf.mxu0
    %v116 = vadd.f32 0.0, %v115
    %v117 = vpop.f32.mrf.mxu0
    %v118 = vadd.f32 0.0, %v117
    %119 = vdwg.mxu0
    %v120 = vtanh.pop %v116
    %v121 = vtanh.pop %v118
    %v122 = vpack.c.bf16 %v121, %v120
    %v123 = vld [vmem:[#allocation2] sm:$0xf]
    %v124 = vld [vmem:[#allocation2 + $0x4] sm:$0xf]
    %v125 = vld [vmem:[#allocation2 + $0x8] sm:$0xf]
    %v126 = vld [vmem:[#allocation2 + $0xc] sm:$0xf]
    %v127 = vld [vmem:[#allocation2 + $0x10] sm:$0xf]
    %v128 = vld [vmem:[#allocation2 + $0x14] sm:$0xf]
    %v129 = vld [vmem:[#allocation2 + $0x18] sm:$0xf]
    %v130 = vld [vmem:[#allocation2 + $0x1c] sm:$0xf]
    %v131 = vld [vmem:[%s3] sm:$0x1]
    %v133 = vperm.slane %v131, 0
    %v143 = vunpack.c.l.b16 %v123
    %v144 = vunpack.c.l.b16 %v124
    %v145 = vunpack.c.l.b16 %v125
    %v146 = vunpack.c.l.b16 %v126
    %v147 = vunpack.c.l.b16 %v127
    %v148 = vunpack.c.l.b16 %v128
    %v149 = vunpack.c.l.b16 %v129
    %v150 = vunpack.c.l.b16 %v130
    %v151 = vpack.c.b16 %v144, %v143
    %v152 = vpack.c.b16 %v146, %v145
    %v153 = vpack.c.b16 %v148, %v147
    %v154 = vpack.c.b16 %v150, %v149
    %vm159 = vcmask 523264
    %v161 = vsel %vm159, %v122, 0
    %163 = vmatpush.bf16.msra.mxu0 0
    %164 = vmatpush.bf16.msra.mxu0 0
    %165 = vmatpush.bf16.msra.mxu0 0
    %166 = vmatpush.bf16.msra.mxu0 0
    %167 = vmatpush.bf16.msra.mxu0 %v154
    %168 = vmatpush.bf16.msra.mxu0 %v153
    %169 = vmatpush.bf16.msra.mxu0 %v152
    %170 = vmatpush.bf16.msra.mxu0 %v151
    %171 = vmatmul.bf16.gmra.mxu0 %v161
    %v172 = vpop.f32.mrf.mxu0
    %v173 = vadd.f32 %v133, %v172
    %v174 = vpop.f32.mrf.mxu0
    %v175 = vadd.f32 %v133, %v174
    %176 = vdwg.mxu0
    %177 = vst [vmem:[%s4] sm:$0xff] %v173
    %178 = vst [vmem:[%s4 + $0x8] sm:$0xff] %v175
    // Predicated region
    $region22: #{path_rwkv_forward.40} parent=1 // pred_check
      _
    $region23: #{path_rwkv_forward.40} parent=1 // pred_check_branch
      %180 = sbr.rel (0) target = $region25
    $region24: #{path_rwkv_forward.40} parent=1 // pred_region
      _
    $region25: #{path_rwkv_forward.40} parent=1 // pred_fallthru
      _
    // Predicated region
    $region26: #{path_rwkv_forward.40} parent=1 // pred_check
      _
    $region27: #{path_rwkv_forward.40} parent=1 // pred_check_branch
      %182 = sbr.rel (0) target = $region29
    $region28: #{path_rwkv_forward.40} parent=1 // pred_region
      _
    $region29: #{path_rwkv_forward.40} parent=1 // pred_fallthru
      _
    %183 = vsyncpa [#allocation3], 1

// kernel: path_rwkv_forward.49
$region0: #{path_rwkv_forward.49}
  #allocation0 [shape = 'u32[]', space=smem, size = 0x4, offset = 0x4, fixed_abs, tag = 'smem constant byte address 0x4 - core index']
  #allocation1 [shape = 'u32[72,128]{1,0:T(1,128)}', space=vmem, size = 0x9000, scoped, tag = 'internal scratch']
  %s0 = inlined_call_operand.vmem [shape: f32[16,128], index: 0, kind: input, shape index: {}]
  %s1 = inlined_call_operand.vmem [shape: f32[1,128], index: 1, kind: input, shape index: {}]
  %s2 = inlined_call_operand.vmem [shape: f32[1,128], index: 2, kind: input, shape index: {}]
  %s3 = inlined_call_operand.hbm [shape: f32[16,128], index: 3, kind: output, shape index: {}]
  %s4 = sld [smem:[#allocation0]]
  $region22: #{path_rwkv_forward.49} parent=0
    _
  %s6 = ssub.s32 1, %s4
  %s7 = scalar_select 0, %s6, %s4
  $region1: #{path_rwkv_forward.49} parent=0
    #allocation2 [shape = 'u8[8192]{0}', space=vmem, size = 0x2000, scoped, tag = 'output window, operand 0, single buffered']
    #allocation3 [shape = 's32[1]{0}', space=sflag, size = 0x4, scoped, tag = 'scoped memory for path_rwkv_forward.49']
    %8 = vsyncpa [#allocation3], 0
    // Predicated region
    $region2: #{path_rwkv_forward.49} parent=1 // pred_check
      _
    $region3: #{path_rwkv_forward.49} parent=1 // pred_check_branch
      %10 = sbr.rel (0) target = $region5
    $region4: #{path_rwkv_forward.49} parent=1 // pred_region
      _
    $region5: #{path_rwkv_forward.49} parent=1 // pred_fallthru
      _
    // Predicated region
    $region6: #{path_rwkv_forward.49} parent=1 // pred_check
      _
    $region7: #{path_rwkv_forward.49} parent=1 // pred_check_branch
      %12 = sbr.rel (0) target = $region9
    $region8: #{path_rwkv_forward.49} parent=1 // pred_region
      _
    $region9: #{path_rwkv_forward.49} parent=1 // pred_fallthru
      _
    // Predicated region
    $region10: #{path_rwkv_forward.49} parent=1 // pred_check
      _
    $region11: #{path_rwkv_forward.49} parent=1 // pred_check_branch
      %14 = sbr.rel (0) target = $region13
    $region12: #{path_rwkv_forward.49} parent=1 // pred_region
      _
    $region13: #{path_rwkv_forward.49} parent=1 // pred_fallthru
      _
    %v15 = vld [vmem:[%s0] sm:$0xff]
    %v16 = vld [vmem:[%s0 + $0x8] sm:$0xff]
    %17 = vadd.xlane.f32.xlu0 %v15
    %v18 = vpop.xlane.xlu0 %17
    %19 = vadd.xlane.f32.xlu0 %v16
    %v20 = vpop.xlane.xlu0 %19
    %v21 = vrcp.pop 128.0
    %v22 = vmul.f32 128.0, %v21
    %v23 = vsub.f32 1.0, %v22
    %v24 = vmul.f32 %v21, %v23
    %v25 = vadd.f32 %v21, %v24
    %vm26 = vweird.f32 %v21
    %v27 = vsel %vm26, %v21, %v25
    %v28 = vmul.f32 %v18, %v27
    %v29 = vmul.f32 %v20, %v27
    %v30 = vsub.f32 %v15, %v28
    %v31 = vsub.f32 %v16, %v29
    %v32 = vmul.f32 %v30, %v30
    %v33 = vmul.f32 %v31, %v31
    %34 = vadd.xlane.f32.xlu0 %v32
    %v35 = vpop.xlane.xlu0 %34
    %36 = vadd.xlane.f32.xlu0 %v33
    %v37 = vpop.xlane.xlu0 %36
    %v38 = vmul.f32 %v35, %v27
    %v39 = vmul.f32 %v37, %v27
    %v40 = vadd.f32 %v38, 1e-05
    %v41 = vadd.f32 %v39, 1e-05
    %v42 = vrsqrt.pop %v40
    %v43 = vmul.f32 %v42, %v40
    %v44 = vmul.f32 %v43, %v42
    %v45 = vmul.f32 0.5, %v44
    %v46 = vsub.f32 1.5, %v45
    %v47 = vmul.f32 %v42, %v46
    %vm48 = vweird.f32 %v40
    %vm49 = vweird.f32 %v42
    %vm50 = vmor %vm48, %vm49
    %v51 = vsel %vm50, %v42, %v47
    %v52 = vrsqrt.pop %v41
    %v53 = vmul.f32 %v52, %v41
    %v54 = vmul.f32 %v53, %v52
    %v55 = vmul.f32 0.5, %v54
    %v56 = vsub.f32 1.5, %v55
    %v57 = vmul.f32 %v52, %v56
    %vm58 = vweird.f32 %v41
    %vm59 = vweird.f32 %v52
    %vm60 = vmor %vm58, %vm59
    %v61 = vsel %vm60, %v52, %v57
    %v62 = vmul.f32 %v30, %v51
    %v63 = vmul.f32 %v31, %v61
    %v64 = vld [vmem:[%s1] sm:$0x1]
    %v66 = vperm.slane %v64, 0
    %v68 = vmul.f32 %v62, %v66
    %v69 = vmul.f32 %v63, %v66
    %v70 = vld [vmem:[%s2] sm:$0x1]
    %v72 = vperm.slane %v70, 0
    %v74 = vadd.f32 %v68, %v72
    %v75 = vadd.f32 %v69, %v72
    %76 = vst [vmem:[#allocation2] sm:$0xff] %v74
    %77 = vst [vmem:[#allocation2 + $0x8] sm:$0xff] %v75
    // Predicated region
    $region14: #{path_rwkv_forward.49} parent=1 // pred_check
      _
    $region15: #{path_rwkv_forward.49} parent=1 // pred_check_branch
      %79 = sbr.rel (0) target = $region17
    $region16: #{path_rwkv_forward.49} parent=1 // pred_region
      %81 = vsyncadd [#allocation3], 0
      %s82 = sshll.u32 [#allocation2], 4
      %s83 = int_to_ptr.vmem [resolvable:$true] %s82
      %s84 = sshll.u32 %s3, 4
      %s85 = int_to_ptr.hbm [resolvable:$true] %s84
      %90 = dma.vmem_to_hbm [thread:$0]  %s83, 256, %s85, [#allocation3], 128, 128, 8
    $region17: #{path_rwkv_forward.49} parent=1 // pred_fallthru
      _
    // Predicated region
    $region18: #{path_rwkv_forward.49} parent=1 // pred_check
      _
    $region19: #{path_rwkv_forward.49} parent=1 // pred_check_branch
      %92 = sbr.rel (0) target = $region21
    $region20: #{path_rwkv_forward.49} parent=1 // pred_region
      %94 = dma.done [#allocation3], 256
    $region21: #{path_rwkv_forward.49} parent=1 // pred_fallthru
      _
    %95 = vsyncpa [#allocation3], 1

</llo_original>
